<compile_context>
chip_gen: v7x
topology: tpu7x:2x2x1
jax: 0.10.0
libtpu: 0.0.40
codegen_flags: <defaults>
</compile_context>

<pallas_src>
import math
from functools import partial

import numpy as np
import jax
import jax.numpy as jnp
from jax import lax
from jax.experimental import pallas as pl
from jax.experimental.pallas import tpu as pltpu


def _attention_kernel(matmul_dtype, dot_precision,
                      q_ref, k_ref, v_ref,
                      wq_ref, bq_ref, wk_ref, bk_ref,
                      wv_ref, bv_ref, wo_ref, bo_ref,
                      o_ref,
                      qp_sc, m_sc, l_sc, acc_sc):
    # q_ref: (TB, TQ, D); k_ref/v_ref: (TB, TK, D); weights (D, D) already
    # transposed on the host (Wq/bq pre-scaled); biases (1, D) f32.
    ki = pl.program_id(2)
    TB, TQ, D = q_ref.shape
    TK = k_ref.shape[1]
    f32 = jnp.float32

    def mm(x, w_ref, b_ref):
        # (M, D) @ (D, D) on the MXU, f32 accumulation, f32 bias add.
        return (jnp.dot(x.astype(matmul_dtype), w_ref[...],
                        preferred_element_type=f32, precision=dot_precision)
                + b_ref[...])

    @pl.when(ki == 0)
    def _init():
        # Project Q once per (batch, q-tile) block; scale already folded in.
        xq = q_ref[...].reshape(TB * TQ, D)
        qp_sc[...] = mm(xq, wq_ref, bq_ref).reshape(TB, TQ, D)
        m_sc[...] = jnp.full(m_sc.shape, -jnp.inf, m_sc.dtype)
        l_sc[...] = jnp.zeros(l_sc.shape, l_sc.dtype)
        acc_sc[...] = jnp.zeros(acc_sc.shape, acc_sc.dtype)

    # Project this K/V tile (batch folded into the MXU M dimension).
    xk = k_ref[...].reshape(TB * TK, D)
    xv = v_ref[...].reshape(TB * TK, D)
    kp = mm(xk, wk_ref, bk_ref).reshape(TB, TK, D)
    vp = mm(xv, wv_ref, bv_ref).reshape(TB, TK, D)

    # scores[b] = qp[b] @ kp[b].T via a contraction on D (no in-kernel vxpose).
    s = jnp.einsum('bqd,bkd->bqk',
                   qp_sc[...].astype(matmul_dtype), kp.astype(matmul_dtype),
                   preferred_element_type=f32, precision=dot_precision)

    # Online (flash) softmax update, all in f32.
    m_prev = m_sc[...]
    m_new = jnp.maximum(m_prev, jnp.max(s, axis=-1, keepdims=True))
    alpha = jnp.exp(m_prev - m_new)
    p = jnp.exp(s - m_new)
    l_sc[...] = alpha * l_sc[...] + jnp.sum(p, axis=-1, keepdims=True)
    acc_sc[...] = alpha * acc_sc[...] + jnp.einsum(
        'bqk,bkd->bqd', p.astype(matmul_dtype), vp.astype(matmul_dtype),
        preferred_element_type=f32, precision=dot_precision)
    m_sc[...] = m_new

    @pl.when(ki == pl.num_programs(2) - 1)
    def _finalize():
        attn = acc_sc[...] / l_sc[...]          # exact normalization
        out = mm(attn.reshape(TB * TQ, D), wo_ref, bo_ref)
        o_ref[...] = out.reshape(TB, TQ, D).astype(o_ref.dtype)


def _pick_tile(s, target):
    """Largest divisor of s that is <= target, preferring multiples of 8."""
    if s <= target:
        return s
    divs = [d for d in range(1, target + 1) if s % d == 0]
    mult8 = [d for d in divs if d % 8 == 0]
    return max(mult8) if mult8 else max(divs)


def _vmem_bytes(tb, tq, tk, d, opb):
    """Rough per-grid-step VMEM footprint (double-buffered tiles + scratch)."""
    tiles = 2 * tb * tq * d * opb + 2 * 2 * tb * tk * d * opb + 2 * tb * tq * d * 4
    weights = 2 * (4 * d * d * opb + 4 * d * 4)
    scratch = 2 * tb * tq * d * 4 + 2 * tb * tq * 4
    live = tb * (2 * tk * d + 2 * tq * tk + tq * d) * 4      # kp/vp, scores, probs
    return tiles + weights + scratch + live


def simplified_attention(q, k, v, params, *, d_model, nhead,
                         block_b=None, block_q=None, block_k=None,
                         matmul_dtype=None,
                         vmem_budget_bytes=40 * 1024 * 1024):
    """q: (B, Sq, D); k, v: (B, Skv, D). Returns (B, Sq, D) in q.dtype.

    matmul_dtype: pass jnp.bfloat16 for MXU peak on all generations
    (v5e/v6e/v7x); q/k/v/weights are downcast on the host, accumulation and
    softmax stay f32. Default: input dtype (f32 -> exact f32 matmuls).
    block_q/block_k default to 256 (MXU-native on v6e/v7x); pass 128 on v5e.
    For production, keep d_model a multiple of 128 for lane-dense stores.
    """
    B, Sq, D = q.shape
    Bk, Skv, Dk = k.shape
    assert D == d_model and Dk == D and Bk == B and v.shape == k.shape
    out_dtype = q.dtype
    scale = 1.0 / math.sqrt(d_model / nhead)

    if matmul_dtype is None:
        matmul_dtype = q.dtype
    opb = np.dtype(matmul_dtype).itemsize
    dot_precision = (lax.Precision.HIGHEST
                     if np.dtype(matmul_dtype) == np.dtype(jnp.float32)
                     else lax.Precision.DEFAULT)

    wq, bq, wk, bk, wv, bv, wo, bo = params

    # ---- Host-side (one-time) prep: transpose weights, fold softmax scale
    # into Wq/bq, downcast matmul operands; biases stay f32.
    wqt = (wq.T * scale).astype(matmul_dtype)
    wkt = wk.T.astype(matmul_dtype)
    wvt = wv.T.astype(matmul_dtype)
    wot = wo.T.astype(matmul_dtype)
    bq2 = (bq * scale).reshape(1, D).astype(jnp.float32)
    bk2 = bk.reshape(1, D).astype(jnp.float32)
    bv2 = bv.reshape(1, D).astype(jnp.float32)
    bo2 = bo.reshape(1, D).astype(jnp.float32)
    qx = q.astype(matmul_dtype)
    kx = k.astype(matmul_dtype)
    vx = v.astype(matmul_dtype)

    # ---- Tile selection (divisors of S keep the grid exact; multiples of 8
    # keep the in-kernel batch-flatten reshapes layout no-ops).
    TQ = block_q if block_q is not None else _pick_tile(Sq, 256)
    TK = block_k if block_k is not None else _pick_tile(Skv, 256)
    assert Sq % TQ == 0 and Skv % TK == 0

    # ---- VMEM-budget-aware batch folding; keep >=2 parallel grid steps when
    # possible so v7x's two TensorCores both get work.
    if block_b is None:
        cap = B
        if (Sq // TQ) < 2 and B >= 2:
            cap = max(1, B // 2)
        block_b = 1
        for d in range(1, B + 1):
            if (B % d == 0 and d <= cap
                    and _vmem_bytes(d, TQ, TK, D, opb) <= vmem_budget_bytes):
                block_b = d
    assert B % block_b == 0
    grid = (B // block_b, Sq // TQ, Skv // TK)

    est = _vmem_bytes(block_b, TQ, TK, D, opb)
    vmem_limit = int(min(64 * 1024 * 1024, max(32 * 1024 * 1024, 3 * est // 2)))

    q_spec = pl.BlockSpec((block_b, TQ, D), lambda b, qi, ki: (b, qi, 0))
    kv_spec = pl.BlockSpec((block_b, TK, D), lambda b, qi, ki: (b, ki, 0))
    o_spec = pl.BlockSpec((block_b, TQ, D), lambda b, qi, ki: (b, qi, 0))
    w_spec = pl.BlockSpec((D, D), lambda b, qi, ki: (0, 0))
    b_spec = pl.BlockSpec((1, D), lambda b, qi, ki: (0, 0))

    kernel = partial(_attention_kernel, matmul_dtype, dot_precision)

    return pl.pallas_call(
        kernel,
        out_shape=jax.ShapeDtypeStruct((B, Sq, D), out_dtype),
        grid_spec=pltpu.PrefetchScalarGridSpec(
            num_scalar_prefetch=0,
            grid=grid,
            in_specs=[q_spec, kv_spec, kv_spec,
                      w_spec, b_spec, w_spec, b_spec,
                      w_spec, b_spec, w_spec, b_spec],
            out_specs=o_spec,
            scratch_shapes=[
                pltpu.VMEM((block_b, TQ, D), jnp.float32),   # projected Q
                pltpu.VMEM((block_b, TQ, 1), jnp.float32),   # running max m
                pltpu.VMEM((block_b, TQ, 1), jnp.float32),   # running denom l
                pltpu.VMEM((block_b, TQ, D), jnp.float32),   # output accumulator
            ],
        ),
        compiler_params=pltpu.CompilerParams(
            dimension_semantics=("parallel", "parallel", "arbitrary"),
            vmem_limit_bytes=vmem_limit),
    )(qx, kx, vx, wqt, bq2, wkt, bk2, wvt, bv2, wot, bo2)


def _reference(q, k, v, params, *, d_model, nhead):
    wq, bq, wk, bk, wv, bv, wo, bo = params
    hp = lax.Precision.HIGHEST
    qp = jnp.matmul(q, wq.T, precision=hp) + bq
    kp = jnp.matmul(k, wk.T, precision=hp) + bk
    vp = jnp.matmul(v, wv.T, precision=hp) + bv
    scores = (jnp.matmul(qp, jnp.swapaxes(kp, -2, -1), precision=hp)
              / math.sqrt(d_model / nhead))
    probs = jax.nn.softmax(scores, axis=-1)
    out = jnp.matmul(probs, vp, precision=hp)
    return jnp.matmul(out, wo.T, precision=hp) + bo


if __name__ == "__main__":
    B, S, d_model, nhead = 2, 8, 32, 4

    key = jax.random.PRNGKey(0)
    keys = jax.random.split(key, 12)

    # Deterministic parameter init (nn.Linear-style uniform bound).
    bound = 1.0 / math.sqrt(d_model)

    def u(kk, shape):
        return jax.random.uniform(kk, shape, jnp.float32, -bound, bound)

    wq, bq = u(keys[0], (d_model, d_model)), u(keys[1], (d_model,))
    wk, bk = u(keys[2], (d_model, d_model)), u(keys[3], (d_model,))
    wv, bv = u(keys[4], (d_model, d_model)), u(keys[5], (d_model,))
    wo, bo = u(keys[6], (d_model, d_model)), u(keys[7], (d_model,))
    params = (wq, bq, wk, bk, wv, bv, wo, bo)

    q = jax.random.normal(keys[8], (B, S, d_model), jnp.float32)
    k = jax.random.normal(keys[9], (B, S, d_model), jnp.float32)
    v = jax.random.normal(keys[10], (B, S, d_model), jnp.float32)

    ref = _reference(q, k, v, params, d_model=d_model, nhead=nhead)

    # f32 path: exact MXU precision, exact softmax -> tight tolerance.
    out = simplified_attention(q, k, v, params, d_model=d_model, nhead=nhead)
    out = jax.block_until_ready(out)
    assert out.shape == (B, S, d_model)
    assert jnp.allclose(out, ref, atol=2e-3, rtol=2e-3), "f32 mismatch vs reference"

    # bf16 operand path (recommended for MXU peak on v5e/v6e/v7x); f32
    # accumulation/softmax -> only bf16 operand rounding remains.
    out_bf16 = simplified_attention(q, k, v, params, d_model=d_model,
                                    nhead=nhead, matmul_dtype=jnp.bfloat16)
    out_bf16 = jax.block_until_ready(out_bf16)
    assert jnp.allclose(out_bf16, ref, atol=5e-2, rtol=5e-2), "bf16 mismatch vs reference"

    print("KERNEL_OK")
</pallas_src>

<mosaic_0001>
module attributes {stable_mosaic.version = 11 : i64} {
  func.func @_attention_kernel(%arg0: i32, %arg1: i32, %arg2: i32, %arg3: memref<1x8x32xf32, #tpu.memory_space<vmem>>, %arg4: memref<1x8x32xf32, #tpu.memory_space<vmem>>, %arg5: memref<1x8x32xf32, #tpu.memory_space<vmem>>, %arg6: memref<32x32xf32, #tpu.memory_space<vmem>>, %arg7: memref<1x32xf32, #tpu.memory_space<vmem>>, %arg8: memref<32x32xf32, #tpu.memory_space<vmem>>, %arg9: memref<1x32xf32, #tpu.memory_space<vmem>>, %arg10: memref<32x32xf32, #tpu.memory_space<vmem>>, %arg11: memref<1x32xf32, #tpu.memory_space<vmem>>, %arg12: memref<32x32xf32, #tpu.memory_space<vmem>>, %arg13: memref<1x32xf32, #tpu.memory_space<vmem>>, %arg14: memref<1x8x32xf32, #tpu.memory_space<vmem>>, %arg15: memref<1x8x32xf32, #tpu.memory_space<vmem>>, %arg16: memref<1x8x1xf32, #tpu.memory_space<vmem>>, %arg17: memref<1x8x1xf32, #tpu.memory_space<vmem>>, %arg18: memref<1x8x32xf32, #tpu.memory_space<vmem>>) attributes {dimension_semantics = [#tpu.dimension_semantics<parallel>, #tpu.dimension_semantics<parallel>, #tpu.dimension_semantics<arbitrary>], iteration_bounds = array<i64: 2, 1, 1>, scalar_prefetch = 0 : i64, scratch_operands = 4 : i64, tpu.core_type = #tpu.core_type<tc>, window_params = [{transform_indices = @transform_0, window_bounds = array<i64: 1, 8, 32>}, {transform_indices = @transform_1, window_bounds = array<i64: 1, 8, 32>}, {transform_indices = @transform_2, window_bounds = array<i64: 1, 8, 32>}, {pipeline_mode = #tpu.pipeline_mode<synchronous>, transform_indices = @transform_3, window_bounds = array<i64: 32, 32>}, {pipeline_mode = #tpu.pipeline_mode<synchronous>, transform_indices = @transform_4, window_bounds = array<i64: 1, 32>}, {pipeline_mode = #tpu.pipeline_mode<synchronous>, transform_indices = @transform_5, window_bounds = array<i64: 32, 32>}, {pipeline_mode = #tpu.pipeline_mode<synchronous>, transform_indices = @transform_6, window_bounds = array<i64: 1, 32>}, {pipeline_mode = #tpu.pipeline_mode<synchronous>, transform_indices = @transform_7, window_bounds = array<i64: 32, 32>}, {pipeline_mode = #tpu.pipeline_mode<synchronous>, transform_indices = @transform_8, window_bounds = array<i64: 1, 32>}, {pipeline_mode = #tpu.pipeline_mode<synchronous>, transform_indices = @transform_9, window_bounds = array<i64: 32, 32>}, {pipeline_mode = #tpu.pipeline_mode<synchronous>, transform_indices = @transform_10, window_bounds = array<i64: 1, 32>}, {transform_indices = @transform_11, window_bounds = array<i64: 1, 8, 32>}]} {
    %c0_i32 = arith.constant 0 : i32
    %0 = arith.cmpi eq, %arg2, %c0_i32 : i32
    %1 = arith.extui %0 : i1 to i32
    %c0_i32_0 = arith.constant 0 : i32
    %2 = arith.cmpi ne, %1, %c0_i32_0 : i32
    scf.if %2 {
      %c0_42 = arith.constant 0 : index
      %c0_43 = arith.constant 0 : index
      %c0_44 = arith.constant 0 : index
      %46 = vector.load %arg3[%c0_42, %c0_43, %c0_44] : memref<1x8x32xf32, #tpu.memory_space<vmem>>, vector<1x8x32xf32>
      %47 = vector.shape_cast %46 : vector<1x8x32xf32> to vector<8x32xf32>
      %c0_45 = arith.constant 0 : index
      %c0_46 = arith.constant 0 : index
      %48 = vector.load %arg6[%c0_45, %c0_46] : memref<32x32xf32, #tpu.memory_space<vmem>>, vector<32x32xf32>
      %cst_47 = arith.constant dense<0.000000e+00> : vector<8x32xf32>
      %49 = tpu.matmul %47, %48, %cst_47 {dimension_numbers = #tpu.dot_dimension_numbers<[1], [0], [0], [1], [0, 0, 1, 1], [], []>, precision = #tpu.contract_precision<fp32>} : vector<8x32xf32>, vector<32x32xf32>, vector<8x32xf32> -> vector<8x32xf32>
      %c0_48 = arith.constant 0 : index
      %c0_49 = arith.constant 0 : index
      %50 = vector.load %arg7[%c0_48, %c0_49] : memref<1x32xf32, #tpu.memory_space<vmem>>, vector<1x32xf32>
      %51 = vector.broadcast %50 : vector<1x32xf32> to vector<8x32xf32>
      %52 = arith.addf %49, %51 : vector<8x32xf32>
      %53 = vector.shape_cast %52 : vector<8x32xf32> to vector<1x8x32xf32>
      %c0_50 = arith.constant 0 : index
      %c0_51 = arith.constant 0 : index
      %c0_52 = arith.constant 0 : index
      %54 = vector.load %arg15[%c0_50, %c0_51, %c0_52] : memref<1x8x32xf32, #tpu.memory_space<vmem>>, vector<1x8x32xf32>
      tpu.vector_store %arg15[%c0_50, %c0_51, %c0_52], %53 {strides = array<i32>} : memref<1x8x32xf32, #tpu.memory_space<vmem>>, vector<1x8x32xf32>,
      %cst_53 = arith.constant 0xFF800000 : f32
      %55 = vector.broadcast %cst_53 : f32 to vector<1x8x1xf32>
      %c0_54 = arith.constant 0 : index
      %c0_55 = arith.constant 0 : index
      %c0_56 = arith.constant 0 : index
      %56 = vector.load %arg16[%c0_54, %c0_55, %c0_56] : memref<1x8x1xf32, #tpu.memory_space<vmem>>, vector<1x8x1xf32>
      tpu.vector_store %arg16[%c0_54, %c0_55, %c0_56], %55 {strides = array<i32>} : memref<1x8x1xf32, #tpu.memory_space<vmem>>, vector<1x8x1xf32>,
      %cst_57 = arith.constant 0.000000e+00 : f32
      %57 = vector.broadcast %cst_57 : f32 to vector<1x8x1xf32>
      %c0_58 = arith.constant 0 : index
      %c0_59 = arith.constant 0 : index
      %c0_60 = arith.constant 0 : index
      %58 = vector.load %arg17[%c0_58, %c0_59, %c0_60] : memref<1x8x1xf32, #tpu.memory_space<vmem>>, vector<1x8x1xf32>
      tpu.vector_store %arg17[%c0_58, %c0_59, %c0_60], %57 {strides = array<i32>} : memref<1x8x1xf32, #tpu.memory_space<vmem>>, vector<1x8x1xf32>,
      %cst_61 = arith.constant 0.000000e+00 : f32
      %59 = vector.broadcast %cst_61 : f32 to vector<1x8x32xf32>
      %c0_62 = arith.constant 0 : index
      %c0_63 = arith.constant 0 : index
      %c0_64 = arith.constant 0 : index
      %60 = vector.load %arg18[%c0_62, %c0_63, %c0_64] : memref<1x8x32xf32, #tpu.memory_space<vmem>>, vector<1x8x32xf32>
      tpu.vector_store %arg18[%c0_62, %c0_63, %c0_64], %59 {strides = array<i32>} : memref<1x8x32xf32, #tpu.memory_space<vmem>>, vector<1x8x32xf32>,
    } else {
    }
    %c0 = arith.constant 0 : index
    %c0_1 = arith.constant 0 : index
    %c0_2 = arith.constant 0 : index
    %3 = vector.load %arg4[%c0, %c0_1, %c0_2] : memref<1x8x32xf32, #tpu.memory_space<vmem>>, vector<1x8x32xf32>
    %4 = vector.shape_cast %3 : vector<1x8x32xf32> to vector<8x32xf32>
    %c0_3 = arith.constant 0 : index
    %c0_4 = arith.constant 0 : index
    %c0_5 = arith.constant 0 : index
    %5 = vector.load %arg5[%c0_3, %c0_4, %c0_5] : memref<1x8x32xf32, #tpu.memory_space<vmem>>, vector<1x8x32xf32>
    %6 = vector.shape_cast %5 : vector<1x8x32xf32> to vector<8x32xf32>
    %c0_6 = arith.constant 0 : index
    %c0_7 = arith.constant 0 : index
    %7 = vector.load %arg8[%c0_6, %c0_7] : memref<32x32xf32, #tpu.memory_space<vmem>>, vector<32x32xf32>
    %cst = arith.constant dense<0.000000e+00> : vector<8x32xf32>
    %8 = tpu.matmul %4, %7, %cst {dimension_numbers = #tpu.dot_dimension_numbers<[1], [0], [0], [1], [0, 0, 1, 1], [], []>, precision = #tpu.contract_precision<fp32>} : vector<8x32xf32>, vector<32x32xf32>, vector<8x32xf32> -> vector<8x32xf32>
    %c0_8 = arith.constant 0 : index
    %c0_9 = arith.constant 0 : index
    %9 = vector.load %arg9[%c0_8, %c0_9] : memref<1x32xf32, #tpu.memory_space<vmem>>, vector<1x32xf32>
    %10 = vector.broadcast %9 : vector<1x32xf32> to vector<8x32xf32>
    %11 = arith.addf %8, %10 : vector<8x32xf32>
    %12 = vector.shape_cast %11 : vector<8x32xf32> to vector<1x8x32xf32>
    %c0_10 = arith.constant 0 : index
    %c0_11 = arith.constant 0 : index
    %13 = vector.load %arg10[%c0_10, %c0_11] : memref<32x32xf32, #tpu.memory_space<vmem>>, vector<32x32xf32>
    %cst_12 = arith.constant dense<0.000000e+00> : vector<8x32xf32>
    %14 = tpu.matmul %6, %13, %cst_12 {dimension_numbers = #tpu.dot_dimension_numbers<[1], [0], [0], [1], [0, 0, 1, 1], [], []>, precision = #tpu.contract_precision<fp32>} : vector<8x32xf32>, vector<32x32xf32>, vector<8x32xf32> -> vector<8x32xf32>
    %c0_13 = arith.constant 0 : index
    %c0_14 = arith.constant 0 : index
    %15 = vector.load %arg11[%c0_13, %c0_14] : memref<1x32xf32, #tpu.memory_space<vmem>>, vector<1x32xf32>
    %16 = vector.broadcast %15 : vector<1x32xf32> to vector<8x32xf32>
    %17 = arith.addf %14, %16 : vector<8x32xf32>
    %18 = vector.shape_cast %17 : vector<8x32xf32> to vector<1x8x32xf32>
    %c0_15 = arith.constant 0 : index
    %c0_16 = arith.constant 0 : index
    %c0_17 = arith.constant 0 : index
    %19 = vector.load %arg15[%c0_15, %c0_16, %c0_17] : memref<1x8x32xf32, #tpu.memory_space<vmem>>, vector<1x8x32xf32>
    "tpu.trace_start"() <{level = 10 : i32, message = "bqd,bkd->bqk"}> : () -> ()
    %cst_18 = arith.constant dense<0.000000e+00> : vector<1x8x8xf32>
    %20 = tpu.matmul %19, %12, %cst_18 {dimension_numbers = #tpu.dot_dimension_numbers<[2], [2], [1], [1], [0, 0, 0, 1, 1, 1], [0], [0]>, precision = #tpu.contract_precision<fp32>} : vector<1x8x32xf32>, vector<1x8x32xf32>, vector<1x8x8xf32> -> vector<1x8x8xf32>
    "tpu.trace_stop"() : () -> ()
    %c0_19 = arith.constant 0 : index
    %c0_20 = arith.constant 0 : index
    %c0_21 = arith.constant 0 : index
    %21 = vector.load %arg16[%c0_19, %c0_20, %c0_21] : memref<1x8x1xf32, #tpu.memory_space<vmem>>, vector<1x8x1xf32>
    %cst_22 = arith.constant dense<0xFF800000> : vector<1x8xf32>
    %22 = vector.multi_reduction <maximumf>, %20, %cst_22 [2] : vector<1x8x8xf32> to vector<1x8xf32>
    %23 = vector.shape_cast %22 : vector<1x8xf32> to vector<1x8x1xf32>
    %24 = arith.maximumf %21, %23 : vector<1x8x1xf32>
    %25 = arith.subf %21, %24 : vector<1x8x1xf32>
    %26 = math.exp %25 : vector<1x8x1xf32>
    %27 = vector.broadcast %24 : vector<1x8x1xf32> to vector<1x8x8xf32>
    %28 = arith.subf %20, %27 : vector<1x8x8xf32>
    %29 = math.exp %28 : vector<1x8x8xf32>
    %c0_23 = arith.constant 0 : index
    %c0_24 = arith.constant 0 : index
    %c0_25 = arith.constant 0 : index
    %30 = vector.load %arg17[%c0_23, %c0_24, %c0_25] : memref<1x8x1xf32, #tpu.memory_space<vmem>>, vector<1x8x1xf32>
    %31 = arith.mulf %26, %30 : vector<1x8x1xf32>
    %cst_26 = arith.constant dense<0.000000e+00> : vector<1x8xf32>
    %32 = vector.multi_reduction <add>, %29, %cst_26 [2] : vector<1x8x8xf32> to vector<1x8xf32>
    %33 = vector.shape_cast %32 : vector<1x8xf32> to vector<1x8x1xf32>
    %34 = arith.addf %31, %33 : vector<1x8x1xf32>
    %c0_27 = arith.constant 0 : index
    %c0_28 = arith.constant 0 : index
    %c0_29 = arith.constant 0 : index
    %35 = vector.load %arg17[%c0_27, %c0_28, %c0_29] : memref<1x8x1xf32, #tpu.memory_space<vmem>>, vector<1x8x1xf32>
    tpu.vector_store %arg17[%c0_27, %c0_28, %c0_29], %34 {strides = array<i32>} : memref<1x8x1xf32, #tpu.memory_space<vmem>>, vector<1x8x1xf32>,
    %c0_30 = arith.constant 0 : index
    %c0_31 = arith.constant 0 : index
    %c0_32 = arith.constant 0 : index
    %36 = vector.load %arg18[%c0_30, %c0_31, %c0_32] : memref<1x8x32xf32, #tpu.memory_space<vmem>>, vector<1x8x32xf32>
    %37 = vector.broadcast %26 : vector<1x8x1xf32> to vector<1x8x32xf32>
    %38 = arith.mulf %37, %36 : vector<1x8x32xf32>
    "tpu.trace_start"() <{level = 10 : i32, message = "bqk,bkd->bqd"}> : () -> ()
    %cst_33 = arith.constant dense<0.000000e+00> : vector<1x8x32xf32>
    %39 = tpu.matmul %29, %18, %cst_33 {dimension_numbers = #tpu.dot_dimension_numbers<[2], [1], [1], [2], [0, 0, 0, 1, 1, 2], [0], [0]>, precision = #tpu.contract_precision<fp32>} : vector<1x8x8xf32>, vector<1x8x32xf32>, vector<1x8x32xf32> -> vector<1x8x32xf32>
    "tpu.trace_stop"() : () -> ()
    %40 = arith.addf %38, %39 : vector<1x8x32xf32>
    %c0_34 = arith.constant 0 : index
    %c0_35 = arith.constant 0 : index
    %c0_36 = arith.constant 0 : index
    %41 = vector.load %arg18[%c0_34, %c0_35, %c0_36] : memref<1x8x32xf32, #tpu.memory_space<vmem>>, vector<1x8x32xf32>
    tpu.vector_store %arg18[%c0_34, %c0_35, %c0_36], %40 {strides = array<i32>} : memref<1x8x32xf32, #tpu.memory_space<vmem>>, vector<1x8x32xf32>,
    %c0_37 = arith.constant 0 : index
    %c0_38 = arith.constant 0 : index
    %c0_39 = arith.constant 0 : index
    %42 = vector.load %arg16[%c0_37, %c0_38, %c0_39] : memref<1x8x1xf32, #tpu.memory_space<vmem>>, vector<1x8x1xf32>
    tpu.vector_store %arg16[%c0_37, %c0_38, %c0_39], %24 {strides = array<i32>} : memref<1x8x1xf32, #tpu.memory_space<vmem>>, vector<1x8x1xf32>,
    %c0_i32_40 = arith.constant 0 : i32
    %43 = arith.cmpi eq, %arg2, %c0_i32_40 : i32
    %44 = arith.extui %43 : i1 to i32
    %c0_i32_41 = arith.constant 0 : i32
    %45 = arith.cmpi ne, %44, %c0_i32_41 : i32
    scf.if %45 {
      %c0_42 = arith.constant 0 : index
      %c0_43 = arith.constant 0 : index
      %c0_44 = arith.constant 0 : index
      %46 = vector.load %arg18[%c0_42, %c0_43, %c0_44] : memref<1x8x32xf32, #tpu.memory_space<vmem>>, vector<1x8x32xf32>
      %c0_45 = arith.constant 0 : index
      %c0_46 = arith.constant 0 : index
      %c0_47 = arith.constant 0 : index
      %47 = vector.load %arg17[%c0_45, %c0_46, %c0_47] : memref<1x8x1xf32, #tpu.memory_space<vmem>>, vector<1x8x1xf32>
      %48 = vector.broadcast %47 : vector<1x8x1xf32> to vector<1x8x32xf32>
      %49 = arith.divf %46, %48 : vector<1x8x32xf32>
      %50 = vector.shape_cast %49 : vector<1x8x32xf32> to vector<8x32xf32>
      %c0_48 = arith.constant 0 : index
      %c0_49 = arith.constant 0 : index
      %51 = vector.load %arg12[%c0_48, %c0_49] : memref<32x32xf32, #tpu.memory_space<vmem>>, vector<32x32xf32>
      %cst_50 = arith.constant dense<0.000000e+00> : vector<8x32xf32>
      %52 = tpu.matmul %50, %51, %cst_50 {dimension_numbers = #tpu.dot_dimension_numbers<[1], [0], [0], [1], [0, 0, 1, 1], [], []>, precision = #tpu.contract_precision<fp32>} : vector<8x32xf32>, vector<32x32xf32>, vector<8x32xf32> -> vector<8x32xf32>
      %c0_51 = arith.constant 0 : index
      %c0_52 = arith.constant 0 : index
      %53 = vector.load %arg13[%c0_51, %c0_52] : memref<1x32xf32, #tpu.memory_space<vmem>>, vector<1x32xf32>
      %54 = vector.broadcast %53 : vector<1x32xf32> to vector<8x32xf32>
      %55 = arith.addf %52, %54 : vector<8x32xf32>
      %56 = vector.shape_cast %55 : vector<8x32xf32> to vector<1x8x32xf32>
      %c0_53 = arith.constant 0 : index
      %c0_54 = arith.constant 0 : index
      %c0_55 = arith.constant 0 : index
      %57 = vector.load %arg14[%c0_53, %c0_54, %c0_55] : memref<1x8x32xf32, #tpu.memory_space<vmem>>, vector<1x8x32xf32>
      tpu.vector_store %arg14[%c0_53, %c0_54, %c0_55], %56 {strides = array<i32>} : memref<1x8x32xf32, #tpu.memory_space<vmem>>, vector<1x8x32xf32>,
    } else {
    }
    return
  }
  func.func @transform_0(%arg0: i32, %arg1: i32, %arg2: i32) -> (i32, i32, i32) {
    %c0_i32 = arith.constant 0 : i32
    %c0_i32_0 = arith.constant 0 : i32
    return %arg0, %arg1, %c0_i32 : i32, i32, i32
  }
  func.func @transform_1(%arg0: i32, %arg1: i32, %arg2: i32) -> (i32, i32, i32) {
    %c0_i32 = arith.constant 0 : i32
    %c0_i32_0 = arith.constant 0 : i32
    return %arg0, %arg2, %c0_i32 : i32, i32, i32
  }
  func.func @transform_2(%arg0: i32, %arg1: i32, %arg2: i32) -> (i32, i32, i32) {
    %c0_i32 = arith.constant 0 : i32
    %c0_i32_0 = arith.constant 0 : i32
    return %arg0, %arg2, %c0_i32 : i32, i32, i32
  }
  func.func @transform_3(%arg0: i32, %arg1: i32, %arg2: i32) -> (i32, i32) {
    %c0_i32 = arith.constant 0 : i32
    %c0_i32_0 = arith.constant 0 : i32
    %c0_i32_1 = arith.constant 0 : i32
    return %c0_i32, %c0_i32_0 : i32, i32
  }
  func.func @transform_4(%arg0: i32, %arg1: i32, %arg2: i32) -> (i32, i32) {
    %c0_i32 = arith.constant 0 : i32
    %c0_i32_0 = arith.constant 0 : i32
    %c0_i32_1 = arith.constant 0 : i32
    return %c0_i32, %c0_i32_0 : i32, i32
  }
  func.func @transform_5(%arg0: i32, %arg1: i32, %arg2: i32) -> (i32, i32) {
    %c0_i32 = arith.constant 0 : i32
    %c0_i32_0 = arith.constant 0 : i32
    %c0_i32_1 = arith.constant 0 : i32
    return %c0_i32, %c0_i32_0 : i32, i32
  }
  func.func @transform_6(%arg0: i32, %arg1: i32, %arg2: i32) -> (i32, i32) {
    %c0_i32 = arith.constant 0 : i32
    %c0_i32_0 = arith.constant 0 : i32
    %c0_i32_1 = arith.constant 0 : i32
    return %c0_i32, %c0_i32_0 : i32, i32
  }
  func.func @transform_7(%arg0: i32, %arg1: i32, %arg2: i32) -> (i32, i32) {
    %c0_i32 = arith.constant 0 : i32
    %c0_i32_0 = arith.constant 0 : i32
    %c0_i32_1 = arith.constant 0 : i32
    return %c0_i32, %c0_i32_0 : i32, i32
  }
  func.func @transform_8(%arg0: i32, %arg1: i32, %arg2: i32) -> (i32, i32) {
    %c0_i32 = arith.constant 0 : i32
    %c0_i32_0 = arith.constant 0 : i32
    %c0_i32_1 = arith.constant 0 : i32
    return %c0_i32, %c0_i32_0 : i32, i32
  }
  func.func @transform_9(%arg0: i32, %arg1: i32, %arg2: i32) -> (i32, i32) {
    %c0_i32 = arith.constant 0 : i32
    %c0_i32_0 = arith.constant 0 : i32
    %c0_i32_1 = arith.constant 0 : i32
    return %c0_i32, %c0_i32_0 : i32, i32
  }
  func.func @transform_10(%arg0: i32, %arg1: i32, %arg2: i32) -> (i32, i32) {
    %c0_i32 = arith.constant 0 : i32
    %c0_i32_0 = arith.constant 0 : i32
    %c0_i32_1 = arith.constant 0 : i32
    return %c0_i32, %c0_i32_0 : i32, i32
  }
  func.func @transform_11(%arg0: i32, %arg1: i32, %arg2: i32) -> (i32, i32, i32) {
    %c0_i32 = arith.constant 0 : i32
    %c0_i32_0 = arith.constant 0 : i32
    return %arg0, %arg1, %c0_i32 : i32, i32, i32
  }
}

</mosaic_0001>

<llo_original>
// kernel: tpu_custom_call.1
$region0: #{tpu_custom_call.1}
  #allocation0 [shape = 'u32[]', space=smem, size = 0x4, offset = 0x4, fixed_abs, tag = 'smem constant byte address 0x4 - core index']
  #allocation1 [shape = 'u32[144,128]{1,0:T(1,128)}', space=vmem, size = 0x12000, scoped, tag = 'internal scratch']
  #allocation2 [shape = 'f32[1,8,32]{2,1,0:T(8,128)}', space=vmem, size = 0x1000, scoped, tag = 'scratch operand']
  #allocation3 [shape = 'f32[1,8,1]{2,1,0:T(8,128)}', space=vmem, size = 0x1000, scoped, tag = 'scratch operand']
  #allocation4 [shape = 'f32[1,8,1]{2,1,0:T(8,128)}', space=vmem, size = 0x1000, scoped, tag = 'scratch operand']
  #allocation5 [shape = 'f32[1,8,32]{2,1,0:T(8,128)}', space=vmem, size = 0x1000, scoped, tag = 'scratch operand']
  %s0 = inlined_call_operand.hbm [shape: f32[2,8,32], index: 0, kind: input, shape index: {}]
  %s1 = inlined_call_operand.hbm [shape: f32[2,8,32], index: 1, kind: input, shape index: {}]
  %s2 = inlined_call_operand.hbm [shape: f32[2,8,32], index: 2, kind: input, shape index: {}]
  %s3 = inlined_call_operand.hbm [shape: f32[32,32], index: 3, kind: input, shape index: {}]
  %s4 = inlined_call_operand.vmem [shape: f32[1,32], index: 4, kind: input, shape index: {}]
  %s5 = inlined_call_operand.hbm [shape: f32[32,32], index: 5, kind: input, shape index: {}]
  %s6 = inlined_call_operand.vmem [shape: f32[1,32], index: 6, kind: input, shape index: {}]
  %s7 = inlined_call_operand.hbm [shape: f32[32,32], index: 7, kind: input, shape index: {}]
  %s8 = inlined_call_operand.hbm [shape: f32[1,32], index: 8, kind: input, shape index: {}]
  %s9 = inlined_call_operand.vmem [shape: f32[32,32], index: 9, kind: input, shape index: {}]
  %s10 = inlined_call_operand.vmem [shape: f32[1,32], index: 10, kind: input, shape index: {}]
  %s11 = inlined_call_operand.hbm [shape: f32[2,8,32], index: 11, kind: output, shape index: {}]
  %s12 = sld [smem:[#allocation0]]
  $region113: #{tpu_custom_call.1} parent=0
    _
  %s14 = ssub.s32 1, %s12
  %s15 = scalar_select 0, %s14, %s12
  $region1: #{tpu_custom_call.1} parent=0
    #allocation6 [shape = 'u8[8192]{0}', space=vmem, size = 0x2000, scoped, tag = 'input window, operand 0']
    #allocation7 [shape = 's32[2]{0}', space=sflag, size = 0x8, scoped, tag = 'scoped memory for tpu_custom_call.1']
    #allocation8 [shape = 's32[2]{0}', space=sflag, size = 0x8, scoped, tag = 'scoped memory for tpu_custom_call.1']
    #allocation9 [shape = 'u8[8192]{0}', space=vmem, size = 0x2000, scoped, tag = 'input window, operand 1']
    #allocation10 [shape = 's32[2]{0}', space=sflag, size = 0x8, scoped, tag = 'scoped memory for tpu_custom_call.1']
    #allocation11 [shape = 'u8[8192]{0}', space=vmem, size = 0x2000, scoped, tag = 'input window, operand 2']
    #allocation12 [shape = 'u8[16384]{0}', space=vmem, size = 0x4000, scoped, tag = 'input window, operand 3, single buffered']
    #allocation13 [shape = 's32[1]{0}', space=sflag, size = 0x4, scoped, tag = 'scoped memory for tpu_custom_call.1']
    #allocation14 [shape = 'u8[16384]{0}', space=vmem, size = 0x4000, scoped, tag = 'input window, operand 5, single buffered']
    #allocation15 [shape = 'u8[16384]{0}', space=vmem, size = 0x4000, scoped, tag = 'input window, operand 7, single buffered']
    #allocation16 [shape = 's32[1]{0}', space=sflag, size = 0x4, scoped, tag = 'scoped memory for tpu_custom_call.1']
    #allocation17 [shape = 'u8[512]{0}', space=vmem, size = 0x400, scoped, tag = 'input window, operand 8, single buffered']
    #allocation18 [shape = 'u8[8192]{0}', space=vmem, size = 0x2000, scoped, tag = 'output window, operand 0']
    %16 = vsyncpa [#allocation7], 0
    %s17 = scalar_lea.sflag [#allocation7], 1
    %18 = vsyncpa %s17, 0
    %19 = vsyncpa [#allocation10], 0
    %s20 = scalar_lea.sflag [#allocation10], 1
    %21 = vsyncpa %s20, 0
    %22 = vsyncpa [#allocation13], 0
    %23 = vsyncpa [#allocation16], 0
    %24 = vsyncpa [#allocation8], 0
    %s25 = scalar_lea.sflag [#allocation8], 1
    %26 = vsyncpa %s25, 0
    loop: start=0, step=1, limit=4
    $region2: #{tpu_custom_call.1} parent=1 // loop_pre_header
      _
    $region3: #{tpu_custom_call.1} parent=1 // loop_header
      %s28 = sphi 0, %s32
      %p29 = scmp.ge.s32.totalorder %s28, 4
      %s35 = sphi 0, %s54
      %s36 = sphi 0, %s50
      %s37 = sphi 0, %s46
      %s38 = sphi 0, %s35
      %s39 = sphi 0, %s36
      %s40 = sphi 0, %s37
      %s41 = sphi 0, %s38
      %s42 = sphi 0, %s39
      %s43 = sphi 0, %s40
      %s59 = sphi 0, %s61
      %s62 = sphi 0, %s59
      %s63 = sphi 0, %s62
      %s79 = sphi 0, %s63
      %s87 = sphi 0, %s89
      %s90 = sphi 0, %s87
      %s91 = sphi 0, %s90
      %s107 = sphi 0, %s91
      %s115 = sphi 0, %s117
      %s118 = sphi 0, %s115
      %s119 = sphi 0, %s118
      %s135 = sphi 0, %s119
      %s139 = sphi 0, %s139
      %s141 = sphi 0, %s139
      %s142 = sphi 0, %s141
      %s156 = sphi 0, %s142
      %s160 = sphi 0, %s160
      %s162 = sphi 0, %s160
      %s163 = sphi 0, %s162
      %s177 = sphi 0, %s163
      %s181 = sphi 0, %s181
      %s183 = sphi 0, %s181
      %s184 = sphi 0, %s183
      %s198 = sphi 0, %s184
      %s202 = sphi 0, %s202
      %s204 = sphi 0, %s202
      %s205 = sphi 0, %s204
      %s219 = sphi 0, %s205
      %s223 = sphi 0, %s223
      %s225 = sphi 0, %s223
      %s226 = sphi 0, %s225
      %s240 = sphi 0, %s226
      %s244 = sphi 0, %s244
      %s246 = sphi 0, %s244
      %s247 = sphi 0, %s246
      %s261 = sphi 0, %s247
      %s265 = sphi 0, %s265
      %s267 = sphi 0, %s265
      %s268 = sphi 0, %s267
      %s282 = sphi 0, %s268
      %s286 = sphi 0, %s286
      %s288 = sphi 0, %s286
      %s289 = sphi 0, %s288
      %s303 = sphi 0, %s289
      %s311 = sphi 0, %s313
      %s314 = sphi 0, %s311
      %s315 = sphi 0, %s314
      %s331 = sphi 0, %s315
    $region4: #{tpu_custom_call.1} parent=1 // loop_header_branch
      %31 = sbr.rel (%p29) target = $region8
    $region5: #{tpu_custom_call.1} parent=1 // loop_body
      %s33 = ssub.s32 %s28, 1
      %s34 = ssub.s32 %s28, 2
      %s44 = sadd.s32 1, %s37
      %p45 = scmp.ge.s32.totalorder %s44, 1
      %s46 = scalar_select %p45, 0, %s44
      %s47 = sadd.s32 1, %s36
      %s48 = scalar_select %p45, %s47, %s36
      %p49 = scmp.ge.s32.totalorder %s48, 1
      %s50 = scalar_select %p49, 0, %s48
      %s51 = sadd.s32 1, %s35
      %s52 = scalar_select %p49, %s51, %s35
      %p53 = scmp.ge.s32.totalorder %s52, 2
      %s54 = scalar_select %p53, 0, %s52
      %s55 = ssub.s32 %s35, %s54
      %s56 = ssub.s32 %s36, %s50
      %s57 = sor.u32 %s55, %s56
      %p58 = scmp.eq.s32.totalorder %s57, 0
      %s60 = sadd.s32 %s59, 1
      %s61 = scalar_select %p58, %s59, %s60
      %p64 = pneg %p58
      %p65 = scmp.eq.s32.totalorder %s28, 1
      %p66 = por %p64, %p65
      %p67 = scmp.ne.s32.totalorder %s59, %s62
      %p68 = scmp.eq.s32.totalorder %s28, 0
      %p69 = por %p67, %p68
      %p70 = scmp.ne.s32.totalorder %s59, %s62
      %p71 = scmp.eq.s32.totalorder %s33, 1
      %p72 = por %p70, %p71
      %p73 = scmp.ne.s32.totalorder %s62, %s63
      %p74 = scmp.eq.s32.totalorder %s33, 0
      %p75 = por %p73, %p74
      %p76 = scmp.ne.s32.totalorder %s62, %s63
      %p77 = scmp.eq.s32.totalorder %s34, 1
      %p78 = por %p76, %p77
      %p80 = scmp.ne.s32.totalorder %s63, %s79
      %p81 = scmp.eq.s32.totalorder %s34, 0
      %p82 = por %p80, %p81
      %s83 = ssub.s32 %s35, %s54
      %s84 = ssub.s32 %s37, %s46
      %s85 = sor.u32 %s83, %s84
      %p86 = scmp.eq.s32.totalorder %s85, 0
      %s88 = sadd.s32 %s87, 1
      %s89 = scalar_select %p86, %s87, %s88
      %p92 = pneg %p86
      %p93 = scmp.eq.s32.totalorder %s28, 1
      %p94 = por %p92, %p93
      %p95 = scmp.ne.s32.totalorder %s87, %s90
      %p96 = scmp.eq.s32.totalorder %s28, 0
      %p97 = por %p95, %p96
      %p98 = scmp.ne.s32.totalorder %s87, %s90
      %p99 = scmp.eq.s32.totalorder %s33, 1
      %p100 = por %p98, %p99
      %p101 = scmp.ne.s32.totalorder %s90, %s91
      %p102 = scmp.eq.s32.totalorder %s33, 0
      %p103 = por %p101, %p102
      %p104 = scmp.ne.s32.totalorder %s90, %s91
      %p105 = scmp.eq.s32.totalorder %s34, 1
      %p106 = por %p104, %p105
      %p108 = scmp.ne.s32.totalorder %s91, %s107
      %p109 = scmp.eq.s32.totalorder %s34, 0
      %p110 = por %p108, %p109
      %s111 = ssub.s32 %s35, %s54
      %s112 = ssub.s32 %s37, %s46
      %s113 = sor.u32 %s111, %s112
      %p114 = scmp.eq.s32.totalorder %s113, 0
      %s116 = sadd.s32 %s115, 1
      %s117 = scalar_select %p114, %s115, %s116
      %p120 = pneg %p114
      %p121 = scmp.eq.s32.totalorder %s28, 1
      %p122 = por %p120, %p121
      %p123 = scmp.ne.s32.totalorder %s115, %s118
      %p124 = scmp.eq.s32.totalorder %s28, 0
      %p125 = por %p123, %p124
      %p126 = scmp.ne.s32.totalorder %s115, %s118
      %p127 = scmp.eq.s32.totalorder %s33, 1
      %p128 = por %p126, %p127
      %p129 = scmp.ne.s32.totalorder %s118, %s119
      %p130 = scmp.eq.s32.totalorder %s33, 0
      %p131 = por %p129, %p130
      %p132 = scmp.ne.s32.totalorder %s118, %s119
      %p133 = scmp.eq.s32.totalorder %s34, 1
      %p134 = por %p132, %p133
      %p136 = scmp.ne.s32.totalorder %s119, %s135
      %p137 = scmp.eq.s32.totalorder %s34, 0
      %p138 = por %p136, %p137
      %s140 = sadd.s32 %s139, 1
      %p143 = scmp.eq.s32.totalorder %s28, 1
      %p144 = scmp.ne.s32.totalorder %s139, %s141
      %p145 = scmp.eq.s32.totalorder %s28, 0
      %p146 = por %p144, %p145
      %p147 = scmp.ne.s32.totalorder %s139, %s141
      %p148 = scmp.eq.s32.totalorder %s33, 1
      %p149 = por %p147, %p148
      %p150 = scmp.ne.s32.totalorder %s141, %s142
      %p151 = scmp.eq.s32.totalorder %s33, 0
      %p152 = por %p150, %p151
      %p153 = scmp.ne.s32.totalorder %s141, %s142
      %p154 = scmp.eq.s32.totalorder %s34, 1
      %p155 = por %p153, %p154
      %p157 = scmp.ne.s32.totalorder %s142, %s156
      %p158 = scmp.eq.s32.totalorder %s34, 0
      %p159 = por %p157, %p158
      %s161 = sadd.s32 %s160, 1
      %p164 = scmp.eq.s32.totalorder %s28, 1
      %p165 = scmp.ne.s32.totalorder %s160, %s162
      %p166 = scmp.eq.s32.totalorder %s28, 0
      %p167 = por %p165, %p166
      %p168 = scmp.ne.s32.totalorder %s160, %s162
      %p169 = scmp.eq.s32.totalorder %s33, 1
      %p170 = por %p168, %p169
      %p171 = scmp.ne.s32.totalorder %s162, %s163
      %p172 = scmp.eq.s32.totalorder %s33, 0
      %p173 = por %p171, %p172
      %p174 = scmp.ne.s32.totalorder %s162, %s163
      %p175 = scmp.eq.s32.totalorder %s34, 1
      %p176 = por %p174, %p175
      %p178 = scmp.ne.s32.totalorder %s163, %s177
      %p179 = scmp.eq.s32.totalorder %s34, 0
      %p180 = por %p178, %p179
      %s182 = sadd.s32 %s181, 1
      %p185 = scmp.eq.s32.totalorder %s28, 1
      %p186 = scmp.ne.s32.totalorder %s181, %s183
      %p187 = scmp.eq.s32.totalorder %s28, 0
      %p188 = por %p186, %p187
      %p189 = scmp.ne.s32.totalorder %s181, %s183
      %p190 = scmp.eq.s32.totalorder %s33, 1
      %p191 = por %p189, %p190
      %p192 = scmp.ne.s32.totalorder %s183, %s184
      %p193 = scmp.eq.s32.totalorder %s33, 0
      %p194 = por %p192, %p193
      %p195 = scmp.ne.s32.totalorder %s183, %s184
      %p196 = scmp.eq.s32.totalorder %s34, 1
      %p197 = por %p195, %p196
      %p199 = scmp.ne.s32.totalorder %s184, %s198
      %p200 = scmp.eq.s32.totalorder %s34, 0
      %p201 = por %p199, %p200
      %s203 = sadd.s32 %s202, 1
      %p206 = scmp.eq.s32.totalorder %s28, 1
      %p207 = scmp.ne.s32.totalorder %s202, %s204
      %p208 = scmp.eq.s32.totalorder %s28, 0
      %p209 = por %p207, %p208
      %p210 = scmp.ne.s32.totalorder %s202, %s204
      %p211 = scmp.eq.s32.totalorder %s33, 1
      %p212 = por %p210, %p211
      %p213 = scmp.ne.s32.totalorder %s204, %s205
      %p214 = scmp.eq.s32.totalorder %s33, 0
      %p215 = por %p213, %p214
      %p216 = scmp.ne.s32.totalorder %s204, %s205
      %p217 = scmp.eq.s32.totalorder %s34, 1
      %p218 = por %p216, %p217
      %p220 = scmp.ne.s32.totalorder %s205, %s219
      %p221 = scmp.eq.s32.totalorder %s34, 0
      %p222 = por %p220, %p221
      %s224 = sadd.s32 %s223, 1
      %p227 = scmp.eq.s32.totalorder %s28, 1
      %p228 = scmp.ne.s32.totalorder %s223, %s225
      %p229 = scmp.eq.s32.totalorder %s28, 0
      %p230 = por %p228, %p229
      %p231 = scmp.ne.s32.totalorder %s223, %s225
      %p232 = scmp.eq.s32.totalorder %s33, 1
      %p233 = por %p231, %p232
      %p234 = scmp.ne.s32.totalorder %s225, %s226
      %p235 = scmp.eq.s32.totalorder %s33, 0
      %p236 = por %p234, %p235
      %p237 = scmp.ne.s32.totalorder %s225, %s226
      %p238 = scmp.eq.s32.totalorder %s34, 1
      %p239 = por %p237, %p238
      %p241 = scmp.ne.s32.totalorder %s226, %s240
      %p242 = scmp.eq.s32.totalorder %s34, 0
      %p243 = por %p241, %p242
      %s245 = sadd.s32 %s244, 1
      %p248 = scmp.eq.s32.totalorder %s28, 1
      %p249 = scmp.ne.s32.totalorder %s244, %s246
      %p250 = scmp.eq.s32.totalorder %s28, 0
      %p251 = por %p249, %p250
      %p252 = scmp.ne.s32.totalorder %s244, %s246
      %p253 = scmp.eq.s32.totalorder %s33, 1
      %p254 = por %p252, %p253
      %p255 = scmp.ne.s32.totalorder %s246, %s247
      %p256 = scmp.eq.s32.totalorder %s33, 0
      %p257 = por %p255, %p256
      %p258 = scmp.ne.s32.totalorder %s246, %s247
      %p259 = scmp.eq.s32.totalorder %s34, 1
      %p260 = por %p258, %p259
      %p262 = scmp.ne.s32.totalorder %s247, %s261
      %p263 = scmp.eq.s32.totalorder %s34, 0
      %p264 = por %p262, %p263
      %s266 = sadd.s32 %s265, 1
      %p269 = scmp.eq.s32.totalorder %s28, 1
      %p270 = scmp.ne.s32.totalorder %s265, %s267
      %p271 = scmp.eq.s32.totalorder %s28, 0
      %p272 = por %p270, %p271
      %p273 = scmp.ne.s32.totalorder %s265, %s267
      %p274 = scmp.eq.s32.totalorder %s33, 1
      %p275 = por %p273, %p274
      %p276 = scmp.ne.s32.totalorder %s267, %s268
      %p277 = scmp.eq.s32.totalorder %s33, 0
      %p278 = por %p276, %p277
      %p279 = scmp.ne.s32.totalorder %s267, %s268
      %p280 = scmp.eq.s32.totalorder %s34, 1
      %p281 = por %p279, %p280
      %p283 = scmp.ne.s32.totalorder %s268, %s282
      %p284 = scmp.eq.s32.totalorder %s34, 0
      %p285 = por %p283, %p284
      %s287 = sadd.s32 %s286, 1
      %p290 = scmp.eq.s32.totalorder %s28, 1
      %p291 = scmp.ne.s32.totalorder %s286, %s288
      %p292 = scmp.eq.s32.totalorder %s28, 0
      %p293 = por %p291, %p292
      %p294 = scmp.ne.s32.totalorder %s286, %s288
      %p295 = scmp.eq.s32.totalorder %s33, 1
      %p296 = por %p294, %p295
      %p297 = scmp.ne.s32.totalorder %s288, %s289
      %p298 = scmp.eq.s32.totalorder %s33, 0
      %p299 = por %p297, %p298
      %p300 = scmp.ne.s32.totalorder %s288, %s289
      %p301 = scmp.eq.s32.totalorder %s34, 1
      %p302 = por %p300, %p301
      %p304 = scmp.ne.s32.totalorder %s289, %s303
      %p305 = scmp.eq.s32.totalorder %s34, 0
      %p306 = por %p304, %p305
      %s307 = ssub.s32 %s35, %s54
      %s308 = ssub.s32 %s36, %s50
      %s309 = sor.u32 %s307, %s308
      %p310 = scmp.eq.s32.totalorder %s309, 0
      %s312 = sadd.s32 %s311, 1
      %s313 = scalar_select %p310, %s311, %s312
      %p316 = pneg %p310
      %p317 = scmp.eq.s32.totalorder %s28, 1
      %p318 = por %p316, %p317
      %p319 = scmp.ne.s32.totalorder %s311, %s314
      %p320 = scmp.eq.s32.totalorder %s28, 0
      %p321 = por %p319, %p320
      %p322 = scmp.ne.s32.totalorder %s311, %s314
      %p323 = scmp.eq.s32.totalorder %s33, 1
      %p324 = por %p322, %p323
      %p325 = scmp.ne.s32.totalorder %s314, %s315
      %p326 = scmp.eq.s32.totalorder %s33, 0
      %p327 = por %p325, %p326
      %p328 = scmp.ne.s32.totalorder %s314, %s315
      %p329 = scmp.eq.s32.totalorder %s34, 1
      %p330 = por %p328, %p329
      %p332 = scmp.ne.s32.totalorder %s315, %s331
      %p333 = scmp.eq.s32.totalorder %s34, 0
      %p334 = por %p332, %p333
      %p335 = scmp.le.s32.totalorder 1, %s28
      %p336 = scmp.lt.s32.totalorder %s28, 3
      %p337 = pnand %p335, %p336
      %p338 = pneg %p337
      // Predicated region
      $region9: #{tpu_custom_call.1} parent=5 // pred_check
        _
      $region10: #{tpu_custom_call.1} parent=5 // pred_check_branch
        %340 = sbr.rel (%p337) target = $region12
      $region11: #{tpu_custom_call.1} parent=5 // pred_region
        %s341 = ssub.s32 %s28, 1
        // Predicated region
        $region13: #{tpu_custom_call.1} parent=11 // pred_check
          %p342 = pneg %p152
        $region14: #{tpu_custom_call.1} parent=11 // pred_check_branch
          %344 = sbr.rel (%p342) target = $region16
        $region15: #{tpu_custom_call.1} parent=11 // pred_region
          %s346 = ssub.s32 512, 512
          %347 = vsyncadd [#allocation13], %s346
          %s348 = sshll.u32 [#allocation12], 4
          %s349 = int_to_ptr.vmem [resolvable:$true] %s348
          %354 = dma.hbm_to_vmem [thread:$0]  %s3, 512, %s349, [#allocation13], 128, 128, 8
        $region16: #{tpu_custom_call.1} parent=11 // pred_fallthru
          _
        // Predicated region
        $region17: #{tpu_custom_call.1} parent=11 // pred_check
          %p355 = pneg %p173
        $region18: #{tpu_custom_call.1} parent=11 // pred_check_branch
          %357 = sbr.rel (%p355) target = $region20
        $region19: #{tpu_custom_call.1} parent=11 // pred_region
          _
        $region20: #{tpu_custom_call.1} parent=11 // pred_fallthru
          _
        // Predicated region
        $region21: #{tpu_custom_call.1} parent=11 // pred_check
          %p358 = pneg %p194
        $region22: #{tpu_custom_call.1} parent=11 // pred_check_branch
          %360 = sbr.rel (%p358) target = $region24
        $region23: #{tpu_custom_call.1} parent=11 // pred_region
          %s362 = ssub.s32 512, 512
          %363 = vsyncadd [#allocation13], %s362
          %s364 = sshll.u32 [#allocation14], 4
          %s365 = int_to_ptr.vmem [resolvable:$true] %s364
          %370 = dma.hbm_to_vmem [thread:$0]  %s5, 512, %s365, [#allocation13], 128, 128, 8
        $region24: #{tpu_custom_call.1} parent=11 // pred_fallthru
          _
        // Predicated region
        $region25: #{tpu_custom_call.1} parent=11 // pred_check
          %p371 = pneg %p215
        $region26: #{tpu_custom_call.1} parent=11 // pred_check_branch
          %373 = sbr.rel (%p371) target = $region28
        $region27: #{tpu_custom_call.1} parent=11 // pred_region
          _
        $region28: #{tpu_custom_call.1} parent=11 // pred_fallthru
          _
        // Predicated region
        $region29: #{tpu_custom_call.1} parent=11 // pred_check
          %p374 = pneg %p236
        $region30: #{tpu_custom_call.1} parent=11 // pred_check_branch
          %376 = sbr.rel (%p374) target = $region32
        $region31: #{tpu_custom_call.1} parent=11 // pred_region
          %s378 = ssub.s32 512, 512
          %379 = vsyncadd [#allocation16], %s378
          %s380 = sshll.u32 [#allocation15], 4
          %s381 = int_to_ptr.vmem [resolvable:$true] %s380
          %386 = dma.hbm_to_vmem [thread:$0]  %s7, 512, %s381, [#allocation16], 128, 128, 8
        $region32: #{tpu_custom_call.1} parent=11 // pred_fallthru
          _
        // Predicated region
        $region33: #{tpu_custom_call.1} parent=11 // pred_check
          %p387 = pneg %p257
        $region34: #{tpu_custom_call.1} parent=11 // pred_check_branch
          %389 = sbr.rel (%p387) target = $region36
        $region35: #{tpu_custom_call.1} parent=11 // pred_region
          %s391 = ssub.s32 16, 16
          %392 = vsyncadd [#allocation16], %s391
          %s394 = sshll.u32 [#allocation17], 4
          %s395 = int_to_ptr.vmem [resolvable:$true] %s394
          %397 = dma.hbm_to_vmem [thread:$0]  %s8, 16, %s395, [#allocation16]
        $region36: #{tpu_custom_call.1} parent=11 // pred_fallthru
          _
        // Predicated region
        $region37: #{tpu_custom_call.1} parent=11 // pred_check
          %p398 = pneg %p278
        $region38: #{tpu_custom_call.1} parent=11 // pred_check_branch
          %400 = sbr.rel (%p398) target = $region40
        $region39: #{tpu_custom_call.1} parent=11 // pred_region
          _
        $region40: #{tpu_custom_call.1} parent=11 // pred_fallthru
          _
        // Predicated region
        $region41: #{tpu_custom_call.1} parent=11 // pred_check
          %p401 = pneg %p299
        $region42: #{tpu_custom_call.1} parent=11 // pred_check_branch
          %403 = sbr.rel (%p401) target = $region44
        $region43: #{tpu_custom_call.1} parent=11 // pred_region
          _
        $region44: #{tpu_custom_call.1} parent=11 // pred_fallthru
          _
      $region12: #{tpu_custom_call.1} parent=5 // pred_fallthru
        _
      %p404 = scmp.lt.s32.totalorder %s28, 2
      // Predicated region
      $region45: #{tpu_custom_call.1} parent=5 // pred_check
        %p405 = pneg %p404
      $region46: #{tpu_custom_call.1} parent=5 // pred_check_branch
        %407 = sbr.rel (%p405) target = $region48
      $region47: #{tpu_custom_call.1} parent=5 // pred_region
        // Predicated region
        $region49: #{tpu_custom_call.1} parent=47 // pred_check
          %p408 = pneg %p69
        $region50: #{tpu_custom_call.1} parent=47 // pred_check_branch
          %410 = sbr.rel (%p408) target = $region52
        $region51: #{tpu_custom_call.1} parent=47 // pred_region
          %s411 = sand.u32 %s59, 1
          %s412 = scalar_lea.sflag [#allocation7], %s411
          %s413 = sand.u32 %s59, 1
          %s414 = smul.addr %s413, 8
          %s415 = scalar_lea.vmem [#allocation6], %s414
          %s417 = ssub.s32 128, 128
          %418 = vsyncadd %s412, %s417
          %s419 = sadd.s32 %s36, %s35
          %s420 = smul.addr %s419, 128
          %s421 = scalar_lea.hbm %s0, %s420
          %s423 = sshll.u32 %s415, 4
          %s424 = int_to_ptr.vmem [resolvable:$true] %s423
          %426 = dma.hbm_to_vmem [thread:$0]  %s421, 128, %s424, %s412
        $region52: #{tpu_custom_call.1} parent=47 // pred_fallthru
          _
        // Predicated region
        $region53: #{tpu_custom_call.1} parent=47 // pred_check
          %p427 = pneg %p97
        $region54: #{tpu_custom_call.1} parent=47 // pred_check_branch
          %429 = sbr.rel (%p427) target = $region56
        $region55: #{tpu_custom_call.1} parent=47 // pred_region
          %s430 = sand.u32 %s28, 1
          %s431 = scalar_lea.sflag [#allocation10], %s430
          %s432 = sand.u32 %s87, 1
          %s433 = smul.addr %s432, 8
          %s434 = scalar_lea.vmem [#allocation9], %s433
          %s436 = ssub.s32 128, 128
          %437 = vsyncadd %s431, %s436
          %s438 = sadd.s32 %s37, %s35
          %s439 = smul.addr %s438, 128
          %s440 = scalar_lea.hbm %s1, %s439
          %s442 = sshll.u32 %s434, 4
          %s443 = int_to_ptr.vmem [resolvable:$true] %s442
          %445 = dma.hbm_to_vmem [thread:$0]  %s440, 128, %s443, %s431
        $region56: #{tpu_custom_call.1} parent=47 // pred_fallthru
          _
        // Predicated region
        $region57: #{tpu_custom_call.1} parent=47 // pred_check
          %p446 = pneg %p125
        $region58: #{tpu_custom_call.1} parent=47 // pred_check_branch
          %448 = sbr.rel (%p446) target = $region60
        $region59: #{tpu_custom_call.1} parent=47 // pred_region
          %s449 = sand.u32 %s28, 1
          %s450 = scalar_lea.sflag [#allocation10], %s449
          %s451 = sand.u32 %s115, 1
          %s452 = smul.addr %s451, 8
          %s453 = scalar_lea.vmem [#allocation11], %s452
          %s455 = ssub.s32 128, 128
          %456 = vsyncadd %s450, %s455
          %s457 = sadd.s32 %s37, %s35
          %s458 = smul.addr %s457, 128
          %s459 = scalar_lea.hbm %s2, %s458
          %s461 = sshll.u32 %s453, 4
          %s462 = int_to_ptr.vmem [resolvable:$true] %s461
          %464 = dma.hbm_to_vmem [thread:$0]  %s459, 128, %s462, %s450
        $region60: #{tpu_custom_call.1} parent=47 // pred_fallthru
          _
      $region48: #{tpu_custom_call.1} parent=5 // pred_fallthru
        _
      %p465 = scmp.le.s32.totalorder 1, %s28
      %p466 = scmp.lt.s32.totalorder %s28, 3
      %p467 = pnand %p465, %p466
      %p468 = pneg %p467
      // Predicated region
      $region61: #{tpu_custom_call.1} parent=5 // pred_check
        _
      $region62: #{tpu_custom_call.1} parent=5 // pred_check_branch
        %470 = sbr.rel (%p467) target = $region64
      $region63: #{tpu_custom_call.1} parent=5 // pred_region
        %s471 = ssub.s32 %s28, 1
        %s472 = sand.u32 %s62, 1
        %s473 = scalar_lea.sflag [#allocation7], %s472
        %s474 = sand.u32 %s62, 1
        %s475 = smul.addr %s474, 8
        %s476 = scalar_lea.vmem [#allocation6], %s475
        // Predicated region
        $region65: #{tpu_custom_call.1} parent=63 // pred_check
          %p477 = pneg %p75
        $region66: #{tpu_custom_call.1} parent=63 // pred_check_branch
          %479 = sbr.rel (%p477) target = $region68
        $region67: #{tpu_custom_call.1} parent=63 // pred_region
          %480 = dma.done %s473, 128
        $region68: #{tpu_custom_call.1} parent=63 // pred_fallthru
          _
        %s481 = sand.u32 %s33, 1
        %s482 = scalar_lea.sflag [#allocation10], %s481
        %s483 = sand.u32 %s90, 1
        %s484 = smul.addr %s483, 8
        %s485 = scalar_lea.vmem [#allocation9], %s484
        // Predicated region
        $region69: #{tpu_custom_call.1} parent=63 // pred_check
          %p486 = pneg %p103
        $region70: #{tpu_custom_call.1} parent=63 // pred_check_branch
          %488 = sbr.rel (%p486) target = $region72
        $region71: #{tpu_custom_call.1} parent=63 // pred_region
          %489 = dma.done %s482, 128
        $region72: #{tpu_custom_call.1} parent=63 // pred_fallthru
          _
        %s490 = sand.u32 %s33, 1
        %s491 = scalar_lea.sflag [#allocation10], %s490
        %s492 = sand.u32 %s118, 1
        %s493 = smul.addr %s492, 8
        %s494 = scalar_lea.vmem [#allocation11], %s493
        // Predicated region
        $region73: #{tpu_custom_call.1} parent=63 // pred_check
          %p495 = pneg %p131
        $region74: #{tpu_custom_call.1} parent=63 // pred_check_branch
          %497 = sbr.rel (%p495) target = $region76
        $region75: #{tpu_custom_call.1} parent=63 // pred_region
          %498 = dma.done %s491, 128
        $region76: #{tpu_custom_call.1} parent=63 // pred_fallthru
          _
        // Predicated region
        $region77: #{tpu_custom_call.1} parent=63 // pred_check
          %p499 = pneg %p152
        $region78: #{tpu_custom_call.1} parent=63 // pred_check_branch
          %501 = sbr.rel (%p499) target = $region80
        $region79: #{tpu_custom_call.1} parent=63 // pred_region
          %502 = dma.done [#allocation13], 512
        $region80: #{tpu_custom_call.1} parent=63 // pred_fallthru
          _
        // Predicated region
        $region81: #{tpu_custom_call.1} parent=63 // pred_check
          %p503 = pneg %p194
        $region82: #{tpu_custom_call.1} parent=63 // pred_check_branch
          %505 = sbr.rel (%p503) target = $region84
        $region83: #{tpu_custom_call.1} parent=63 // pred_region
          %506 = dma.done [#allocation13], 512
        $region84: #{tpu_custom_call.1} parent=63 // pred_fallthru
          _
        // Predicated region
        $region85: #{tpu_custom_call.1} parent=63 // pred_check
          %p507 = pneg %p236
        $region86: #{tpu_custom_call.1} parent=63 // pred_check_branch
          %509 = sbr.rel (%p507) target = $region88
        $region87: #{tpu_custom_call.1} parent=63 // pred_region
          %510 = dma.done [#allocation16], 512
        $region88: #{tpu_custom_call.1} parent=63 // pred_fallthru
          _
        // Predicated region
        $region89: #{tpu_custom_call.1} parent=63 // pred_check
          %p511 = pneg %p257
        $region90: #{tpu_custom_call.1} parent=63 // pred_check_branch
          %513 = sbr.rel (%p511) target = $region92
        $region91: #{tpu_custom_call.1} parent=63 // pred_region
          %514 = dma.done [#allocation16], 16
        $region92: #{tpu_custom_call.1} parent=63 // pred_fallthru
          _
        %s515 = sand.u32 %s62, 1
        %s516 = scalar_lea.sflag [#allocation7], %s515
        %s517 = sand.u32 %s62, 1
        %s518 = smul.addr %s517, 8
        %s519 = scalar_lea.vmem [#allocation6], %s518
        %p520 = pneg %p75
        %p521 = pneg %p72
        %s522 = sand.u32 %s33, 1
        %s523 = scalar_lea.sflag [#allocation10], %s522
        %s524 = sand.u32 %s90, 1
        %s525 = smul.addr %s524, 8
        %s526 = scalar_lea.vmem [#allocation9], %s525
        %p527 = pneg %p103
        %p528 = pneg %p100
        %s529 = sand.u32 %s33, 1
        %s530 = scalar_lea.sflag [#allocation10], %s529
        %s531 = sand.u32 %s118, 1
        %s532 = smul.addr %s531, 8
        %s533 = scalar_lea.vmem [#allocation11], %s532
        %p534 = pneg %p131
        %p535 = pneg %p128
        %p536 = pneg %p152
        %p537 = pneg %p149
        %p538 = pneg %p173
        %p539 = pneg %p170
        %p540 = pneg %p194
        %p541 = pneg %p191
        %p542 = pneg %p215
        %p543 = pneg %p212
        %p544 = pneg %p236
        %p545 = pneg %p233
        %p546 = pneg %p257
        %p547 = pneg %p254
        %p548 = pneg %p278
        %p549 = pneg %p275
        %p550 = pneg %p299
        %p551 = pneg %p296
        %p552 = pneg %p327
        %p553 = pneg %p324
        %s554 = sand.u32 %s314, 1
        %s555 = scalar_lea.sflag [#allocation8], %s554
        %s556 = sand.u32 %s314, 1
        %s557 = smul.addr %s556, 8
        %s558 = scalar_lea.vmem [#allocation18], %s557
        %p559 = scmp.eq.s32.totalorder %s40, 0
        // Predicated region
        $region93: #{tpu_custom_call.1} parent=63 // pred_check
          %p560 = pneg %p559
        $region94: #{tpu_custom_call.1} parent=63 // pred_check_branch
          %562 = sbr.rel (%p560) target = $region96
        $region95: #{tpu_custom_call.1} parent=63 // pred_region
          %v563 = vld [vmem:[%s476] sm:$0xff]
          %v564 = vld [vmem:[#allocation12] sm:$0xff]
          %v565 = vld [vmem:[#allocation12 + $0x8] sm:$0xff]
          %v566 = vld [vmem:[#allocation12 + $0x10] sm:$0xff]
          %v567 = vld [vmem:[#allocation12 + $0x18] sm:$0xff]
          %v568 = vld [vmem:[%s4] sm:$0x1]
          %v570 = vlaneseq
          %v571 = vshrl.u32 %v570, 7
          %v572 = vsub.s32 0, %v571
          %v573 = vrot.slane %v568, %v572
          %vm575 = vcmask 261120
          %v577 = vsel %vm575, %v563, 0
          %579 = vmatprep.subr.mxu0 0.0
          %v580 = vand.u32 %v564, 4294901760
          %581 = vmatpush1.msra.mxu0 %v580
          %582 = vmatprep.subr.mxu0 0.0
          %v583 = vand.u32 %v565, 4294901760
          %584 = vmatpush1.msra.mxu0 %v583
          %585 = vmatprep.subr.mxu0 0.0
          %v586 = vand.u32 %v566, 4294901760
          %587 = vmatpush1.msra.mxu0 %v586
          %588 = vmatprep.subr.mxu0 0.0
          %v589 = vand.u32 %v567, 4294901760
          %590 = vmatpush1.msra.mxu0 %v589
          %591 = vmatprep.subr.mxu0 0.0
          %592 = vmatpush1.msra.mxu0 0.0
          %593 = vmatprep.subr.mxu0 0.0
          %594 = vmatpush1.msra.mxu0 0.0
          %595 = vmatprep.subr.mxu0 0.0
          %596 = vmatpush1.msra.mxu0 0.0
          %597 = vmatprep.subr.mxu0 0.0
          %598 = vmatpush1.msra.mxu0 0.0
          %599 = vmatprep.subr.mxu0 0.0
          %600 = vmatpush1.msra.mxu0 0.0
          %601 = vmatprep.subr.mxu0 0.0
          %602 = vmatpush1.msra.mxu0 0.0
          %603 = vmatprep.subr.mxu0 0.0
          %604 = vmatpush1.msra.mxu0 0.0
          %605 = vmatprep.subr.mxu0 0.0
          %606 = vmatpush1.msra.mxu0 0.0
          %607 = vmatprep.subr.mxu0 0.0
          %608 = vmatpush1.msra.mxu0 0.0
          %609 = vmatprep.subr.mxu0 0.0
          %610 = vmatpush1.msra.mxu0 0.0
          %611 = vmatprep.subr.mxu0 0.0
          %612 = vmatpush1.msra.mxu0 0.0
          %613 = vmatprep.subr.mxu0 0.0
          %614 = vmatpush1.msra.mxu0 0.0
          %615 = vmatprep.subr.mxu0 0.0
          %616 = vmatpush1.msra.mxu0 0.0
          %617 = vmatprep.subr.mxu0 0.0
          %618 = vmatpush1.msra.mxu0 0.0
          %619 = vmatprep.subr.mxu0 0.0
          %620 = vmatpush1.msra.mxu0 0.0
          %621 = vmatprep.subr.mxu0 0.0
          %622 = vmatpush1.msra.mxu0 0.0
          %623 = vmatprep.subr.mxu0 0.0
          %624 = vmatpush1.msra.mxu0 0.0
          %625 = vmatprep.subr.mxu0 0.0
          %626 = vmatpush1.msra.mxu0 0.0
          %627 = vmatprep.subr.mxu0 0.0
          %628 = vmatpush1.msra.mxu0 0.0
          %629 = vmatprep.subr.mxu0 0.0
          %630 = vmatpush1.msra.mxu0 0.0
          %631 = vmatprep.subr.mxu0 0.0
          %632 = vmatpush1.msra.mxu0 0.0
          %633 = vmatprep.subr.mxu0 0.0
          %634 = vmatpush1.msra.mxu0 0.0
          %635 = vmatprep.subr.mxu0 0.0
          %636 = vmatpush1.msra.mxu0 0.0
          %637 = vmatprep.subr.mxu0 0.0
          %638 = vmatpush1.msra.mxu0 0.0
          %639 = vmatprep.subr.mxu0 0.0
          %640 = vmatpush1.msra.mxu0 0.0
          %641 = vmatprep.subr.mxu0 0.0
          %642 = vmatpush1.msra.mxu0 0.0
          %643 = vmatprep.subr.mxu0 0.0
          %644 = vmatpush1.msra.mxu0 0.0
          %645 = vmatprep.subr.mxu0 0.0
          %646 = vmatpush1.msra.mxu0 0.0
          %647 = vmatprep.mubr.f32.mxu0 0.0
          %v648 = vand.u32 %v577, 4294901760
          %v649 = vsub.f32 %v577, %v648
          %v650 = vand.u32 %v649, 4294901760
          %v651 = vsub.f32 %v649, %v650
          %v652 = vand.u32 %v651, 4294901760
          %653 = vmatmul.mubr.f32.gmra.mrb[0].mxu0 %v652
          %v654 = vpop.f32.mrb[0].mxu0
          %v655 = vadd.f32 %v573, %v654
          %v656 = vpop.f32.mrb[0].mxu0
          %657 = vdwg.mxu0
          %658 = vmatprep.subr.mxu0 0.0
          %v659 = vand.u32 %v564, 4294901760
          %v660 = vsub.f32 %v564, %v659
          %v661 = vand.u32 %v660, 4294901760
          %v662 = vsub.f32 %v660, %v661
          %v663 = vand.u32 %v662, 4294901760
          %664 = vmatpush1.msra.mxu0 %v663
          %665 = vmatprep.subr.mxu0 0.0
          %v666 = vand.u32 %v565, 4294901760
          %v667 = vsub.f32 %v565, %v666
          %v668 = vand.u32 %v667, 4294901760
          %v669 = vsub.f32 %v667, %v668
          %v670 = vand.u32 %v669, 4294901760
          %671 = vmatpush1.msra.mxu0 %v670
          %672 = vmatprep.subr.mxu0 0.0
          %v673 = vand.u32 %v566, 4294901760
          %v674 = vsub.f32 %v566, %v673
          %v675 = vand.u32 %v674, 4294901760
          %v676 = vsub.f32 %v674, %v675
          %v677 = vand.u32 %v676, 4294901760
          %678 = vmatpush1.msra.mxu0 %v677
          %679 = vmatprep.subr.mxu0 0.0
          %v680 = vand.u32 %v567, 4294901760
          %v681 = vsub.f32 %v567, %v680
          %v682 = vand.u32 %v681, 4294901760
          %v683 = vsub.f32 %v681, %v682
          %v684 = vand.u32 %v683, 4294901760
          %685 = vmatpush1.msra.mxu0 %v684
          %686 = vmatprep.subr.mxu0 0.0
          %687 = vmatpush1.msra.mxu0 0.0
          %688 = vmatprep.subr.mxu0 0.0
          %689 = vmatpush1.msra.mxu0 0.0
          %690 = vmatprep.subr.mxu0 0.0
          %691 = vmatpush1.msra.mxu0 0.0
          %692 = vmatprep.subr.mxu0 0.0
          %693 = vmatpush1.msra.mxu0 0.0
          %694 = vmatprep.subr.mxu0 0.0
          %695 = vmatpush1.msra.mxu0 0.0
          %696 = vmatprep.subr.mxu0 0.0
          %697 = vmatpush1.msra.mxu0 0.0
          %698 = vmatprep.subr.mxu0 0.0
          %699 = vmatpush1.msra.mxu0 0.0
          %700 = vmatprep.subr.mxu0 0.0
          %701 = vmatpush1.msra.mxu0 0.0
          %702 = vmatprep.subr.mxu0 0.0
          %703 = vmatpush1.msra.mxu0 0.0
          %704 = vmatprep.subr.mxu0 0.0
          %705 = vmatpush1.msra.mxu0 0.0
          %706 = vmatprep.subr.mxu0 0.0
          %707 = vmatpush1.msra.mxu0 0.0
          %708 = vmatprep.subr.mxu0 0.0
          %709 = vmatpush1.msra.mxu0 0.0
          %710 = vmatprep.subr.mxu0 0.0
          %711 = vmatpush1.msra.mxu0 0.0
          %712 = vmatprep.subr.mxu0 0.0
          %713 = vmatpush1.msra.mxu0 0.0
          %714 = vmatprep.subr.mxu0 0.0
          %715 = vmatpush1.msra.mxu0 0.0
          %716 = vmatprep.subr.mxu0 0.0
          %717 = vmatpush1.msra.mxu0 0.0
          %718 = vmatprep.subr.mxu0 0.0
          %719 = vmatpush1.msra.mxu0 0.0
          %720 = vmatprep.subr.mxu0 0.0
          %721 = vmatpush1.msra.mxu0 0.0
          %722 = vmatprep.subr.mxu0 0.0
          %723 = vmatpush1.msra.mxu0 0.0
          %724 = vmatprep.subr.mxu0 0.0
          %725 = vmatpush1.msra.mxu0 0.0
          %726 = vmatprep.subr.mxu0 0.0
          %727 = vmatpush1.msra.mxu0 0.0
          %728 = vmatprep.subr.mxu0 0.0
          %729 = vmatpush1.msra.mxu0 0.0
          %730 = vmatprep.subr.mxu0 0.0
          %731 = vmatpush1.msra.mxu0 0.0
          %732 = vmatprep.subr.mxu0 0.0
          %733 = vmatpush1.msra.mxu0 0.0
          %734 = vmatprep.subr.mxu0 0.0
          %735 = vmatpush1.msra.mxu0 0.0
          %736 = vmatprep.subr.mxu0 0.0
          %737 = vmatpush1.msra.mxu0 0.0
          %738 = vmatprep.subr.mxu0 0.0
          %739 = vmatpush1.msra.mxu0 0.0
          %740 = vmatprep.subr.mxu0 0.0
          %741 = vmatpush1.msra.mxu0 0.0
          %742 = vmatprep.mubr.f32.mxu0 0.0
          %v743 = vand.u32 %v577, 4294901760
          %744 = vmatmul.mubr.f32.gmra.mrb[0].mxu0 %v743
          %v745 = vpop.f32.mrb[0].mxu0
          %v746 = vadd.f32 %v655, %v745
          %v747 = vpop.f32.mrb[0].mxu0
          %748 = vdwg.mxu0
          %749 = vmatprep.subr.mxu0 0.0
          %v750 = vand.u32 %v564, 4294901760
          %v751 = vsub.f32 %v564, %v750
          %752 = vmatpush1.msra.mxu0 %v751
          %753 = vmatprep.subr.mxu0 0.0
          %v754 = vand.u32 %v565, 4294901760
          %v755 = vsub.f32 %v565, %v754
          %756 = vmatpush1.msra.mxu0 %v755
          %757 = vmatprep.subr.mxu0 0.0
          %v758 = vand.u32 %v566, 4294901760
          %v759 = vsub.f32 %v566, %v758
          %760 = vmatpush1.msra.mxu0 %v759
          %761 = vmatprep.subr.mxu0 0.0
          %v762 = vand.u32 %v567, 4294901760
          %v763 = vsub.f32 %v567, %v762
          %764 = vmatpush1.msra.mxu0 %v763
          %765 = vmatprep.subr.mxu0 0.0
          %766 = vmatpush1.msra.mxu0 0.0
          %767 = vmatprep.subr.mxu0 0.0
          %768 = vmatpush1.msra.mxu0 0.0
          %769 = vmatprep.subr.mxu0 0.0
          %770 = vmatpush1.msra.mxu0 0.0
          %771 = vmatprep.subr.mxu0 0.0
          %772 = vmatpush1.msra.mxu0 0.0
          %773 = vmatprep.subr.mxu0 0.0
          %774 = vmatpush1.msra.mxu0 0.0
          %775 = vmatprep.subr.mxu0 0.0
          %776 = vmatpush1.msra.mxu0 0.0
          %777 = vmatprep.subr.mxu0 0.0
          %778 = vmatpush1.msra.mxu0 0.0
          %779 = vmatprep.subr.mxu0 0.0
          %780 = vmatpush1.msra.mxu0 0.0
          %781 = vmatprep.subr.mxu0 0.0
          %782 = vmatpush1.msra.mxu0 0.0
          %783 = vmatprep.subr.mxu0 0.0
          %784 = vmatpush1.msra.mxu0 0.0
          %785 = vmatprep.subr.mxu0 0.0
          %786 = vmatpush1.msra.mxu0 0.0
          %787 = vmatprep.subr.mxu0 0.0
          %788 = vmatpush1.msra.mxu0 0.0
          %789 = vmatprep.subr.mxu0 0.0
          %790 = vmatpush1.msra.mxu0 0.0
          %791 = vmatprep.subr.mxu0 0.0
          %792 = vmatpush1.msra.mxu0 0.0
          %793 = vmatprep.subr.mxu0 0.0
          %794 = vmatpush1.msra.mxu0 0.0
          %795 = vmatprep.subr.mxu0 0.0
          %796 = vmatpush1.msra.mxu0 0.0
          %797 = vmatprep.subr.mxu0 0.0
          %798 = vmatpush1.msra.mxu0 0.0
          %799 = vmatprep.subr.mxu0 0.0
          %800 = vmatpush1.msra.mxu0 0.0
          %801 = vmatprep.subr.mxu0 0.0
          %802 = vmatpush1.msra.mxu0 0.0
          %803 = vmatprep.subr.mxu0 0.0
          %804 = vmatpush1.msra.mxu0 0.0
          %805 = vmatprep.subr.mxu0 0.0
          %806 = vmatpush1.msra.mxu0 0.0
          %807 = vmatprep.subr.mxu0 0.0
          %808 = vmatpush1.msra.mxu0 0.0
          %809 = vmatprep.subr.mxu0 0.0
          %810 = vmatpush1.msra.mxu0 0.0
          %811 = vmatprep.subr.mxu0 0.0
          %812 = vmatpush1.msra.mxu0 0.0
          %813 = vmatprep.subr.mxu0 0.0
          %814 = vmatpush1.msra.mxu0 0.0
          %815 = vmatprep.subr.mxu0 0.0
          %816 = vmatpush1.msra.mxu0 0.0
          %817 = vmatprep.subr.mxu0 0.0
          %818 = vmatpush1.msra.mxu0 0.0
          %819 = vmatprep.subr.mxu0 0.0
          %820 = vmatpush1.msra.mxu0 0.0
          %821 = vmatprep.mubr.f32.mxu0 0.0
          %v822 = vand.u32 %v577, 4294901760
          %v823 = vsub.f32 %v577, %v822
          %824 = vmatmul.mubr.f32.gmra.mrb[0].mxu0 %v823
          %v825 = vpop.f32.mrb[0].mxu0
          %v826 = vadd.f32 %v746, %v825
          %v827 = vpop.f32.mrb[0].mxu0
          %828 = vdwg.mxu0
          %829 = vmatprep.subr.mxu0 0.0
          %v830 = vand.u32 %v564, 4294901760
          %831 = vmatpush1.msra.mxu0 %v830
          %832 = vmatprep.subr.mxu0 0.0
          %v833 = vand.u32 %v565, 4294901760
          %834 = vmatpush1.msra.mxu0 %v833
          %835 = vmatprep.subr.mxu0 0.0
          %v836 = vand.u32 %v566, 4294901760
          %837 = vmatpush1.msra.mxu0 %v836
          %838 = vmatprep.subr.mxu0 0.0
          %v839 = vand.u32 %v567, 4294901760
          %840 = vmatpush1.msra.mxu0 %v839
          %841 = vmatprep.subr.mxu0 0.0
          %842 = vmatpush1.msra.mxu0 0.0
          %843 = vmatprep.subr.mxu0 0.0
          %844 = vmatpush1.msra.mxu0 0.0
          %845 = vmatprep.subr.mxu0 0.0
          %846 = vmatpush1.msra.mxu0 0.0
          %847 = vmatprep.subr.mxu0 0.0
          %848 = vmatpush1.msra.mxu0 0.0
          %849 = vmatprep.subr.mxu0 0.0
          %850 = vmatpush1.msra.mxu0 0.0
          %851 = vmatprep.subr.mxu0 0.0
          %852 = vmatpush1.msra.mxu0 0.0
          %853 = vmatprep.subr.mxu0 0.0
          %854 = vmatpush1.msra.mxu0 0.0
          %855 = vmatprep.subr.mxu0 0.0
          %856 = vmatpush1.msra.mxu0 0.0
          %857 = vmatprep.subr.mxu0 0.0
          %858 = vmatpush1.msra.mxu0 0.0
          %859 = vmatprep.subr.mxu0 0.0
          %860 = vmatpush1.msra.mxu0 0.0
          %861 = vmatprep.subr.mxu0 0.0
          %862 = vmatpush1.msra.mxu0 0.0
          %863 = vmatprep.subr.mxu0 0.0
          %864 = vmatpush1.msra.mxu0 0.0
          %865 = vmatprep.subr.mxu0 0.0
          %866 = vmatpush1.msra.mxu0 0.0
          %867 = vmatprep.subr.mxu0 0.0
          %868 = vmatpush1.msra.mxu0 0.0
          %869 = vmatprep.subr.mxu0 0.0
          %870 = vmatpush1.msra.mxu0 0.0
          %871 = vmatprep.subr.mxu0 0.0
          %872 = vmatpush1.msra.mxu0 0.0
          %873 = vmatprep.subr.mxu0 0.0
          %874 = vmatpush1.msra.mxu0 0.0
          %875 = vmatprep.subr.mxu0 0.0
          %876 = vmatpush1.msra.mxu0 0.0
          %877 = vmatprep.subr.mxu0 0.0
          %878 = vmatpush1.msra.mxu0 0.0
          %879 = vmatprep.subr.mxu0 0.0
          %880 = vmatpush1.msra.mxu0 0.0
          %881 = vmatprep.subr.mxu0 0.0
          %882 = vmatpush1.msra.mxu0 0.0
          %883 = vmatprep.subr.mxu0 0.0
          %884 = vmatpush1.msra.mxu0 0.0
          %885 = vmatprep.subr.mxu0 0.0
          %886 = vmatpush1.msra.mxu0 0.0
          %887 = vmatprep.subr.mxu0 0.0
          %888 = vmatpush1.msra.mxu0 0.0
          %889 = vmatprep.subr.mxu0 0.0
          %890 = vmatpush1.msra.mxu0 0.0
          %891 = vmatprep.subr.mxu0 0.0
          %892 = vmatpush1.msra.mxu0 0.0
          %893 = vmatprep.subr.mxu0 0.0
          %894 = vmatpush1.msra.mxu0 0.0
          %895 = vmatprep.subr.mxu0 0.0
          %896 = vmatpush1.msra.mxu0 0.0
          %897 = vmatprep.mubr.f32.mxu0 0.0
          %v898 = vand.u32 %v577, 4294901760
          %v899 = vsub.f32 %v577, %v898
          %v900 = vand.u32 %v899, 4294901760
          %901 = vmatmul.mubr.f32.gmra.mrb[0].mxu0 %v900
          %v902 = vpop.f32.mrb[0].mxu0
          %v903 = vadd.f32 %v826, %v902
          %v904 = vpop.f32.mrb[0].mxu0
          %905 = vdwg.mxu0
          %906 = vmatprep.subr.mxu0 0.0
          %v907 = vand.u32 %v564, 4294901760
          %v908 = vsub.f32 %v564, %v907
          %v909 = vand.u32 %v908, 4294901760
          %910 = vmatpush1.msra.mxu0 %v909
          %911 = vmatprep.subr.mxu0 0.0
          %v912 = vand.u32 %v565, 4294901760
          %v913 = vsub.f32 %v565, %v912
          %v914 = vand.u32 %v913, 4294901760
          %915 = vmatpush1.msra.mxu0 %v914
          %916 = vmatprep.subr.mxu0 0.0
          %v917 = vand.u32 %v566, 4294901760
          %v918 = vsub.f32 %v566, %v917
          %v919 = vand.u32 %v918, 4294901760
          %920 = vmatpush1.msra.mxu0 %v919
          %921 = vmatprep.subr.mxu0 0.0
          %v922 = vand.u32 %v567, 4294901760
          %v923 = vsub.f32 %v567, %v922
          %v924 = vand.u32 %v923, 4294901760
          %925 = vmatpush1.msra.mxu0 %v924
          %926 = vmatprep.subr.mxu0 0.0
          %927 = vmatpush1.msra.mxu0 0.0
          %928 = vmatprep.subr.mxu0 0.0
          %929 = vmatpush1.msra.mxu0 0.0
          %930 = vmatprep.subr.mxu0 0.0
          %931 = vmatpush1.msra.mxu0 0.0
          %932 = vmatprep.subr.mxu0 0.0
          %933 = vmatpush1.msra.mxu0 0.0
          %934 = vmatprep.subr.mxu0 0.0
          %935 = vmatpush1.msra.mxu0 0.0
          %936 = vmatprep.subr.mxu0 0.0
          %937 = vmatpush1.msra.mxu0 0.0
          %938 = vmatprep.subr.mxu0 0.0
          %939 = vmatpush1.msra.mxu0 0.0
          %940 = vmatprep.subr.mxu0 0.0
          %941 = vmatpush1.msra.mxu0 0.0
          %942 = vmatprep.subr.mxu0 0.0
          %943 = vmatpush1.msra.mxu0 0.0
          %944 = vmatprep.subr.mxu0 0.0
          %945 = vmatpush1.msra.mxu0 0.0
          %946 = vmatprep.subr.mxu0 0.0
          %947 = vmatpush1.msra.mxu0 0.0
          %948 = vmatprep.subr.mxu0 0.0
          %949 = vmatpush1.msra.mxu0 0.0
          %950 = vmatprep.subr.mxu0 0.0
          %951 = vmatpush1.msra.mxu0 0.0
          %952 = vmatprep.subr.mxu0 0.0
          %953 = vmatpush1.msra.mxu0 0.0
          %954 = vmatprep.subr.mxu0 0.0
          %955 = vmatpush1.msra.mxu0 0.0
          %956 = vmatprep.subr.mxu0 0.0
          %957 = vmatpush1.msra.mxu0 0.0
          %958 = vmatprep.subr.mxu0 0.0
          %959 = vmatpush1.msra.mxu0 0.0
          %960 = vmatprep.subr.mxu0 0.0
          %961 = vmatpush1.msra.mxu0 0.0
          %962 = vmatprep.subr.mxu0 0.0
          %963 = vmatpush1.msra.mxu0 0.0
          %964 = vmatprep.subr.mxu0 0.0
          %965 = vmatpush1.msra.mxu0 0.0
          %966 = vmatprep.subr.mxu0 0.0
          %967 = vmatpush1.msra.mxu0 0.0
          %968 = vmatprep.subr.mxu0 0.0
          %969 = vmatpush1.msra.mxu0 0.0
          %970 = vmatprep.subr.mxu0 0.0
          %971 = vmatpush1.msra.mxu0 0.0
          %972 = vmatprep.subr.mxu0 0.0
          %973 = vmatpush1.msra.mxu0 0.0
          %974 = vmatprep.subr.mxu0 0.0
          %975 = vmatpush1.msra.mxu0 0.0
          %976 = vmatprep.subr.mxu0 0.0
          %977 = vmatpush1.msra.mxu0 0.0
          %978 = vmatprep.subr.mxu0 0.0
          %979 = vmatpush1.msra.mxu0 0.0
          %980 = vmatprep.subr.mxu0 0.0
          %981 = vmatpush1.msra.mxu0 0.0
          %982 = vmatprep.mubr.f32.mxu0 0.0
          %v983 = vand.u32 %v577, 4294901760
          %984 = vmatmul.mubr.f32.gmra.mrb[0].mxu0 %v983
          %v985 = vpop.f32.mrb[0].mxu0
          %v986 = vadd.f32 %v903, %v985
          %v987 = vpop.f32.mrb[0].mxu0
          %988 = vdwg.mxu0
          %989 = vmatprep.subr.mxu0 0.0
          %v990 = vand.u32 %v564, 4294901760
          %991 = vmatpush1.msra.mxu0 %v990
          %992 = vmatprep.subr.mxu0 0.0
          %v993 = vand.u32 %v565, 4294901760
          %994 = vmatpush1.msra.mxu0 %v993
          %995 = vmatprep.subr.mxu0 0.0
          %v996 = vand.u32 %v566, 4294901760
          %997 = vmatpush1.msra.mxu0 %v996
          %998 = vmatprep.subr.mxu0 0.0
          %v999 = vand.u32 %v567, 4294901760
          %1000 = vmatpush1.msra.mxu0 %v999
          %1001 = vmatprep.subr.mxu0 0.0
          %1002 = vmatpush1.msra.mxu0 0.0
          %1003 = vmatprep.subr.mxu0 0.0
          %1004 = vmatpush1.msra.mxu0 0.0
          %1005 = vmatprep.subr.mxu0 0.0
          %1006 = vmatpush1.msra.mxu0 0.0
          %1007 = vmatprep.subr.mxu0 0.0
          %1008 = vmatpush1.msra.mxu0 0.0
          %1009 = vmatprep.subr.mxu0 0.0
          %1010 = vmatpush1.msra.mxu0 0.0
          %1011 = vmatprep.subr.mxu0 0.0
          %1012 = vmatpush1.msra.mxu0 0.0
          %1013 = vmatprep.subr.mxu0 0.0
          %1014 = vmatpush1.msra.mxu0 0.0
          %1015 = vmatprep.subr.mxu0 0.0
          %1016 = vmatpush1.msra.mxu0 0.0
          %1017 = vmatprep.subr.mxu0 0.0
          %1018 = vmatpush1.msra.mxu0 0.0
          %1019 = vmatprep.subr.mxu0 0.0
          %1020 = vmatpush1.msra.mxu0 0.0
          %1021 = vmatprep.subr.mxu0 0.0
          %1022 = vmatpush1.msra.mxu0 0.0
          %1023 = vmatprep.subr.mxu0 0.0
          %1024 = vmatpush1.msra.mxu0 0.0
          %1025 = vmatprep.subr.mxu0 0.0
          %1026 = vmatpush1.msra.mxu0 0.0
          %1027 = vmatprep.subr.mxu0 0.0
          %1028 = vmatpush1.msra.mxu0 0.0
          %1029 = vmatprep.subr.mxu0 0.0
          %1030 = vmatpush1.msra.mxu0 0.0
          %1031 = vmatprep.subr.mxu0 0.0
          %1032 = vmatpush1.msra.mxu0 0.0
          %1033 = vmatprep.subr.mxu0 0.0
          %1034 = vmatpush1.msra.mxu0 0.0
          %1035 = vmatprep.subr.mxu0 0.0
          %1036 = vmatpush1.msra.mxu0 0.0
          %1037 = vmatprep.subr.mxu0 0.0
          %1038 = vmatpush1.msra.mxu0 0.0
          %1039 = vmatprep.subr.mxu0 0.0
          %1040 = vmatpush1.msra.mxu0 0.0
          %1041 = vmatprep.subr.mxu0 0.0
          %1042 = vmatpush1.msra.mxu0 0.0
          %1043 = vmatprep.subr.mxu0 0.0
          %1044 = vmatpush1.msra.mxu0 0.0
          %1045 = vmatprep.subr.mxu0 0.0
          %1046 = vmatpush1.msra.mxu0 0.0
          %1047 = vmatprep.subr.mxu0 0.0
          %1048 = vmatpush1.msra.mxu0 0.0
          %1049 = vmatprep.subr.mxu0 0.0
          %1050 = vmatpush1.msra.mxu0 0.0
          %1051 = vmatprep.subr.mxu0 0.0
          %1052 = vmatpush1.msra.mxu0 0.0
          %1053 = vmatprep.subr.mxu0 0.0
          %1054 = vmatpush1.msra.mxu0 0.0
          %1055 = vmatprep.subr.mxu0 0.0
          %1056 = vmatpush1.msra.mxu0 0.0
          %1057 = vmatprep.mubr.f32.mxu0 0.0
          %v1058 = vand.u32 %v577, 4294901760
          %1059 = vmatmul.mubr.f32.gmra.mrb[0].mxu0 %v1058
          %v1060 = vpop.f32.mrb[0].mxu0
          %v1061 = vadd.f32 %v986, %v1060
          %v1062 = vpop.f32.mrb[0].mxu0
          %1063 = vdwg.mxu0
          %1064 = vst.msk [vmem:[#allocation2] sm:$0xff] %vm575, %v1061
          %vm1065 = vcmask 7168
          %1066 = vst.msk [vmem:[#allocation3] sm:$0xff] %vm1065, -inf
          %1067 = vst.msk [vmem:[#allocation4] sm:$0xff] %vm1065, 0.0
          %1068 = vst.msk [vmem:[#allocation5] sm:$0xff] %vm575, 0.0
        $region96: #{tpu_custom_call.1} parent=63 // pred_fallthru
          _
        %v1069 = vld [vmem:[%s485] sm:$0xff]
        %v1070 = vld [vmem:[%s494] sm:$0xff]
        %v1071 = vld [vmem:[#allocation14] sm:$0xff]
        %v1072 = vld [vmem:[#allocation14 + $0x8] sm:$0xff]
        %v1073 = vld [vmem:[#allocation14 + $0x10] sm:$0xff]
        %v1074 = vld [vmem:[#allocation14 + $0x18] sm:$0xff]
        %v1075 = vld [vmem:[%s6] sm:$0x1]
        %v1077 = vlaneseq
        %v1078 = vshrl.u32 %v1077, 7
        %v1079 = vsub.s32 0, %v1078
        %v1080 = vrot.slane %v1075, %v1079
        %vm1082 = vcmask 261120
        %v1084 = vsel %vm1082, %v1069, 0
        %1086 = vmatprep.subr.mxu0 0.0
        %v1087 = vand.u32 %v1071, 4294901760
        %1088 = vmatpush1.msra.mxu0 %v1087
        %1089 = vmatprep.subr.mxu0 0.0
        %v1090 = vand.u32 %v1072, 4294901760
        %1091 = vmatpush1.msra.mxu0 %v1090
        %1092 = vmatprep.subr.mxu0 0.0
        %v1093 = vand.u32 %v1073, 4294901760
        %1094 = vmatpush1.msra.mxu0 %v1093
        %1095 = vmatprep.subr.mxu0 0.0
        %v1096 = vand.u32 %v1074, 4294901760
        %1097 = vmatpush1.msra.mxu0 %v1096
        %1098 = vmatprep.subr.mxu0 0.0
        %1099 = vmatpush1.msra.mxu0 0.0
        %1100 = vmatprep.subr.mxu0 0.0
        %1101 = vmatpush1.msra.mxu0 0.0
        %1102 = vmatprep.subr.mxu0 0.0
        %1103 = vmatpush1.msra.mxu0 0.0
        %1104 = vmatprep.subr.mxu0 0.0
        %1105 = vmatpush1.msra.mxu0 0.0
        %1106 = vmatprep.subr.mxu0 0.0
        %1107 = vmatpush1.msra.mxu0 0.0
        %1108 = vmatprep.subr.mxu0 0.0
        %1109 = vmatpush1.msra.mxu0 0.0
        %1110 = vmatprep.subr.mxu0 0.0
        %1111 = vmatpush1.msra.mxu0 0.0
        %1112 = vmatprep.subr.mxu0 0.0
        %1113 = vmatpush1.msra.mxu0 0.0
        %1114 = vmatprep.subr.mxu0 0.0
        %1115 = vmatpush1.msra.mxu0 0.0
        %1116 = vmatprep.subr.mxu0 0.0
        %1117 = vmatpush1.msra.mxu0 0.0
        %1118 = vmatprep.subr.mxu0 0.0
        %1119 = vmatpush1.msra.mxu0 0.0
        %1120 = vmatprep.subr.mxu0 0.0
        %1121 = vmatpush1.msra.mxu0 0.0
        %1122 = vmatprep.subr.mxu0 0.0
        %1123 = vmatpush1.msra.mxu0 0.0
        %1124 = vmatprep.subr.mxu0 0.0
        %1125 = vmatpush1.msra.mxu0 0.0
        %1126 = vmatprep.subr.mxu0 0.0
        %1127 = vmatpush1.msra.mxu0 0.0
        %1128 = vmatprep.subr.mxu0 0.0
        %1129 = vmatpush1.msra.mxu0 0.0
        %1130 = vmatprep.subr.mxu0 0.0
        %1131 = vmatpush1.msra.mxu0 0.0
        %1132 = vmatprep.subr.mxu0 0.0
        %1133 = vmatpush1.msra.mxu0 0.0
        %1134 = vmatprep.subr.mxu0 0.0
        %1135 = vmatpush1.msra.mxu0 0.0
        %1136 = vmatprep.subr.mxu0 0.0
        %1137 = vmatpush1.msra.mxu0 0.0
        %1138 = vmatprep.subr.mxu0 0.0
        %1139 = vmatpush1.msra.mxu0 0.0
        %1140 = vmatprep.subr.mxu0 0.0
        %1141 = vmatpush1.msra.mxu0 0.0
        %1142 = vmatprep.subr.mxu0 0.0
        %1143 = vmatpush1.msra.mxu0 0.0
        %1144 = vmatprep.subr.mxu0 0.0
        %1145 = vmatpush1.msra.mxu0 0.0
        %1146 = vmatprep.subr.mxu0 0.0
        %1147 = vmatpush1.msra.mxu0 0.0
        %1148 = vmatprep.subr.mxu0 0.0
        %1149 = vmatpush1.msra.mxu0 0.0
        %1150 = vmatprep.subr.mxu0 0.0
        %1151 = vmatpush1.msra.mxu0 0.0
        %1152 = vmatprep.subr.mxu0 0.0
        %1153 = vmatpush1.msra.mxu0 0.0
        %1154 = vmatprep.mubr.f32.mxu0 0.0
        %v1155 = vand.u32 %v1084, 4294901760
        %v1156 = vsub.f32 %v1084, %v1155
        %v1157 = vand.u32 %v1156, 4294901760
        %v1158 = vsub.f32 %v1156, %v1157
        %v1159 = vand.u32 %v1158, 4294901760
        %1160 = vmatmul.mubr.f32.gmra.mrb[0].mxu0 %v1159
        %v1161 = vpop.f32.mrb[0].mxu0
        %v1162 = vadd.f32 %v1080, %v1161
        %v1163 = vpop.f32.mrb[0].mxu0
        %1164 = vdwg.mxu0
        %1165 = vmatprep.subr.mxu0 0.0
        %v1166 = vand.u32 %v1071, 4294901760
        %v1167 = vsub.f32 %v1071, %v1166
        %v1168 = vand.u32 %v1167, 4294901760
        %v1169 = vsub.f32 %v1167, %v1168
        %v1170 = vand.u32 %v1169, 4294901760
        %1171 = vmatpush1.msra.mxu0 %v1170
        %1172 = vmatprep.subr.mxu0 0.0
        %v1173 = vand.u32 %v1072, 4294901760
        %v1174 = vsub.f32 %v1072, %v1173
        %v1175 = vand.u32 %v1174, 4294901760
        %v1176 = vsub.f32 %v1174, %v1175
        %v1177 = vand.u32 %v1176, 4294901760
        %1178 = vmatpush1.msra.mxu0 %v1177
        %1179 = vmatprep.subr.mxu0 0.0
        %v1180 = vand.u32 %v1073, 4294901760
        %v1181 = vsub.f32 %v1073, %v1180
        %v1182 = vand.u32 %v1181, 4294901760
        %v1183 = vsub.f32 %v1181, %v1182
        %v1184 = vand.u32 %v1183, 4294901760
        %1185 = vmatpush1.msra.mxu0 %v1184
        %1186 = vmatprep.subr.mxu0 0.0
        %v1187 = vand.u32 %v1074, 4294901760
        %v1188 = vsub.f32 %v1074, %v1187
        %v1189 = vand.u32 %v1188, 4294901760
        %v1190 = vsub.f32 %v1188, %v1189
        %v1191 = vand.u32 %v1190, 4294901760
        %1192 = vmatpush1.msra.mxu0 %v1191
        %1193 = vmatprep.subr.mxu0 0.0
        %1194 = vmatpush1.msra.mxu0 0.0
        %1195 = vmatprep.subr.mxu0 0.0
        %1196 = vmatpush1.msra.mxu0 0.0
        %1197 = vmatprep.subr.mxu0 0.0
        %1198 = vmatpush1.msra.mxu0 0.0
        %1199 = vmatprep.subr.mxu0 0.0
        %1200 = vmatpush1.msra.mxu0 0.0
        %1201 = vmatprep.subr.mxu0 0.0
        %1202 = vmatpush1.msra.mxu0 0.0
        %1203 = vmatprep.subr.mxu0 0.0
        %1204 = vmatpush1.msra.mxu0 0.0
        %1205 = vmatprep.subr.mxu0 0.0
        %1206 = vmatpush1.msra.mxu0 0.0
        %1207 = vmatprep.subr.mxu0 0.0
        %1208 = vmatpush1.msra.mxu0 0.0
        %1209 = vmatprep.subr.mxu0 0.0
        %1210 = vmatpush1.msra.mxu0 0.0
        %1211 = vmatprep.subr.mxu0 0.0
        %1212 = vmatpush1.msra.mxu0 0.0
        %1213 = vmatprep.subr.mxu0 0.0
        %1214 = vmatpush1.msra.mxu0 0.0
        %1215 = vmatprep.subr.mxu0 0.0
        %1216 = vmatpush1.msra.mxu0 0.0
        %1217 = vmatprep.subr.mxu0 0.0
        %1218 = vmatpush1.msra.mxu0 0.0
        %1219 = vmatprep.subr.mxu0 0.0
        %1220 = vmatpush1.msra.mxu0 0.0
        %1221 = vmatprep.subr.mxu0 0.0
        %1222 = vmatpush1.msra.mxu0 0.0
        %1223 = vmatprep.subr.mxu0 0.0
        %1224 = vmatpush1.msra.mxu0 0.0
        %1225 = vmatprep.subr.mxu0 0.0
        %1226 = vmatpush1.msra.mxu0 0.0
        %1227 = vmatprep.subr.mxu0 0.0
        %1228 = vmatpush1.msra.mxu0 0.0
        %1229 = vmatprep.subr.mxu0 0.0
        %1230 = vmatpush1.msra.mxu0 0.0
        %1231 = vmatprep.subr.mxu0 0.0
        %1232 = vmatpush1.msra.mxu0 0.0
        %1233 = vmatprep.subr.mxu0 0.0
        %1234 = vmatpush1.msra.mxu0 0.0
        %1235 = vmatprep.subr.mxu0 0.0
        %1236 = vmatpush1.msra.mxu0 0.0
        %1237 = vmatprep.subr.mxu0 0.0
        %1238 = vmatpush1.msra.mxu0 0.0
        %1239 = vmatprep.subr.mxu0 0.0
        %1240 = vmatpush1.msra.mxu0 0.0
        %1241 = vmatprep.subr.mxu0 0.0
        %1242 = vmatpush1.msra.mxu0 0.0
        %1243 = vmatprep.subr.mxu0 0.0
        %1244 = vmatpush1.msra.mxu0 0.0
        %1245 = vmatprep.subr.mxu0 0.0
        %1246 = vmatpush1.msra.mxu0 0.0
        %1247 = vmatprep.subr.mxu0 0.0
        %1248 = vmatpush1.msra.mxu0 0.0
        %1249 = vmatprep.mubr.f32.mxu0 0.0
        %v1250 = vand.u32 %v1084, 4294901760
        %1251 = vmatmul.mubr.f32.gmra.mrb[0].mxu0 %v1250
        %v1252 = vpop.f32.mrb[0].mxu0
        %v1253 = vadd.f32 %v1162, %v1252
        %v1254 = vpop.f32.mrb[0].mxu0
        %1255 = vdwg.mxu0
        %1256 = vmatprep.subr.mxu0 0.0
        %v1257 = vand.u32 %v1071, 4294901760
        %v1258 = vsub.f32 %v1071, %v1257
        %1259 = vmatpush1.msra.mxu0 %v1258
        %1260 = vmatprep.subr.mxu0 0.0
        %v1261 = vand.u32 %v1072, 4294901760
        %v1262 = vsub.f32 %v1072, %v1261
        %1263 = vmatpush1.msra.mxu0 %v1262
        %1264 = vmatprep.subr.mxu0 0.0
        %v1265 = vand.u32 %v1073, 4294901760
        %v1266 = vsub.f32 %v1073, %v1265
        %1267 = vmatpush1.msra.mxu0 %v1266
        %1268 = vmatprep.subr.mxu0 0.0
        %v1269 = vand.u32 %v1074, 4294901760
        %v1270 = vsub.f32 %v1074, %v1269
        %1271 = vmatpush1.msra.mxu0 %v1270
        %1272 = vmatprep.subr.mxu0 0.0
        %1273 = vmatpush1.msra.mxu0 0.0
        %1274 = vmatprep.subr.mxu0 0.0
        %1275 = vmatpush1.msra.mxu0 0.0
        %1276 = vmatprep.subr.mxu0 0.0
        %1277 = vmatpush1.msra.mxu0 0.0
        %1278 = vmatprep.subr.mxu0 0.0
        %1279 = vmatpush1.msra.mxu0 0.0
        %1280 = vmatprep.subr.mxu0 0.0
        %1281 = vmatpush1.msra.mxu0 0.0
        %1282 = vmatprep.subr.mxu0 0.0
        %1283 = vmatpush1.msra.mxu0 0.0
        %1284 = vmatprep.subr.mxu0 0.0
        %1285 = vmatpush1.msra.mxu0 0.0
        %1286 = vmatprep.subr.mxu0 0.0
        %1287 = vmatpush1.msra.mxu0 0.0
        %1288 = vmatprep.subr.mxu0 0.0
        %1289 = vmatpush1.msra.mxu0 0.0
        %1290 = vmatprep.subr.mxu0 0.0
        %1291 = vmatpush1.msra.mxu0 0.0
        %1292 = vmatprep.subr.mxu0 0.0
        %1293 = vmatpush1.msra.mxu0 0.0
        %1294 = vmatprep.subr.mxu0 0.0
        %1295 = vmatpush1.msra.mxu0 0.0
        %1296 = vmatprep.subr.mxu0 0.0
        %1297 = vmatpush1.msra.mxu0 0.0
        %1298 = vmatprep.subr.mxu0 0.0
        %1299 = vmatpush1.msra.mxu0 0.0
        %1300 = vmatprep.subr.mxu0 0.0
        %1301 = vmatpush1.msra.mxu0 0.0
        %1302 = vmatprep.subr.mxu0 0.0
        %1303 = vmatpush1.msra.mxu0 0.0
        %1304 = vmatprep.subr.mxu0 0.0
        %1305 = vmatpush1.msra.mxu0 0.0
        %1306 = vmatprep.subr.mxu0 0.0
        %1307 = vmatpush1.msra.mxu0 0.0
        %1308 = vmatprep.subr.mxu0 0.0
        %1309 = vmatpush1.msra.mxu0 0.0
        %1310 = vmatprep.subr.mxu0 0.0
        %1311 = vmatpush1.msra.mxu0 0.0
        %1312 = vmatprep.subr.mxu0 0.0
        %1313 = vmatpush1.msra.mxu0 0.0
        %1314 = vmatprep.subr.mxu0 0.0
        %1315 = vmatpush1.msra.mxu0 0.0
        %1316 = vmatprep.subr.mxu0 0.0
        %1317 = vmatpush1.msra.mxu0 0.0
        %1318 = vmatprep.subr.mxu0 0.0
        %1319 = vmatpush1.msra.mxu0 0.0
        %1320 = vmatprep.subr.mxu0 0.0
        %1321 = vmatpush1.msra.mxu0 0.0
        %1322 = vmatprep.subr.mxu0 0.0
        %1323 = vmatpush1.msra.mxu0 0.0
        %1324 = vmatprep.subr.mxu0 0.0
        %1325 = vmatpush1.msra.mxu0 0.0
        %1326 = vmatprep.subr.mxu0 0.0
        %1327 = vmatpush1.msra.mxu0 0.0
        %1328 = vmatprep.mubr.f32.mxu0 0.0
        %v1329 = vand.u32 %v1084, 4294901760
        %v1330 = vsub.f32 %v1084, %v1329
        %1331 = vmatmul.mubr.f32.gmra.mrb[0].mxu0 %v1330
        %v1332 = vpop.f32.mrb[0].mxu0
        %v1333 = vadd.f32 %v1253, %v1332
        %v1334 = vpop.f32.mrb[0].mxu0
        %1335 = vdwg.mxu0
        %1336 = vmatprep.subr.mxu0 0.0
        %v1337 = vand.u32 %v1071, 4294901760
        %1338 = vmatpush1.msra.mxu0 %v1337
        %1339 = vmatprep.subr.mxu0 0.0
        %v1340 = vand.u32 %v1072, 4294901760
        %1341 = vmatpush1.msra.mxu0 %v1340
        %1342 = vmatprep.subr.mxu0 0.0
        %v1343 = vand.u32 %v1073, 4294901760
        %1344 = vmatpush1.msra.mxu0 %v1343
        %1345 = vmatprep.subr.mxu0 0.0
        %v1346 = vand.u32 %v1074, 4294901760
        %1347 = vmatpush1.msra.mxu0 %v1346
        %1348 = vmatprep.subr.mxu0 0.0
        %1349 = vmatpush1.msra.mxu0 0.0
        %1350 = vmatprep.subr.mxu0 0.0
        %1351 = vmatpush1.msra.mxu0 0.0
        %1352 = vmatprep.subr.mxu0 0.0
        %1353 = vmatpush1.msra.mxu0 0.0
        %1354 = vmatprep.subr.mxu0 0.0
        %1355 = vmatpush1.msra.mxu0 0.0
        %1356 = vmatprep.subr.mxu0 0.0
        %1357 = vmatpush1.msra.mxu0 0.0
        %1358 = vmatprep.subr.mxu0 0.0
        %1359 = vmatpush1.msra.mxu0 0.0
        %1360 = vmatprep.subr.mxu0 0.0
        %1361 = vmatpush1.msra.mxu0 0.0
        %1362 = vmatprep.subr.mxu0 0.0
        %1363 = vmatpush1.msra.mxu0 0.0
        %1364 = vmatprep.subr.mxu0 0.0
        %1365 = vmatpush1.msra.mxu0 0.0
        %1366 = vmatprep.subr.mxu0 0.0
        %1367 = vmatpush1.msra.mxu0 0.0
        %1368 = vmatprep.subr.mxu0 0.0
        %1369 = vmatpush1.msra.mxu0 0.0
        %1370 = vmatprep.subr.mxu0 0.0
        %1371 = vmatpush1.msra.mxu0 0.0
        %1372 = vmatprep.subr.mxu0 0.0
        %1373 = vmatpush1.msra.mxu0 0.0
        %1374 = vmatprep.subr.mxu0 0.0
        %1375 = vmatpush1.msra.mxu0 0.0
        %1376 = vmatprep.subr.mxu0 0.0
        %1377 = vmatpush1.msra.mxu0 0.0
        %1378 = vmatprep.subr.mxu0 0.0
        %1379 = vmatpush1.msra.mxu0 0.0
        %1380 = vmatprep.subr.mxu0 0.0
        %1381 = vmatpush1.msra.mxu0 0.0
        %1382 = vmatprep.subr.mxu0 0.0
        %1383 = vmatpush1.msra.mxu0 0.0
        %1384 = vmatprep.subr.mxu0 0.0
        %1385 = vmatpush1.msra.mxu0 0.0
        %1386 = vmatprep.subr.mxu0 0.0
        %1387 = vmatpush1.msra.mxu0 0.0
        %1388 = vmatprep.subr.mxu0 0.0
        %1389 = vmatpush1.msra.mxu0 0.0
        %1390 = vmatprep.subr.mxu0 0.0
        %1391 = vmatpush1.msra.mxu0 0.0
        %1392 = vmatprep.subr.mxu0 0.0
        %1393 = vmatpush1.msra.mxu0 0.0
        %1394 = vmatprep.subr.mxu0 0.0
        %1395 = vmatpush1.msra.mxu0 0.0
        %1396 = vmatprep.subr.mxu0 0.0
        %1397 = vmatpush1.msra.mxu0 0.0
        %1398 = vmatprep.subr.mxu0 0.0
        %1399 = vmatpush1.msra.mxu0 0.0
        %1400 = vmatprep.subr.mxu0 0.0
        %1401 = vmatpush1.msra.mxu0 0.0
        %1402 = vmatprep.subr.mxu0 0.0
        %1403 = vmatpush1.msra.mxu0 0.0
        %1404 = vmatprep.mubr.f32.mxu0 0.0
        %v1405 = vand.u32 %v1084, 4294901760
        %v1406 = vsub.f32 %v1084, %v1405
        %v1407 = vand.u32 %v1406, 4294901760
        %1408 = vmatmul.mubr.f32.gmra.mrb[0].mxu0 %v1407
        %v1409 = vpop.f32.mrb[0].mxu0
        %v1410 = vadd.f32 %v1333, %v1409
        %v1411 = vpop.f32.mrb[0].mxu0
        %1412 = vdwg.mxu0
        %1413 = vmatprep.subr.mxu0 0.0
        %v1414 = vand.u32 %v1071, 4294901760
        %v1415 = vsub.f32 %v1071, %v1414
        %v1416 = vand.u32 %v1415, 4294901760
        %1417 = vmatpush1.msra.mxu0 %v1416
        %1418 = vmatprep.subr.mxu0 0.0
        %v1419 = vand.u32 %v1072, 4294901760
        %v1420 = vsub.f32 %v1072, %v1419
        %v1421 = vand.u32 %v1420, 4294901760
        %1422 = vmatpush1.msra.mxu0 %v1421
        %1423 = vmatprep.subr.mxu0 0.0
        %v1424 = vand.u32 %v1073, 4294901760
        %v1425 = vsub.f32 %v1073, %v1424
        %v1426 = vand.u32 %v1425, 4294901760
        %1427 = vmatpush1.msra.mxu0 %v1426
        %1428 = vmatprep.subr.mxu0 0.0
        %v1429 = vand.u32 %v1074, 4294901760
        %v1430 = vsub.f32 %v1074, %v1429
        %v1431 = vand.u32 %v1430, 4294901760
        %1432 = vmatpush1.msra.mxu0 %v1431
        %1433 = vmatprep.subr.mxu0 0.0
        %1434 = vmatpush1.msra.mxu0 0.0
        %1435 = vmatprep.subr.mxu0 0.0
        %1436 = vmatpush1.msra.mxu0 0.0
        %1437 = vmatprep.subr.mxu0 0.0
        %1438 = vmatpush1.msra.mxu0 0.0
        %1439 = vmatprep.subr.mxu0 0.0
        %1440 = vmatpush1.msra.mxu0 0.0
        %1441 = vmatprep.subr.mxu0 0.0
        %1442 = vmatpush1.msra.mxu0 0.0
        %1443 = vmatprep.subr.mxu0 0.0
        %1444 = vmatpush1.msra.mxu0 0.0
        %1445 = vmatprep.subr.mxu0 0.0
        %1446 = vmatpush1.msra.mxu0 0.0
        %1447 = vmatprep.subr.mxu0 0.0
        %1448 = vmatpush1.msra.mxu0 0.0
        %1449 = vmatprep.subr.mxu0 0.0
        %1450 = vmatpush1.msra.mxu0 0.0
        %1451 = vmatprep.subr.mxu0 0.0
        %1452 = vmatpush1.msra.mxu0 0.0
        %1453 = vmatprep.subr.mxu0 0.0
        %1454 = vmatpush1.msra.mxu0 0.0
        %1455 = vmatprep.subr.mxu0 0.0
        %1456 = vmatpush1.msra.mxu0 0.0
        %1457 = vmatprep.subr.mxu0 0.0
        %1458 = vmatpush1.msra.mxu0 0.0
        %1459 = vmatprep.subr.mxu0 0.0
        %1460 = vmatpush1.msra.mxu0 0.0
        %1461 = vmatprep.subr.mxu0 0.0
        %1462 = vmatpush1.msra.mxu0 0.0
        %1463 = vmatprep.subr.mxu0 0.0
        %1464 = vmatpush1.msra.mxu0 0.0
        %1465 = vmatprep.subr.mxu0 0.0
        %1466 = vmatpush1.msra.mxu0 0.0
        %1467 = vmatprep.subr.mxu0 0.0
        %1468 = vmatpush1.msra.mxu0 0.0
        %1469 = vmatprep.subr.mxu0 0.0
        %1470 = vmatpush1.msra.mxu0 0.0
        %1471 = vmatprep.subr.mxu0 0.0
        %1472 = vmatpush1.msra.mxu0 0.0
        %1473 = vmatprep.subr.mxu0 0.0
        %1474 = vmatpush1.msra.mxu0 0.0
        %1475 = vmatprep.subr.mxu0 0.0
        %1476 = vmatpush1.msra.mxu0 0.0
        %1477 = vmatprep.subr.mxu0 0.0
        %1478 = vmatpush1.msra.mxu0 0.0
        %1479 = vmatprep.subr.mxu0 0.0
        %1480 = vmatpush1.msra.mxu0 0.0
        %1481 = vmatprep.subr.mxu0 0.0
        %1482 = vmatpush1.msra.mxu0 0.0
        %1483 = vmatprep.subr.mxu0 0.0
        %1484 = vmatpush1.msra.mxu0 0.0
        %1485 = vmatprep.subr.mxu0 0.0
        %1486 = vmatpush1.msra.mxu0 0.0
        %1487 = vmatprep.subr.mxu0 0.0
        %1488 = vmatpush1.msra.mxu0 0.0
        %1489 = vmatprep.mubr.f32.mxu0 0.0
        %v1490 = vand.u32 %v1084, 4294901760
        %1491 = vmatmul.mubr.f32.gmra.mrb[0].mxu0 %v1490
        %v1492 = vpop.f32.mrb[0].mxu0
        %v1493 = vadd.f32 %v1410, %v1492
        %v1494 = vpop.f32.mrb[0].mxu0
        %1495 = vdwg.mxu0
        %1496 = vmatprep.subr.mxu0 0.0
        %v1497 = vand.u32 %v1071, 4294901760
        %1498 = vmatpush1.msra.mxu0 %v1497
        %1499 = vmatprep.subr.mxu0 0.0
        %v1500 = vand.u32 %v1072, 4294901760
        %1501 = vmatpush1.msra.mxu0 %v1500
        %1502 = vmatprep.subr.mxu0 0.0
        %v1503 = vand.u32 %v1073, 4294901760
        %1504 = vmatpush1.msra.mxu0 %v1503
        %1505 = vmatprep.subr.mxu0 0.0
        %v1506 = vand.u32 %v1074, 4294901760
        %1507 = vmatpush1.msra.mxu0 %v1506
        %1508 = vmatprep.subr.mxu0 0.0
        %1509 = vmatpush1.msra.mxu0 0.0
        %1510 = vmatprep.subr.mxu0 0.0
        %1511 = vmatpush1.msra.mxu0 0.0
        %1512 = vmatprep.subr.mxu0 0.0
        %1513 = vmatpush1.msra.mxu0 0.0
        %1514 = vmatprep.subr.mxu0 0.0
        %1515 = vmatpush1.msra.mxu0 0.0
        %1516 = vmatprep.subr.mxu0 0.0
        %1517 = vmatpush1.msra.mxu0 0.0
        %1518 = vmatprep.subr.mxu0 0.0
        %1519 = vmatpush1.msra.mxu0 0.0
        %1520 = vmatprep.subr.mxu0 0.0
        %1521 = vmatpush1.msra.mxu0 0.0
        %1522 = vmatprep.subr.mxu0 0.0
        %1523 = vmatpush1.msra.mxu0 0.0
        %1524 = vmatprep.subr.mxu0 0.0
        %1525 = vmatpush1.msra.mxu0 0.0
        %1526 = vmatprep.subr.mxu0 0.0
        %1527 = vmatpush1.msra.mxu0 0.0
        %1528 = vmatprep.subr.mxu0 0.0
        %1529 = vmatpush1.msra.mxu0 0.0
        %1530 = vmatprep.subr.mxu0 0.0
        %1531 = vmatpush1.msra.mxu0 0.0
        %1532 = vmatprep.subr.mxu0 0.0
        %1533 = vmatpush1.msra.mxu0 0.0
        %1534 = vmatprep.subr.mxu0 0.0
        %1535 = vmatpush1.msra.mxu0 0.0
        %1536 = vmatprep.subr.mxu0 0.0
        %1537 = vmatpush1.msra.mxu0 0.0
        %1538 = vmatprep.subr.mxu0 0.0
        %1539 = vmatpush1.msra.mxu0 0.0
        %1540 = vmatprep.subr.mxu0 0.0
        %1541 = vmatpush1.msra.mxu0 0.0
        %1542 = vmatprep.subr.mxu0 0.0
        %1543 = vmatpush1.msra.mxu0 0.0
        %1544 = vmatprep.subr.mxu0 0.0
        %1545 = vmatpush1.msra.mxu0 0.0
        %1546 = vmatprep.subr.mxu0 0.0
        %1547 = vmatpush1.msra.mxu0 0.0
        %1548 = vmatprep.subr.mxu0 0.0
        %1549 = vmatpush1.msra.mxu0 0.0
        %1550 = vmatprep.subr.mxu0 0.0
        %1551 = vmatpush1.msra.mxu0 0.0
        %1552 = vmatprep.subr.mxu0 0.0
        %1553 = vmatpush1.msra.mxu0 0.0
        %1554 = vmatprep.subr.mxu0 0.0
        %1555 = vmatpush1.msra.mxu0 0.0
        %1556 = vmatprep.subr.mxu0 0.0
        %1557 = vmatpush1.msra.mxu0 0.0
        %1558 = vmatprep.subr.mxu0 0.0
        %1559 = vmatpush1.msra.mxu0 0.0
        %1560 = vmatprep.subr.mxu0 0.0
        %1561 = vmatpush1.msra.mxu0 0.0
        %1562 = vmatprep.subr.mxu0 0.0
        %1563 = vmatpush1.msra.mxu0 0.0
        %1564 = vmatprep.mubr.f32.mxu0 0.0
        %v1565 = vand.u32 %v1084, 4294901760
        %1566 = vmatmul.mubr.f32.gmra.mrb[0].mxu0 %v1565
        %v1567 = vpop.f32.mrb[0].mxu0
        %v1568 = vadd.f32 %v1493, %v1567
        %v1569 = vpop.f32.mrb[0].mxu0
        %1570 = vdwg.mxu0
        %v1571 = vld [vmem:[#allocation15] sm:$0xff]
        %v1572 = vld [vmem:[#allocation15 + $0x8] sm:$0xff]
        %v1573 = vld [vmem:[#allocation15 + $0x10] sm:$0xff]
        %v1574 = vld [vmem:[#allocation15 + $0x18] sm:$0xff]
        %v1575 = vld [vmem:[#allocation17] sm:$0x1]
        %v1577 = vlaneseq
        %v1578 = vshrl.u32 %v1577, 7
        %v1579 = vsub.s32 0, %v1578
        %v1580 = vrot.slane %v1575, %v1579
        %v1583 = vsel %vm1082, %v1070, 0
        %1585 = vmatprep.subr.mxu0 0.0
        %v1586 = vand.u32 %v1571, 4294901760
        %1587 = vmatpush1.msra.mxu0 %v1586
        %1588 = vmatprep.subr.mxu0 0.0
        %v1589 = vand.u32 %v1572, 4294901760
        %1590 = vmatpush1.msra.mxu0 %v1589
        %1591 = vmatprep.subr.mxu0 0.0
        %v1592 = vand.u32 %v1573, 4294901760
        %1593 = vmatpush1.msra.mxu0 %v1592
        %1594 = vmatprep.subr.mxu0 0.0
        %v1595 = vand.u32 %v1574, 4294901760
        %1596 = vmatpush1.msra.mxu0 %v1595
        %1597 = vmatprep.subr.mxu0 0.0
        %1598 = vmatpush1.msra.mxu0 0.0
        %1599 = vmatprep.subr.mxu0 0.0
        %1600 = vmatpush1.msra.mxu0 0.0
        %1601 = vmatprep.subr.mxu0 0.0
        %1602 = vmatpush1.msra.mxu0 0.0
        %1603 = vmatprep.subr.mxu0 0.0
        %1604 = vmatpush1.msra.mxu0 0.0
        %1605 = vmatprep.subr.mxu0 0.0
        %1606 = vmatpush1.msra.mxu0 0.0
        %1607 = vmatprep.subr.mxu0 0.0
        %1608 = vmatpush1.msra.mxu0 0.0
        %1609 = vmatprep.subr.mxu0 0.0
        %1610 = vmatpush1.msra.mxu0 0.0
        %1611 = vmatprep.subr.mxu0 0.0
        %1612 = vmatpush1.msra.mxu0 0.0
        %1613 = vmatprep.subr.mxu0 0.0
        %1614 = vmatpush1.msra.mxu0 0.0
        %1615 = vmatprep.subr.mxu0 0.0
        %1616 = vmatpush1.msra.mxu0 0.0
        %1617 = vmatprep.subr.mxu0 0.0
        %1618 = vmatpush1.msra.mxu0 0.0
        %1619 = vmatprep.subr.mxu0 0.0
        %1620 = vmatpush1.msra.mxu0 0.0
        %1621 = vmatprep.subr.mxu0 0.0
        %1622 = vmatpush1.msra.mxu0 0.0
        %1623 = vmatprep.subr.mxu0 0.0
        %1624 = vmatpush1.msra.mxu0 0.0
        %1625 = vmatprep.subr.mxu0 0.0
        %1626 = vmatpush1.msra.mxu0 0.0
        %1627 = vmatprep.subr.mxu0 0.0
        %1628 = vmatpush1.msra.mxu0 0.0
        %1629 = vmatprep.subr.mxu0 0.0
        %1630 = vmatpush1.msra.mxu0 0.0
        %1631 = vmatprep.subr.mxu0 0.0
        %1632 = vmatpush1.msra.mxu0 0.0
        %1633 = vmatprep.subr.mxu0 0.0
        %1634 = vmatpush1.msra.mxu0 0.0
        %1635 = vmatprep.subr.mxu0 0.0
        %1636 = vmatpush1.msra.mxu0 0.0
        %1637 = vmatprep.subr.mxu0 0.0
        %1638 = vmatpush1.msra.mxu0 0.0
        %1639 = vmatprep.subr.mxu0 0.0
        %1640 = vmatpush1.msra.mxu0 0.0
        %1641 = vmatprep.subr.mxu0 0.0
        %1642 = vmatpush1.msra.mxu0 0.0
        %1643 = vmatprep.subr.mxu0 0.0
        %1644 = vmatpush1.msra.mxu0 0.0
        %1645 = vmatprep.subr.mxu0 0.0
        %1646 = vmatpush1.msra.mxu0 0.0
        %1647 = vmatprep.subr.mxu0 0.0
        %1648 = vmatpush1.msra.mxu0 0.0
        %1649 = vmatprep.subr.mxu0 0.0
        %1650 = vmatpush1.msra.mxu0 0.0
        %1651 = vmatprep.subr.mxu0 0.0
        %1652 = vmatpush1.msra.mxu0 0.0
        %1653 = vmatprep.mubr.f32.mxu0 0.0
        %v1654 = vand.u32 %v1583, 4294901760
        %v1655 = vsub.f32 %v1583, %v1654
        %v1656 = vand.u32 %v1655, 4294901760
        %v1657 = vsub.f32 %v1655, %v1656
        %v1658 = vand.u32 %v1657, 4294901760
        %1659 = vmatmul.mubr.f32.gmra.mrb[0].mxu0 %v1658
        %v1660 = vpop.f32.mrb[0].mxu0
        %v1661 = vadd.f32 %v1580, %v1660
        %v1662 = vpop.f32.mrb[0].mxu0
        %1663 = vdwg.mxu0
        %1664 = vmatprep.subr.mxu0 0.0
        %v1665 = vand.u32 %v1571, 4294901760
        %v1666 = vsub.f32 %v1571, %v1665
        %v1667 = vand.u32 %v1666, 4294901760
        %v1668 = vsub.f32 %v1666, %v1667
        %v1669 = vand.u32 %v1668, 4294901760
        %1670 = vmatpush1.msra.mxu0 %v1669
        %1671 = vmatprep.subr.mxu0 0.0
        %v1672 = vand.u32 %v1572, 4294901760
        %v1673 = vsub.f32 %v1572, %v1672
        %v1674 = vand.u32 %v1673, 4294901760
        %v1675 = vsub.f32 %v1673, %v1674
        %v1676 = vand.u32 %v1675, 4294901760
        %1677 = vmatpush1.msra.mxu0 %v1676
        %1678 = vmatprep.subr.mxu0 0.0
        %v1679 = vand.u32 %v1573, 4294901760
        %v1680 = vsub.f32 %v1573, %v1679
        %v1681 = vand.u32 %v1680, 4294901760
        %v1682 = vsub.f32 %v1680, %v1681
        %v1683 = vand.u32 %v1682, 4294901760
        %1684 = vmatpush1.msra.mxu0 %v1683
        %1685 = vmatprep.subr.mxu0 0.0
        %v1686 = vand.u32 %v1574, 4294901760
        %v1687 = vsub.f32 %v1574, %v1686
        %v1688 = vand.u32 %v1687, 4294901760
        %v1689 = vsub.f32 %v1687, %v1688
        %v1690 = vand.u32 %v1689, 4294901760
        %1691 = vmatpush1.msra.mxu0 %v1690
        %1692 = vmatprep.subr.mxu0 0.0
        %1693 = vmatpush1.msra.mxu0 0.0
        %1694 = vmatprep.subr.mxu0 0.0
        %1695 = vmatpush1.msra.mxu0 0.0
        %1696 = vmatprep.subr.mxu0 0.0
        %1697 = vmatpush1.msra.mxu0 0.0
        %1698 = vmatprep.subr.mxu0 0.0
        %1699 = vmatpush1.msra.mxu0 0.0
        %1700 = vmatprep.subr.mxu0 0.0
        %1701 = vmatpush1.msra.mxu0 0.0
        %1702 = vmatprep.subr.mxu0 0.0
        %1703 = vmatpush1.msra.mxu0 0.0
        %1704 = vmatprep.subr.mxu0 0.0
        %1705 = vmatpush1.msra.mxu0 0.0
        %1706 = vmatprep.subr.mxu0 0.0
        %1707 = vmatpush1.msra.mxu0 0.0
        %1708 = vmatprep.subr.mxu0 0.0
        %1709 = vmatpush1.msra.mxu0 0.0
        %1710 = vmatprep.subr.mxu0 0.0
        %1711 = vmatpush1.msra.mxu0 0.0
        %1712 = vmatprep.subr.mxu0 0.0
        %1713 = vmatpush1.msra.mxu0 0.0
        %1714 = vmatprep.subr.mxu0 0.0
        %1715 = vmatpush1.msra.mxu0 0.0
        %1716 = vmatprep.subr.mxu0 0.0
        %1717 = vmatpush1.msra.mxu0 0.0
        %1718 = vmatprep.subr.mxu0 0.0
        %1719 = vmatpush1.msra.mxu0 0.0
        %1720 = vmatprep.subr.mxu0 0.0
        %1721 = vmatpush1.msra.mxu0 0.0
        %1722 = vmatprep.subr.mxu0 0.0
        %1723 = vmatpush1.msra.mxu0 0.0
        %1724 = vmatprep.subr.mxu0 0.0
        %1725 = vmatpush1.msra.mxu0 0.0
        %1726 = vmatprep.subr.mxu0 0.0
        %1727 = vmatpush1.msra.mxu0 0.0
        %1728 = vmatprep.subr.mxu0 0.0
        %1729 = vmatpush1.msra.mxu0 0.0
        %1730 = vmatprep.subr.mxu0 0.0
        %1731 = vmatpush1.msra.mxu0 0.0
        %1732 = vmatprep.subr.mxu0 0.0
        %1733 = vmatpush1.msra.mxu0 0.0
        %1734 = vmatprep.subr.mxu0 0.0
        %1735 = vmatpush1.msra.mxu0 0.0
        %1736 = vmatprep.subr.mxu0 0.0
        %1737 = vmatpush1.msra.mxu0 0.0
        %1738 = vmatprep.subr.mxu0 0.0
        %1739 = vmatpush1.msra.mxu0 0.0
        %1740 = vmatprep.subr.mxu0 0.0
        %1741 = vmatpush1.msra.mxu0 0.0
        %1742 = vmatprep.subr.mxu0 0.0
        %1743 = vmatpush1.msra.mxu0 0.0
        %1744 = vmatprep.subr.mxu0 0.0
        %1745 = vmatpush1.msra.mxu0 0.0
        %1746 = vmatprep.subr.mxu0 0.0
        %1747 = vmatpush1.msra.mxu0 0.0
        %1748 = vmatprep.mubr.f32.mxu0 0.0
        %v1749 = vand.u32 %v1583, 4294901760
        %1750 = vmatmul.mubr.f32.gmra.mrb[0].mxu0 %v1749
        %v1751 = vpop.f32.mrb[0].mxu0
        %v1752 = vadd.f32 %v1661, %v1751
        %v1753 = vpop.f32.mrb[0].mxu0
        %1754 = vdwg.mxu0
        %1755 = vmatprep.subr.mxu0 0.0
        %v1756 = vand.u32 %v1571, 4294901760
        %v1757 = vsub.f32 %v1571, %v1756
        %1758 = vmatpush1.msra.mxu0 %v1757
        %1759 = vmatprep.subr.mxu0 0.0
        %v1760 = vand.u32 %v1572, 4294901760
        %v1761 = vsub.f32 %v1572, %v1760
        %1762 = vmatpush1.msra.mxu0 %v1761
        %1763 = vmatprep.subr.mxu0 0.0
        %v1764 = vand.u32 %v1573, 4294901760
        %v1765 = vsub.f32 %v1573, %v1764
        %1766 = vmatpush1.msra.mxu0 %v1765
        %1767 = vmatprep.subr.mxu0 0.0
        %v1768 = vand.u32 %v1574, 4294901760
        %v1769 = vsub.f32 %v1574, %v1768
        %1770 = vmatpush1.msra.mxu0 %v1769
        %1771 = vmatprep.subr.mxu0 0.0
        %1772 = vmatpush1.msra.mxu0 0.0
        %1773 = vmatprep.subr.mxu0 0.0
        %1774 = vmatpush1.msra.mxu0 0.0
        %1775 = vmatprep.subr.mxu0 0.0
        %1776 = vmatpush1.msra.mxu0 0.0
        %1777 = vmatprep.subr.mxu0 0.0
        %1778 = vmatpush1.msra.mxu0 0.0
        %1779 = vmatprep.subr.mxu0 0.0
        %1780 = vmatpush1.msra.mxu0 0.0
        %1781 = vmatprep.subr.mxu0 0.0
        %1782 = vmatpush1.msra.mxu0 0.0
        %1783 = vmatprep.subr.mxu0 0.0
        %1784 = vmatpush1.msra.mxu0 0.0
        %1785 = vmatprep.subr.mxu0 0.0
        %1786 = vmatpush1.msra.mxu0 0.0
        %1787 = vmatprep.subr.mxu0 0.0
        %1788 = vmatpush1.msra.mxu0 0.0
        %1789 = vmatprep.subr.mxu0 0.0
        %1790 = vmatpush1.msra.mxu0 0.0
        %1791 = vmatprep.subr.mxu0 0.0
        %1792 = vmatpush1.msra.mxu0 0.0
        %1793 = vmatprep.subr.mxu0 0.0
        %1794 = vmatpush1.msra.mxu0 0.0
        %1795 = vmatprep.subr.mxu0 0.0
        %1796 = vmatpush1.msra.mxu0 0.0
        %1797 = vmatprep.subr.mxu0 0.0
        %1798 = vmatpush1.msra.mxu0 0.0
        %1799 = vmatprep.subr.mxu0 0.0
        %1800 = vmatpush1.msra.mxu0 0.0
        %1801 = vmatprep.subr.mxu0 0.0
        %1802 = vmatpush1.msra.mxu0 0.0
        %1803 = vmatprep.subr.mxu0 0.0
        %1804 = vmatpush1.msra.mxu0 0.0
        %1805 = vmatprep.subr.mxu0 0.0
        %1806 = vmatpush1.msra.mxu0 0.0
        %1807 = vmatprep.subr.mxu0 0.0
        %1808 = vmatpush1.msra.mxu0 0.0
        %1809 = vmatprep.subr.mxu0 0.0
        %1810 = vmatpush1.msra.mxu0 0.0
        %1811 = vmatprep.subr.mxu0 0.0
        %1812 = vmatpush1.msra.mxu0 0.0
        %1813 = vmatprep.subr.mxu0 0.0
        %1814 = vmatpush1.msra.mxu0 0.0
        %1815 = vmatprep.subr.mxu0 0.0
        %1816 = vmatpush1.msra.mxu0 0.0
        %1817 = vmatprep.subr.mxu0 0.0
        %1818 = vmatpush1.msra.mxu0 0.0
        %1819 = vmatprep.subr.mxu0 0.0
        %1820 = vmatpush1.msra.mxu0 0.0
        %1821 = vmatprep.subr.mxu0 0.0
        %1822 = vmatpush1.msra.mxu0 0.0
        %1823 = vmatprep.subr.mxu0 0.0
        %1824 = vmatpush1.msra.mxu0 0.0
        %1825 = vmatprep.subr.mxu0 0.0
        %1826 = vmatpush1.msra.mxu0 0.0
        %1827 = vmatprep.mubr.f32.mxu0 0.0
        %v1828 = vand.u32 %v1583, 4294901760
        %v1829 = vsub.f32 %v1583, %v1828
        %1830 = vmatmul.mubr.f32.gmra.mrb[0].mxu0 %v1829
        %v1831 = vpop.f32.mrb[0].mxu0
        %v1832 = vadd.f32 %v1752, %v1831
        %v1833 = vpop.f32.mrb[0].mxu0
        %1834 = vdwg.mxu0
        %1835 = vmatprep.subr.mxu0 0.0
        %v1836 = vand.u32 %v1571, 4294901760
        %1837 = vmatpush1.msra.mxu0 %v1836
        %1838 = vmatprep.subr.mxu0 0.0
        %v1839 = vand.u32 %v1572, 4294901760
        %1840 = vmatpush1.msra.mxu0 %v1839
        %1841 = vmatprep.subr.mxu0 0.0
        %v1842 = vand.u32 %v1573, 4294901760
        %1843 = vmatpush1.msra.mxu0 %v1842
        %1844 = vmatprep.subr.mxu0 0.0
        %v1845 = vand.u32 %v1574, 4294901760
        %1846 = vmatpush1.msra.mxu0 %v1845
        %1847 = vmatprep.subr.mxu0 0.0
        %1848 = vmatpush1.msra.mxu0 0.0
        %1849 = vmatprep.subr.mxu0 0.0
        %1850 = vmatpush1.msra.mxu0 0.0
        %1851 = vmatprep.subr.mxu0 0.0
        %1852 = vmatpush1.msra.mxu0 0.0
        %1853 = vmatprep.subr.mxu0 0.0
        %1854 = vmatpush1.msra.mxu0 0.0
        %1855 = vmatprep.subr.mxu0 0.0
        %1856 = vmatpush1.msra.mxu0 0.0
        %1857 = vmatprep.subr.mxu0 0.0
        %1858 = vmatpush1.msra.mxu0 0.0
        %1859 = vmatprep.subr.mxu0 0.0
        %1860 = vmatpush1.msra.mxu0 0.0
        %1861 = vmatprep.subr.mxu0 0.0
        %1862 = vmatpush1.msra.mxu0 0.0
        %1863 = vmatprep.subr.mxu0 0.0
        %1864 = vmatpush1.msra.mxu0 0.0
        %1865 = vmatprep.subr.mxu0 0.0
        %1866 = vmatpush1.msra.mxu0 0.0
        %1867 = vmatprep.subr.mxu0 0.0
        %1868 = vmatpush1.msra.mxu0 0.0
        %1869 = vmatprep.subr.mxu0 0.0
        %1870 = vmatpush1.msra.mxu0 0.0
        %1871 = vmatprep.subr.mxu0 0.0
        %1872 = vmatpush1.msra.mxu0 0.0
        %1873 = vmatprep.subr.mxu0 0.0
        %1874 = vmatpush1.msra.mxu0 0.0
        %1875 = vmatprep.subr.mxu0 0.0
        %1876 = vmatpush1.msra.mxu0 0.0
        %1877 = vmatprep.subr.mxu0 0.0
        %1878 = vmatpush1.msra.mxu0 0.0
        %1879 = vmatprep.subr.mxu0 0.0
        %1880 = vmatpush1.msra.mxu0 0.0
        %1881 = vmatprep.subr.mxu0 0.0
        %1882 = vmatpush1.msra.mxu0 0.0
        %1883 = vmatprep.subr.mxu0 0.0
        %1884 = vmatpush1.msra.mxu0 0.0
        %1885 = vmatprep.subr.mxu0 0.0
        %1886 = vmatpush1.msra.mxu0 0.0
        %1887 = vmatprep.subr.mxu0 0.0
        %1888 = vmatpush1.msra.mxu0 0.0
        %1889 = vmatprep.subr.mxu0 0.0
        %1890 = vmatpush1.msra.mxu0 0.0
        %1891 = vmatprep.subr.mxu0 0.0
        %1892 = vmatpush1.msra.mxu0 0.0
        %1893 = vmatprep.subr.mxu0 0.0
        %1894 = vmatpush1.msra.mxu0 0.0
        %1895 = vmatprep.subr.mxu0 0.0
        %1896 = vmatpush1.msra.mxu0 0.0
        %1897 = vmatprep.subr.mxu0 0.0
        %1898 = vmatpush1.msra.mxu0 0.0
        %1899 = vmatprep.subr.mxu0 0.0
        %1900 = vmatpush1.msra.mxu0 0.0
        %1901 = vmatprep.subr.mxu0 0.0
        %1902 = vmatpush1.msra.mxu0 0.0
        %1903 = vmatprep.mubr.f32.mxu0 0.0
        %v1904 = vand.u32 %v1583, 4294901760
        %v1905 = vsub.f32 %v1583, %v1904
        %v1906 = vand.u32 %v1905, 4294901760
        %1907 = vmatmul.mubr.f32.gmra.mrb[0].mxu0 %v1906
        %v1908 = vpop.f32.mrb[0].mxu0
        %v1909 = vadd.f32 %v1832, %v1908
        %v1910 = vpop.f32.mrb[0].mxu0
        %1911 = vdwg.mxu0
        %1912 = vmatprep.subr.mxu0 0.0
        %v1913 = vand.u32 %v1571, 4294901760
        %v1914 = vsub.f32 %v1571, %v1913
        %v1915 = vand.u32 %v1914, 4294901760
        %1916 = vmatpush1.msra.mxu0 %v1915
        %1917 = vmatprep.subr.mxu0 0.0
        %v1918 = vand.u32 %v1572, 4294901760
        %v1919 = vsub.f32 %v1572, %v1918
        %v1920 = vand.u32 %v1919, 4294901760
        %1921 = vmatpush1.msra.mxu0 %v1920
        %1922 = vmatprep.subr.mxu0 0.0
        %v1923 = vand.u32 %v1573, 4294901760
        %v1924 = vsub.f32 %v1573, %v1923
        %v1925 = vand.u32 %v1924, 4294901760
        %1926 = vmatpush1.msra.mxu0 %v1925
        %1927 = vmatprep.subr.mxu0 0.0
        %v1928 = vand.u32 %v1574, 4294901760
        %v1929 = vsub.f32 %v1574, %v1928
        %v1930 = vand.u32 %v1929, 4294901760
        %1931 = vmatpush1.msra.mxu0 %v1930
        %1932 = vmatprep.subr.mxu0 0.0
        %1933 = vmatpush1.msra.mxu0 0.0
        %1934 = vmatprep.subr.mxu0 0.0
        %1935 = vmatpush1.msra.mxu0 0.0
        %1936 = vmatprep.subr.mxu0 0.0
        %1937 = vmatpush1.msra.mxu0 0.0
        %1938 = vmatprep.subr.mxu0 0.0
        %1939 = vmatpush1.msra.mxu0 0.0
        %1940 = vmatprep.subr.mxu0 0.0
        %1941 = vmatpush1.msra.mxu0 0.0
        %1942 = vmatprep.subr.mxu0 0.0
        %1943 = vmatpush1.msra.mxu0 0.0
        %1944 = vmatprep.subr.mxu0 0.0
        %1945 = vmatpush1.msra.mxu0 0.0
        %1946 = vmatprep.subr.mxu0 0.0
        %1947 = vmatpush1.msra.mxu0 0.0
        %1948 = vmatprep.subr.mxu0 0.0
        %1949 = vmatpush1.msra.mxu0 0.0
        %1950 = vmatprep.subr.mxu0 0.0
        %1951 = vmatpush1.msra.mxu0 0.0
        %1952 = vmatprep.subr.mxu0 0.0
        %1953 = vmatpush1.msra.mxu0 0.0
        %1954 = vmatprep.subr.mxu0 0.0
        %1955 = vmatpush1.msra.mxu0 0.0
        %1956 = vmatprep.subr.mxu0 0.0
        %1957 = vmatpush1.msra.mxu0 0.0
        %1958 = vmatprep.subr.mxu0 0.0
        %1959 = vmatpush1.msra.mxu0 0.0
        %1960 = vmatprep.subr.mxu0 0.0
        %1961 = vmatpush1.msra.mxu0 0.0
        %1962 = vmatprep.subr.mxu0 0.0
        %1963 = vmatpush1.msra.mxu0 0.0
        %1964 = vmatprep.subr.mxu0 0.0
        %1965 = vmatpush1.msra.mxu0 0.0
        %1966 = vmatprep.subr.mxu0 0.0
        %1967 = vmatpush1.msra.mxu0 0.0
        %1968 = vmatprep.subr.mxu0 0.0
        %1969 = vmatpush1.msra.mxu0 0.0
        %1970 = vmatprep.subr.mxu0 0.0
        %1971 = vmatpush1.msra.mxu0 0.0
        %1972 = vmatprep.subr.mxu0 0.0
        %1973 = vmatpush1.msra.mxu0 0.0
        %1974 = vmatprep.subr.mxu0 0.0
        %1975 = vmatpush1.msra.mxu0 0.0
        %1976 = vmatprep.subr.mxu0 0.0
        %1977 = vmatpush1.msra.mxu0 0.0
        %1978 = vmatprep.subr.mxu0 0.0
        %1979 = vmatpush1.msra.mxu0 0.0
        %1980 = vmatprep.subr.mxu0 0.0
        %1981 = vmatpush1.msra.mxu0 0.0
        %1982 = vmatprep.subr.mxu0 0.0
        %1983 = vmatpush1.msra.mxu0 0.0
        %1984 = vmatprep.subr.mxu0 0.0
        %1985 = vmatpush1.msra.mxu0 0.0
        %1986 = vmatprep.subr.mxu0 0.0
        %1987 = vmatpush1.msra.mxu0 0.0
        %1988 = vmatprep.mubr.f32.mxu0 0.0
        %v1989 = vand.u32 %v1583, 4294901760
        %1990 = vmatmul.mubr.f32.gmra.mrb[0].mxu0 %v1989
        %v1991 = vpop.f32.mrb[0].mxu0
        %v1992 = vadd.f32 %v1909, %v1991
        %v1993 = vpop.f32.mrb[0].mxu0
        %1994 = vdwg.mxu0
        %1995 = vmatprep.subr.mxu0 0.0
        %v1996 = vand.u32 %v1571, 4294901760
        %1997 = vmatpush1.msra.mxu0 %v1996
        %1998 = vmatprep.subr.mxu0 0.0
        %v1999 = vand.u32 %v1572, 4294901760
        %2000 = vmatpush1.msra.mxu0 %v1999
        %2001 = vmatprep.subr.mxu0 0.0
        %v2002 = vand.u32 %v1573, 4294901760
        %2003 = vmatpush1.msra.mxu0 %v2002
        %2004 = vmatprep.subr.mxu0 0.0
        %v2005 = vand.u32 %v1574, 4294901760
        %2006 = vmatpush1.msra.mxu0 %v2005
        %2007 = vmatprep.subr.mxu0 0.0
        %2008 = vmatpush1.msra.mxu0 0.0
        %2009 = vmatprep.subr.mxu0 0.0
        %2010 = vmatpush1.msra.mxu0 0.0
        %2011 = vmatprep.subr.mxu0 0.0
        %2012 = vmatpush1.msra.mxu0 0.0
        %2013 = vmatprep.subr.mxu0 0.0
        %2014 = vmatpush1.msra.mxu0 0.0
        %2015 = vmatprep.subr.mxu0 0.0
        %2016 = vmatpush1.msra.mxu0 0.0
        %2017 = vmatprep.subr.mxu0 0.0
        %2018 = vmatpush1.msra.mxu0 0.0
        %2019 = vmatprep.subr.mxu0 0.0
        %2020 = vmatpush1.msra.mxu0 0.0
        %2021 = vmatprep.subr.mxu0 0.0
        %2022 = vmatpush1.msra.mxu0 0.0
        %2023 = vmatprep.subr.mxu0 0.0
        %2024 = vmatpush1.msra.mxu0 0.0
        %2025 = vmatprep.subr.mxu0 0.0
        %2026 = vmatpush1.msra.mxu0 0.0
        %2027 = vmatprep.subr.mxu0 0.0
        %2028 = vmatpush1.msra.mxu0 0.0
        %2029 = vmatprep.subr.mxu0 0.0
        %2030 = vmatpush1.msra.mxu0 0.0
        %2031 = vmatprep.subr.mxu0 0.0
        %2032 = vmatpush1.msra.mxu0 0.0
        %2033 = vmatprep.subr.mxu0 0.0
        %2034 = vmatpush1.msra.mxu0 0.0
        %2035 = vmatprep.subr.mxu0 0.0
        %2036 = vmatpush1.msra.mxu0 0.0
        %2037 = vmatprep.subr.mxu0 0.0
        %2038 = vmatpush1.msra.mxu0 0.0
        %2039 = vmatprep.subr.mxu0 0.0
        %2040 = vmatpush1.msra.mxu0 0.0
        %2041 = vmatprep.subr.mxu0 0.0
        %2042 = vmatpush1.msra.mxu0 0.0
        %2043 = vmatprep.subr.mxu0 0.0
        %2044 = vmatpush1.msra.mxu0 0.0
        %2045 = vmatprep.subr.mxu0 0.0
        %2046 = vmatpush1.msra.mxu0 0.0
        %2047 = vmatprep.subr.mxu0 0.0
        %2048 = vmatpush1.msra.mxu0 0.0
        %2049 = vmatprep.subr.mxu0 0.0
        %2050 = vmatpush1.msra.mxu0 0.0
        %2051 = vmatprep.subr.mxu0 0.0
        %2052 = vmatpush1.msra.mxu0 0.0
        %2053 = vmatprep.subr.mxu0 0.0
        %2054 = vmatpush1.msra.mxu0 0.0
        %2055 = vmatprep.subr.mxu0 0.0
        %2056 = vmatpush1.msra.mxu0 0.0
        %2057 = vmatprep.subr.mxu0 0.0
        %2058 = vmatpush1.msra.mxu0 0.0
        %2059 = vmatprep.subr.mxu0 0.0
        %2060 = vmatpush1.msra.mxu0 0.0
        %2061 = vmatprep.subr.mxu0 0.0
        %2062 = vmatpush1.msra.mxu0 0.0
        %2063 = vmatprep.mubr.f32.mxu0 0.0
        %v2064 = vand.u32 %v1583, 4294901760
        %2065 = vmatmul.mubr.f32.gmra.mrb[0].mxu0 %v2064
        %v2066 = vpop.f32.mrb[0].mxu0
        %v2067 = vadd.f32 %v1992, %v2066
        %v2068 = vpop.f32.mrb[0].mxu0
        %2069 = vdwg.mxu0
        %v2070 = vld [vmem:[#allocation2] sm:$0xff]
        %v2072 = vsel %vm1082, %v2070, 0
        %v2075 = vsel %vm1082, %v1568, 0
        %2077 = vmatprep.subr.mxu0 0.0
        %v2078 = vand.u32 %v2075, 4294901760
        %2079 = vmatpush1.xpose.msra.mxu0 %v2078
        %2080 = vmatprep.subr.mxu0 0.0
        %2081 = vmatpush1.xpose.msra.mxu0 0.0
        %2082 = vmatprep.subr.mxu0 0.0
        %2083 = vmatpush1.xpose.msra.mxu0 0.0
        %2084 = vmatprep.subr.mxu0 0.0
        %2085 = vmatpush1.xpose.msra.mxu0 0.0
        %2086 = vmatprep.subr.mxu0 0.0
        %2087 = vmatpush1.xpose.msra.mxu0 0.0
        %2088 = vmatprep.subr.mxu0 0.0
        %2089 = vmatpush1.xpose.msra.mxu0 0.0
        %2090 = vmatprep.subr.mxu0 0.0
        %2091 = vmatpush1.xpose.msra.mxu0 0.0
        %2092 = vmatprep.subr.mxu0 0.0
        %2093 = vmatpush1.xpose.msra.mxu0 0.0
        %2094 = vmatprep.subr.mxu0 0.0
        %2095 = vmatpush1.xpose.msra.mxu0 0.0
        %2096 = vmatprep.subr.mxu0 0.0
        %2097 = vmatpush1.xpose.msra.mxu0 0.0
        %2098 = vmatprep.subr.mxu0 0.0
        %2099 = vmatpush1.xpose.msra.mxu0 0.0
        %2100 = vmatprep.subr.mxu0 0.0
        %2101 = vmatpush1.xpose.msra.mxu0 0.0
        %2102 = vmatprep.subr.mxu0 0.0
        %2103 = vmatpush1.xpose.msra.mxu0 0.0
        %2104 = vmatprep.subr.mxu0 0.0
        %2105 = vmatpush1.xpose.msra.mxu0 0.0
        %2106 = vmatprep.subr.mxu0 0.0
        %2107 = vmatpush1.xpose.msra.mxu0 0.0
        %2108 = vmatprep.subr.mxu0 0.0
        %2109 = vmatpush1.xpose.msra.mxu0 0.0
        %2110 = vmatprep.subr.mxu0 0.0
        %2111 = vmatpush1.xpose.msra.mxu0 0.0
        %2112 = vmatprep.subr.mxu0 0.0
        %2113 = vmatpush1.xpose.msra.mxu0 0.0
        %2114 = vmatprep.subr.mxu0 0.0
        %2115 = vmatpush1.xpose.msra.mxu0 0.0
        %2116 = vmatprep.subr.mxu0 0.0
        %2117 = vmatpush1.xpose.msra.mxu0 0.0
        %2118 = vmatprep.subr.mxu0 0.0
        %2119 = vmatpush1.xpose.msra.mxu0 0.0
        %2120 = vmatprep.subr.mxu0 0.0
        %2121 = vmatpush1.xpose.msra.mxu0 0.0
        %2122 = vmatprep.subr.mxu0 0.0
        %2123 = vmatpush1.xpose.msra.mxu0 0.0
        %2124 = vmatprep.subr.mxu0 0.0
        %2125 = vmatpush1.xpose.msra.mxu0 0.0
        %2126 = vmatprep.subr.mxu0 0.0
        %2127 = vmatpush1.xpose.msra.mxu0 0.0
        %2128 = vmatprep.subr.mxu0 0.0
        %2129 = vmatpush1.xpose.msra.mxu0 0.0
        %2130 = vmatprep.subr.mxu0 0.0
        %2131 = vmatpush1.xpose.msra.mxu0 0.0
        %2132 = vmatprep.subr.mxu0 0.0
        %2133 = vmatpush1.xpose.msra.mxu0 0.0
        %2134 = vmatprep.subr.mxu0 0.0
        %2135 = vmatpush1.xpose.msra.mxu0 0.0
        %2136 = vmatprep.subr.mxu0 0.0
        %2137 = vmatpush1.xpose.msra.mxu0 0.0
        %2138 = vmatprep.subr.mxu0 0.0
        %2139 = vmatpush1.xpose.msra.mxu0 0.0
        %2140 = vmatprep.subr.mxu0 0.0
        %2141 = vmatpush1.xpose.msra.mxu0 0.0
        %2142 = vmatprep.mubr.f32.mxu0 0.0
        %v2143 = vand.u32 %v2072, 4294901760
        %v2144 = vsub.f32 %v2072, %v2143
        %v2145 = vand.u32 %v2144, 4294901760
        %v2146 = vsub.f32 %v2144, %v2145
        %v2147 = vand.u32 %v2146, 4294901760
        %2148 = vmatmul.mubr.f32.gmra.mrb[0].mxu0 %v2147
        %v2149 = vpop.f32.mrb[0].mxu0
        %v2150 = vadd.f32 0.0, %v2149
        %v2151 = vpop.f32.mrb[0].mxu0
        %2152 = vdwg.mxu0
        %2153 = vmatprep.subr.mxu0 0.0
        %v2154 = vand.u32 %v2075, 4294901760
        %v2155 = vsub.f32 %v2075, %v2154
        %v2156 = vand.u32 %v2155, 4294901760
        %v2157 = vsub.f32 %v2155, %v2156
        %v2158 = vand.u32 %v2157, 4294901760
        %2159 = vmatpush1.xpose.msra.mxu0 %v2158
        %2160 = vmatprep.subr.mxu0 0.0
        %2161 = vmatpush1.xpose.msra.mxu0 0.0
        %2162 = vmatprep.subr.mxu0 0.0
        %2163 = vmatpush1.xpose.msra.mxu0 0.0
        %2164 = vmatprep.subr.mxu0 0.0
        %2165 = vmatpush1.xpose.msra.mxu0 0.0
        %2166 = vmatprep.subr.mxu0 0.0
        %2167 = vmatpush1.xpose.msra.mxu0 0.0
        %2168 = vmatprep.subr.mxu0 0.0
        %2169 = vmatpush1.xpose.msra.mxu0 0.0
        %2170 = vmatprep.subr.mxu0 0.0
        %2171 = vmatpush1.xpose.msra.mxu0 0.0
        %2172 = vmatprep.subr.mxu0 0.0
        %2173 = vmatpush1.xpose.msra.mxu0 0.0
        %2174 = vmatprep.subr.mxu0 0.0
        %2175 = vmatpush1.xpose.msra.mxu0 0.0
        %2176 = vmatprep.subr.mxu0 0.0
        %2177 = vmatpush1.xpose.msra.mxu0 0.0
        %2178 = vmatprep.subr.mxu0 0.0
        %2179 = vmatpush1.xpose.msra.mxu0 0.0
        %2180 = vmatprep.subr.mxu0 0.0
        %2181 = vmatpush1.xpose.msra.mxu0 0.0
        %2182 = vmatprep.subr.mxu0 0.0
        %2183 = vmatpush1.xpose.msra.mxu0 0.0
        %2184 = vmatprep.subr.mxu0 0.0
        %2185 = vmatpush1.xpose.msra.mxu0 0.0
        %2186 = vmatprep.subr.mxu0 0.0
        %2187 = vmatpush1.xpose.msra.mxu0 0.0
        %2188 = vmatprep.subr.mxu0 0.0
        %2189 = vmatpush1.xpose.msra.mxu0 0.0
        %2190 = vmatprep.subr.mxu0 0.0
        %2191 = vmatpush1.xpose.msra.mxu0 0.0
        %2192 = vmatprep.subr.mxu0 0.0
        %2193 = vmatpush1.xpose.msra.mxu0 0.0
        %2194 = vmatprep.subr.mxu0 0.0
        %2195 = vmatpush1.xpose.msra.mxu0 0.0
        %2196 = vmatprep.subr.mxu0 0.0
        %2197 = vmatpush1.xpose.msra.mxu0 0.0
        %2198 = vmatprep.subr.mxu0 0.0
        %2199 = vmatpush1.xpose.msra.mxu0 0.0
        %2200 = vmatprep.subr.mxu0 0.0
        %2201 = vmatpush1.xpose.msra.mxu0 0.0
        %2202 = vmatprep.subr.mxu0 0.0
        %2203 = vmatpush1.xpose.msra.mxu0 0.0
        %2204 = vmatprep.subr.mxu0 0.0
        %2205 = vmatpush1.xpose.msra.mxu0 0.0
        %2206 = vmatprep.subr.mxu0 0.0
        %2207 = vmatpush1.xpose.msra.mxu0 0.0
        %2208 = vmatprep.subr.mxu0 0.0
        %2209 = vmatpush1.xpose.msra.mxu0 0.0
        %2210 = vmatprep.subr.mxu0 0.0
        %2211 = vmatpush1.xpose.msra.mxu0 0.0
        %2212 = vmatprep.subr.mxu0 0.0
        %2213 = vmatpush1.xpose.msra.mxu0 0.0
        %2214 = vmatprep.subr.mxu0 0.0
        %2215 = vmatpush1.xpose.msra.mxu0 0.0
        %2216 = vmatprep.subr.mxu0 0.0
        %2217 = vmatpush1.xpose.msra.mxu0 0.0
        %2218 = vmatprep.subr.mxu0 0.0
        %2219 = vmatpush1.xpose.msra.mxu0 0.0
        %2220 = vmatprep.subr.mxu0 0.0
        %2221 = vmatpush1.xpose.msra.mxu0 0.0
        %2222 = vmatprep.mubr.f32.mxu0 0.0
        %v2223 = vand.u32 %v2072, 4294901760
        %2224 = vmatmul.mubr.f32.gmra.mrb[0].mxu0 %v2223
        %v2225 = vpop.f32.mrb[0].mxu0
        %v2226 = vadd.f32 %v2150, %v2225
        %v2227 = vpop.f32.mrb[0].mxu0
        %2228 = vdwg.mxu0
        %2229 = vmatprep.subr.mxu0 0.0
        %v2230 = vand.u32 %v2075, 4294901760
        %v2231 = vsub.f32 %v2075, %v2230
        %2232 = vmatpush1.xpose.msra.mxu0 %v2231
        %2233 = vmatprep.subr.mxu0 0.0
        %2234 = vmatpush1.xpose.msra.mxu0 0.0
        %2235 = vmatprep.subr.mxu0 0.0
        %2236 = vmatpush1.xpose.msra.mxu0 0.0
        %2237 = vmatprep.subr.mxu0 0.0
        %2238 = vmatpush1.xpose.msra.mxu0 0.0
        %2239 = vmatprep.subr.mxu0 0.0
        %2240 = vmatpush1.xpose.msra.mxu0 0.0
        %2241 = vmatprep.subr.mxu0 0.0
        %2242 = vmatpush1.xpose.msra.mxu0 0.0
        %2243 = vmatprep.subr.mxu0 0.0
        %2244 = vmatpush1.xpose.msra.mxu0 0.0
        %2245 = vmatprep.subr.mxu0 0.0
        %2246 = vmatpush1.xpose.msra.mxu0 0.0
        %2247 = vmatprep.subr.mxu0 0.0
        %2248 = vmatpush1.xpose.msra.mxu0 0.0
        %2249 = vmatprep.subr.mxu0 0.0
        %2250 = vmatpush1.xpose.msra.mxu0 0.0
        %2251 = vmatprep.subr.mxu0 0.0
        %2252 = vmatpush1.xpose.msra.mxu0 0.0
        %2253 = vmatprep.subr.mxu0 0.0
        %2254 = vmatpush1.xpose.msra.mxu0 0.0
        %2255 = vmatprep.subr.mxu0 0.0
        %2256 = vmatpush1.xpose.msra.mxu0 0.0
        %2257 = vmatprep.subr.mxu0 0.0
        %2258 = vmatpush1.xpose.msra.mxu0 0.0
        %2259 = vmatprep.subr.mxu0 0.0
        %2260 = vmatpush1.xpose.msra.mxu0 0.0
        %2261 = vmatprep.subr.mxu0 0.0
        %2262 = vmatpush1.xpose.msra.mxu0 0.0
        %2263 = vmatprep.subr.mxu0 0.0
        %2264 = vmatpush1.xpose.msra.mxu0 0.0
        %2265 = vmatprep.subr.mxu0 0.0
        %2266 = vmatpush1.xpose.msra.mxu0 0.0
        %2267 = vmatprep.subr.mxu0 0.0
        %2268 = vmatpush1.xpose.msra.mxu0 0.0
        %2269 = vmatprep.subr.mxu0 0.0
        %2270 = vmatpush1.xpose.msra.mxu0 0.0
        %2271 = vmatprep.subr.mxu0 0.0
        %2272 = vmatpush1.xpose.msra.mxu0 0.0
        %2273 = vmatprep.subr.mxu0 0.0
        %2274 = vmatpush1.xpose.msra.mxu0 0.0
        %2275 = vmatprep.subr.mxu0 0.0
        %2276 = vmatpush1.xpose.msra.mxu0 0.0
        %2277 = vmatprep.subr.mxu0 0.0
        %2278 = vmatpush1.xpose.msra.mxu0 0.0
        %2279 = vmatprep.subr.mxu0 0.0
        %2280 = vmatpush1.xpose.msra.mxu0 0.0
        %2281 = vmatprep.subr.mxu0 0.0
        %2282 = vmatpush1.xpose.msra.mxu0 0.0
        %2283 = vmatprep.subr.mxu0 0.0
        %2284 = vmatpush1.xpose.msra.mxu0 0.0
        %2285 = vmatprep.subr.mxu0 0.0
        %2286 = vmatpush1.xpose.msra.mxu0 0.0
        %2287 = vmatprep.subr.mxu0 0.0
        %2288 = vmatpush1.xpose.msra.mxu0 0.0
        %2289 = vmatprep.subr.mxu0 0.0
        %2290 = vmatpush1.xpose.msra.mxu0 0.0
        %2291 = vmatprep.subr.mxu0 0.0
        %2292 = vmatpush1.xpose.msra.mxu0 0.0
        %2293 = vmatprep.subr.mxu0 0.0
        %2294 = vmatpush1.xpose.msra.mxu0 0.0
        %2295 = vmatprep.mubr.f32.mxu0 0.0
        %v2296 = vand.u32 %v2072, 4294901760
        %v2297 = vsub.f32 %v2072, %v2296
        %2298 = vmatmul.mubr.f32.gmra.mrb[0].mxu0 %v2297
        %v2299 = vpop.f32.mrb[0].mxu0
        %v2300 = vadd.f32 %v2226, %v2299
        %v2301 = vpop.f32.mrb[0].mxu0
        %2302 = vdwg.mxu0
        %2303 = vmatprep.subr.mxu0 0.0
        %v2304 = vand.u32 %v2075, 4294901760
        %2305 = vmatpush1.xpose.msra.mxu0 %v2304
        %2306 = vmatprep.subr.mxu0 0.0
        %2307 = vmatpush1.xpose.msra.mxu0 0.0
        %2308 = vmatprep.subr.mxu0 0.0
        %2309 = vmatpush1.xpose.msra.mxu0 0.0
        %2310 = vmatprep.subr.mxu0 0.0
        %2311 = vmatpush1.xpose.msra.mxu0 0.0
        %2312 = vmatprep.subr.mxu0 0.0
        %2313 = vmatpush1.xpose.msra.mxu0 0.0
        %2314 = vmatprep.subr.mxu0 0.0
        %2315 = vmatpush1.xpose.msra.mxu0 0.0
        %2316 = vmatprep.subr.mxu0 0.0
        %2317 = vmatpush1.xpose.msra.mxu0 0.0
        %2318 = vmatprep.subr.mxu0 0.0
        %2319 = vmatpush1.xpose.msra.mxu0 0.0
        %2320 = vmatprep.subr.mxu0 0.0
        %2321 = vmatpush1.xpose.msra.mxu0 0.0
        %2322 = vmatprep.subr.mxu0 0.0
        %2323 = vmatpush1.xpose.msra.mxu0 0.0
        %2324 = vmatprep.subr.mxu0 0.0
        %2325 = vmatpush1.xpose.msra.mxu0 0.0
        %2326 = vmatprep.subr.mxu0 0.0
        %2327 = vmatpush1.xpose.msra.mxu0 0.0
        %2328 = vmatprep.subr.mxu0 0.0
        %2329 = vmatpush1.xpose.msra.mxu0 0.0
        %2330 = vmatprep.subr.mxu0 0.0
        %2331 = vmatpush1.xpose.msra.mxu0 0.0
        %2332 = vmatprep.subr.mxu0 0.0
        %2333 = vmatpush1.xpose.msra.mxu0 0.0
        %2334 = vmatprep.subr.mxu0 0.0
        %2335 = vmatpush1.xpose.msra.mxu0 0.0
        %2336 = vmatprep.subr.mxu0 0.0
        %2337 = vmatpush1.xpose.msra.mxu0 0.0
        %2338 = vmatprep.subr.mxu0 0.0
        %2339 = vmatpush1.xpose.msra.mxu0 0.0
        %2340 = vmatprep.subr.mxu0 0.0
        %2341 = vmatpush1.xpose.msra.mxu0 0.0
        %2342 = vmatprep.subr.mxu0 0.0
        %2343 = vmatpush1.xpose.msra.mxu0 0.0
        %2344 = vmatprep.subr.mxu0 0.0
        %2345 = vmatpush1.xpose.msra.mxu0 0.0
        %2346 = vmatprep.subr.mxu0 0.0
        %2347 = vmatpush1.xpose.msra.mxu0 0.0
        %2348 = vmatprep.subr.mxu0 0.0
        %2349 = vmatpush1.xpose.msra.mxu0 0.0
        %2350 = vmatprep.subr.mxu0 0.0
        %2351 = vmatpush1.xpose.msra.mxu0 0.0
        %2352 = vmatprep.subr.mxu0 0.0
        %2353 = vmatpush1.xpose.msra.mxu0 0.0
        %2354 = vmatprep.subr.mxu0 0.0
        %2355 = vmatpush1.xpose.msra.mxu0 0.0
        %2356 = vmatprep.subr.mxu0 0.0
        %2357 = vmatpush1.xpose.msra.mxu0 0.0
        %2358 = vmatprep.subr.mxu0 0.0
        %2359 = vmatpush1.xpose.msra.mxu0 0.0
        %2360 = vmatprep.subr.mxu0 0.0
        %2361 = vmatpush1.xpose.msra.mxu0 0.0
        %2362 = vmatprep.subr.mxu0 0.0
        %2363 = vmatpush1.xpose.msra.mxu0 0.0
        %2364 = vmatprep.subr.mxu0 0.0
        %2365 = vmatpush1.xpose.msra.mxu0 0.0
        %2366 = vmatprep.subr.mxu0 0.0
        %2367 = vmatpush1.xpose.msra.mxu0 0.0
        %2368 = vmatprep.mubr.f32.mxu0 0.0
        %v2369 = vand.u32 %v2072, 4294901760
        %v2370 = vsub.f32 %v2072, %v2369
        %v2371 = vand.u32 %v2370, 4294901760
        %2372 = vmatmul.mubr.f32.gmra.mrb[0].mxu0 %v2371
        %v2373 = vpop.f32.mrb[0].mxu0
        %v2374 = vadd.f32 %v2300, %v2373
        %v2375 = vpop.f32.mrb[0].mxu0
        %2376 = vdwg.mxu0
        %2377 = vmatprep.subr.mxu0 0.0
        %v2378 = vand.u32 %v2075, 4294901760
        %v2379 = vsub.f32 %v2075, %v2378
        %v2380 = vand.u32 %v2379, 4294901760
        %2381 = vmatpush1.xpose.msra.mxu0 %v2380
        %2382 = vmatprep.subr.mxu0 0.0
        %2383 = vmatpush1.xpose.msra.mxu0 0.0
        %2384 = vmatprep.subr.mxu0 0.0
        %2385 = vmatpush1.xpose.msra.mxu0 0.0
        %2386 = vmatprep.subr.mxu0 0.0
        %2387 = vmatpush1.xpose.msra.mxu0 0.0
        %2388 = vmatprep.subr.mxu0 0.0
        %2389 = vmatpush1.xpose.msra.mxu0 0.0
        %2390 = vmatprep.subr.mxu0 0.0
        %2391 = vmatpush1.xpose.msra.mxu0 0.0
        %2392 = vmatprep.subr.mxu0 0.0
        %2393 = vmatpush1.xpose.msra.mxu0 0.0
        %2394 = vmatprep.subr.mxu0 0.0
        %2395 = vmatpush1.xpose.msra.mxu0 0.0
        %2396 = vmatprep.subr.mxu0 0.0
        %2397 = vmatpush1.xpose.msra.mxu0 0.0
        %2398 = vmatprep.subr.mxu0 0.0
        %2399 = vmatpush1.xpose.msra.mxu0 0.0
        %2400 = vmatprep.subr.mxu0 0.0
        %2401 = vmatpush1.xpose.msra.mxu0 0.0
        %2402 = vmatprep.subr.mxu0 0.0
        %2403 = vmatpush1.xpose.msra.mxu0 0.0
        %2404 = vmatprep.subr.mxu0 0.0
        %2405 = vmatpush1.xpose.msra.mxu0 0.0
        %2406 = vmatprep.subr.mxu0 0.0
        %2407 = vmatpush1.xpose.msra.mxu0 0.0
        %2408 = vmatprep.subr.mxu0 0.0
        %2409 = vmatpush1.xpose.msra.mxu0 0.0
        %2410 = vmatprep.subr.mxu0 0.0
        %2411 = vmatpush1.xpose.msra.mxu0 0.0
        %2412 = vmatprep.subr.mxu0 0.0
        %2413 = vmatpush1.xpose.msra.mxu0 0.0
        %2414 = vmatprep.subr.mxu0 0.0
        %2415 = vmatpush1.xpose.msra.mxu0 0.0
        %2416 = vmatprep.subr.mxu0 0.0
        %2417 = vmatpush1.xpose.msra.mxu0 0.0
        %2418 = vmatprep.subr.mxu0 0.0
        %2419 = vmatpush1.xpose.msra.mxu0 0.0
        %2420 = vmatprep.subr.mxu0 0.0
        %2421 = vmatpush1.xpose.msra.mxu0 0.0
        %2422 = vmatprep.subr.mxu0 0.0
        %2423 = vmatpush1.xpose.msra.mxu0 0.0
        %2424 = vmatprep.subr.mxu0 0.0
        %2425 = vmatpush1.xpose.msra.mxu0 0.0
        %2426 = vmatprep.subr.mxu0 0.0
        %2427 = vmatpush1.xpose.msra.mxu0 0.0
        %2428 = vmatprep.subr.mxu0 0.0
        %2429 = vmatpush1.xpose.msra.mxu0 0.0
        %2430 = vmatprep.subr.mxu0 0.0
        %2431 = vmatpush1.xpose.msra.mxu0 0.0
        %2432 = vmatprep.subr.mxu0 0.0
        %2433 = vmatpush1.xpose.msra.mxu0 0.0
        %2434 = vmatprep.subr.mxu0 0.0
        %2435 = vmatpush1.xpose.msra.mxu0 0.0
        %2436 = vmatprep.subr.mxu0 0.0
        %2437 = vmatpush1.xpose.msra.mxu0 0.0
        %2438 = vmatprep.subr.mxu0 0.0
        %2439 = vmatpush1.xpose.msra.mxu0 0.0
        %2440 = vmatprep.subr.mxu0 0.0
        %2441 = vmatpush1.xpose.msra.mxu0 0.0
        %2442 = vmatprep.subr.mxu0 0.0
        %2443 = vmatpush1.xpose.msra.mxu0 0.0
        %2444 = vmatprep.mubr.f32.mxu0 0.0
        %v2445 = vand.u32 %v2072, 4294901760
        %2446 = vmatmul.mubr.f32.gmra.mrb[0].mxu0 %v2445
        %v2447 = vpop.f32.mrb[0].mxu0
        %v2448 = vadd.f32 %v2374, %v2447
        %v2449 = vpop.f32.mrb[0].mxu0
        %2450 = vdwg.mxu0
        %2451 = vmatprep.subr.mxu0 0.0
        %v2452 = vand.u32 %v2075, 4294901760
        %2453 = vmatpush1.xpose.msra.mxu0 %v2452
        %2454 = vmatprep.subr.mxu0 0.0
        %2455 = vmatpush1.xpose.msra.mxu0 0.0
        %2456 = vmatprep.subr.mxu0 0.0
        %2457 = vmatpush1.xpose.msra.mxu0 0.0
        %2458 = vmatprep.subr.mxu0 0.0
        %2459 = vmatpush1.xpose.msra.mxu0 0.0
        %2460 = vmatprep.subr.mxu0 0.0
        %2461 = vmatpush1.xpose.msra.mxu0 0.0
        %2462 = vmatprep.subr.mxu0 0.0
        %2463 = vmatpush1.xpose.msra.mxu0 0.0
        %2464 = vmatprep.subr.mxu0 0.0
        %2465 = vmatpush1.xpose.msra.mxu0 0.0
        %2466 = vmatprep.subr.mxu0 0.0
        %2467 = vmatpush1.xpose.msra.mxu0 0.0
        %2468 = vmatprep.subr.mxu0 0.0
        %2469 = vmatpush1.xpose.msra.mxu0 0.0
        %2470 = vmatprep.subr.mxu0 0.0
        %2471 = vmatpush1.xpose.msra.mxu0 0.0
        %2472 = vmatprep.subr.mxu0 0.0
        %2473 = vmatpush1.xpose.msra.mxu0 0.0
        %2474 = vmatprep.subr.mxu0 0.0
        %2475 = vmatpush1.xpose.msra.mxu0 0.0
        %2476 = vmatprep.subr.mxu0 0.0
        %2477 = vmatpush1.xpose.msra.mxu0 0.0
        %2478 = vmatprep.subr.mxu0 0.0
        %2479 = vmatpush1.xpose.msra.mxu0 0.0
        %2480 = vmatprep.subr.mxu0 0.0
        %2481 = vmatpush1.xpose.msra.mxu0 0.0
        %2482 = vmatprep.subr.mxu0 0.0
        %2483 = vmatpush1.xpose.msra.mxu0 0.0
        %2484 = vmatprep.subr.mxu0 0.0
        %2485 = vmatpush1.xpose.msra.mxu0 0.0
        %2486 = vmatprep.subr.mxu0 0.0
        %2487 = vmatpush1.xpose.msra.mxu0 0.0
        %2488 = vmatprep.subr.mxu0 0.0
        %2489 = vmatpush1.xpose.msra.mxu0 0.0
        %2490 = vmatprep.subr.mxu0 0.0
        %2491 = vmatpush1.xpose.msra.mxu0 0.0
        %2492 = vmatprep.subr.mxu0 0.0
        %2493 = vmatpush1.xpose.msra.mxu0 0.0
        %2494 = vmatprep.subr.mxu0 0.0
        %2495 = vmatpush1.xpose.msra.mxu0 0.0
        %2496 = vmatprep.subr.mxu0 0.0
        %2497 = vmatpush1.xpose.msra.mxu0 0.0
        %2498 = vmatprep.subr.mxu0 0.0
        %2499 = vmatpush1.xpose.msra.mxu0 0.0
        %2500 = vmatprep.subr.mxu0 0.0
        %2501 = vmatpush1.xpose.msra.mxu0 0.0
        %2502 = vmatprep.subr.mxu0 0.0
        %2503 = vmatpush1.xpose.msra.mxu0 0.0
        %2504 = vmatprep.subr.mxu0 0.0
        %2505 = vmatpush1.xpose.msra.mxu0 0.0
        %2506 = vmatprep.subr.mxu0 0.0
        %2507 = vmatpush1.xpose.msra.mxu0 0.0
        %2508 = vmatprep.subr.mxu0 0.0
        %2509 = vmatpush1.xpose.msra.mxu0 0.0
        %2510 = vmatprep.subr.mxu0 0.0
        %2511 = vmatpush1.xpose.msra.mxu0 0.0
        %2512 = vmatprep.subr.mxu0 0.0
        %2513 = vmatpush1.xpose.msra.mxu0 0.0
        %2514 = vmatprep.subr.mxu0 0.0
        %2515 = vmatpush1.xpose.msra.mxu0 0.0
        %2516 = vmatprep.mubr.f32.mxu0 0.0
        %v2517 = vand.u32 %v2072, 4294901760
        %2518 = vmatmul.mubr.f32.gmra.mrb[0].mxu0 %v2517
        %v2519 = vpop.f32.mrb[0].mxu0
        %v2520 = vadd.f32 %v2448, %v2519
        %v2521 = vpop.f32.mrb[0].mxu0
        %2522 = vdwg.mxu0
        %v2523 = vld [vmem:[#allocation3] sm:$0xff]
        %vm2524 = vcmask 64512
        %v2525 = vsel %vm2524, %v2520, -inf
        %2526 = vmax.xlane.f32.xlu0 %v2525
        %v2527 = vpop.xlane.xlu0 %2526
        %v2528 = vmax.f32 %v2523, %v2527
        %v2529 = vsub.f32 %v2523, %v2528
        %v2530 = vmul.f32 %v2529, 1.442695
        %v2531 = vpow.pop %v2530
        %2533 = vset.pattern.permute.xlu0 0
        %2534 = vperm.xlu0 %2533, %v2528
        %v2535 = vpop.permute.xlu0 %2534
        %v2537 = vsub.f32 %v2520, %v2535
        %v2538 = vmul.f32 %v2537, 1.442695
        %v2539 = vpow.pop %v2538
        %v2540 = vld [vmem:[#allocation4] sm:$0xff]
        %v2541 = vmul.f32 %v2531, %v2540
        %v2542 = vsel %vm2524, %v2539, 0.0
        %2543 = vadd.xlane.f32.xlu0 %v2542
        %v2544 = vpop.xlane.xlu0 %2543
        %v2545 = vadd.f32 %v2541, %v2544
        %vm2546 = vcmask 7168
        %2547 = vst.msk [vmem:[#allocation4] sm:$0xff] %vm2546, %v2545
        %v2548 = vld [vmem:[#allocation5] sm:$0xff]
        %2550 = vset.pattern.permute.xlu0 0
        %2551 = vperm.xlu0 %2550, %v2531
        %v2552 = vpop.permute.xlu0 %2551
        %v2554 = vmul.f32 %v2552, %v2548
        %v2556 = vsel %vm2524, %v2539, 0
        %2558 = vmatprep.subr.mxu0 0.0
        %v2559 = vand.u32 %v2067, 4294901760
        %2560 = vmatpush1.msra.mxu0 %v2559
        %2561 = vmatprep.subr.mxu0 0.0
        %2562 = vmatpush1.msra.mxu0 0.0
        %2563 = vmatprep.subr.mxu0 0.0
        %2564 = vmatpush1.msra.mxu0 0.0
        %2565 = vmatprep.subr.mxu0 0.0
        %2566 = vmatpush1.msra.mxu0 0.0
        %2567 = vmatprep.subr.mxu0 0.0
        %2568 = vmatpush1.msra.mxu0 0.0
        %2569 = vmatprep.subr.mxu0 0.0
        %2570 = vmatpush1.msra.mxu0 0.0
        %2571 = vmatprep.subr.mxu0 0.0
        %2572 = vmatpush1.msra.mxu0 0.0
        %2573 = vmatprep.subr.mxu0 0.0
        %2574 = vmatpush1.msra.mxu0 0.0
        %2575 = vmatprep.subr.mxu0 0.0
        %2576 = vmatpush1.msra.mxu0 0.0
        %2577 = vmatprep.subr.mxu0 0.0
        %2578 = vmatpush1.msra.mxu0 0.0
        %2579 = vmatprep.subr.mxu0 0.0
        %2580 = vmatpush1.msra.mxu0 0.0
        %2581 = vmatprep.subr.mxu0 0.0
        %2582 = vmatpush1.msra.mxu0 0.0
        %2583 = vmatprep.subr.mxu0 0.0
        %2584 = vmatpush1.msra.mxu0 0.0
        %2585 = vmatprep.subr.mxu0 0.0
        %2586 = vmatpush1.msra.mxu0 0.0
        %2587 = vmatprep.subr.mxu0 0.0
        %2588 = vmatpush1.msra.mxu0 0.0
        %2589 = vmatprep.subr.mxu0 0.0
        %2590 = vmatpush1.msra.mxu0 0.0
        %2591 = vmatprep.subr.mxu0 0.0
        %2592 = vmatpush1.msra.mxu0 0.0
        %2593 = vmatprep.subr.mxu0 0.0
        %2594 = vmatpush1.msra.mxu0 0.0
        %2595 = vmatprep.subr.mxu0 0.0
        %2596 = vmatpush1.msra.mxu0 0.0
        %2597 = vmatprep.subr.mxu0 0.0
        %2598 = vmatpush1.msra.mxu0 0.0
        %2599 = vmatprep.subr.mxu0 0.0
        %2600 = vmatpush1.msra.mxu0 0.0
        %2601 = vmatprep.subr.mxu0 0.0
        %2602 = vmatpush1.msra.mxu0 0.0
        %2603 = vmatprep.subr.mxu0 0.0
        %2604 = vmatpush1.msra.mxu0 0.0
        %2605 = vmatprep.subr.mxu0 0.0
        %2606 = vmatpush1.msra.mxu0 0.0
        %2607 = vmatprep.subr.mxu0 0.0
        %2608 = vmatpush1.msra.mxu0 0.0
        %2609 = vmatprep.subr.mxu0 0.0
        %2610 = vmatpush1.msra.mxu0 0.0
        %2611 = vmatprep.subr.mxu0 0.0
        %2612 = vmatpush1.msra.mxu0 0.0
        %2613 = vmatprep.subr.mxu0 0.0
        %2614 = vmatpush1.msra.mxu0 0.0
        %2615 = vmatprep.subr.mxu0 0.0
        %2616 = vmatpush1.msra.mxu0 0.0
        %2617 = vmatprep.subr.mxu0 0.0
        %2618 = vmatpush1.msra.mxu0 0.0
        %2619 = vmatprep.subr.mxu0 0.0
        %2620 = vmatpush1.msra.mxu0 0.0
        %2621 = vmatprep.subr.mxu0 0.0
        %2622 = vmatpush1.msra.mxu0 0.0
        %2623 = vmatprep.mubr.f32.mxu0 0.0
        %v2624 = vand.u32 %v2556, 4294901760
        %v2625 = vsub.f32 %v2556, %v2624
        %v2626 = vand.u32 %v2625, 4294901760
        %v2627 = vsub.f32 %v2625, %v2626
        %v2628 = vand.u32 %v2627, 4294901760
        %2629 = vmatmul.mubr.f32.gmra.mrb[0].mxu0 %v2628
        %v2630 = vpop.f32.mrb[0].mxu0
        %v2631 = vadd.f32 0.0, %v2630
        %v2632 = vpop.f32.mrb[0].mxu0
        %2633 = vdwg.mxu0
        %2634 = vmatprep.subr.mxu0 0.0
        %v2635 = vand.u32 %v2067, 4294901760
        %v2636 = vsub.f32 %v2067, %v2635
        %v2637 = vand.u32 %v2636, 4294901760
        %v2638 = vsub.f32 %v2636, %v2637
        %v2639 = vand.u32 %v2638, 4294901760
        %2640 = vmatpush1.msra.mxu0 %v2639
        %2641 = vmatprep.subr.mxu0 0.0
        %2642 = vmatpush1.msra.mxu0 0.0
        %2643 = vmatprep.subr.mxu0 0.0
        %2644 = vmatpush1.msra.mxu0 0.0
        %2645 = vmatprep.subr.mxu0 0.0
        %2646 = vmatpush1.msra.mxu0 0.0
        %2647 = vmatprep.subr.mxu0 0.0
        %2648 = vmatpush1.msra.mxu0 0.0
        %2649 = vmatprep.subr.mxu0 0.0
        %2650 = vmatpush1.msra.mxu0 0.0
        %2651 = vmatprep.subr.mxu0 0.0
        %2652 = vmatpush1.msra.mxu0 0.0
        %2653 = vmatprep.subr.mxu0 0.0
        %2654 = vmatpush1.msra.mxu0 0.0
        %2655 = vmatprep.subr.mxu0 0.0
        %2656 = vmatpush1.msra.mxu0 0.0
        %2657 = vmatprep.subr.mxu0 0.0
        %2658 = vmatpush1.msra.mxu0 0.0
        %2659 = vmatprep.subr.mxu0 0.0
        %2660 = vmatpush1.msra.mxu0 0.0
        %2661 = vmatprep.subr.mxu0 0.0
        %2662 = vmatpush1.msra.mxu0 0.0
        %2663 = vmatprep.subr.mxu0 0.0
        %2664 = vmatpush1.msra.mxu0 0.0
        %2665 = vmatprep.subr.mxu0 0.0
        %2666 = vmatpush1.msra.mxu0 0.0
        %2667 = vmatprep.subr.mxu0 0.0
        %2668 = vmatpush1.msra.mxu0 0.0
        %2669 = vmatprep.subr.mxu0 0.0
        %2670 = vmatpush1.msra.mxu0 0.0
        %2671 = vmatprep.subr.mxu0 0.0
        %2672 = vmatpush1.msra.mxu0 0.0
        %2673 = vmatprep.subr.mxu0 0.0
        %2674 = vmatpush1.msra.mxu0 0.0
        %2675 = vmatprep.subr.mxu0 0.0
        %2676 = vmatpush1.msra.mxu0 0.0
        %2677 = vmatprep.subr.mxu0 0.0
        %2678 = vmatpush1.msra.mxu0 0.0
        %2679 = vmatprep.subr.mxu0 0.0
        %2680 = vmatpush1.msra.mxu0 0.0
        %2681 = vmatprep.subr.mxu0 0.0
        %2682 = vmatpush1.msra.mxu0 0.0
        %2683 = vmatprep.subr.mxu0 0.0
        %2684 = vmatpush1.msra.mxu0 0.0
        %2685 = vmatprep.subr.mxu0 0.0
        %2686 = vmatpush1.msra.mxu0 0.0
        %2687 = vmatprep.subr.mxu0 0.0
        %2688 = vmatpush1.msra.mxu0 0.0
        %2689 = vmatprep.subr.mxu0 0.0
        %2690 = vmatpush1.msra.mxu0 0.0
        %2691 = vmatprep.subr.mxu0 0.0
        %2692 = vmatpush1.msra.mxu0 0.0
        %2693 = vmatprep.subr.mxu0 0.0
        %2694 = vmatpush1.msra.mxu0 0.0
        %2695 = vmatprep.subr.mxu0 0.0
        %2696 = vmatpush1.msra.mxu0 0.0
        %2697 = vmatprep.subr.mxu0 0.0
        %2698 = vmatpush1.msra.mxu0 0.0
        %2699 = vmatprep.subr.mxu0 0.0
        %2700 = vmatpush1.msra.mxu0 0.0
        %2701 = vmatprep.subr.mxu0 0.0
        %2702 = vmatpush1.msra.mxu0 0.0
        %2703 = vmatprep.mubr.f32.mxu0 0.0
        %v2704 = vand.u32 %v2556, 4294901760
        %2705 = vmatmul.mubr.f32.gmra.mrb[0].mxu0 %v2704
        %v2706 = vpop.f32.mrb[0].mxu0
        %v2707 = vadd.f32 %v2631, %v2706
        %v2708 = vpop.f32.mrb[0].mxu0
        %2709 = vdwg.mxu0
        %2710 = vmatprep.subr.mxu0 0.0
        %v2711 = vand.u32 %v2067, 4294901760
        %v2712 = vsub.f32 %v2067, %v2711
        %2713 = vmatpush1.msra.mxu0 %v2712
        %2714 = vmatprep.subr.mxu0 0.0
        %2715 = vmatpush1.msra.mxu0 0.0
        %2716 = vmatprep.subr.mxu0 0.0
        %2717 = vmatpush1.msra.mxu0 0.0
        %2718 = vmatprep.subr.mxu0 0.0
        %2719 = vmatpush1.msra.mxu0 0.0
        %2720 = vmatprep.subr.mxu0 0.0
        %2721 = vmatpush1.msra.mxu0 0.0
        %2722 = vmatprep.subr.mxu0 0.0
        %2723 = vmatpush1.msra.mxu0 0.0
        %2724 = vmatprep.subr.mxu0 0.0
        %2725 = vmatpush1.msra.mxu0 0.0
        %2726 = vmatprep.subr.mxu0 0.0
        %2727 = vmatpush1.msra.mxu0 0.0
        %2728 = vmatprep.subr.mxu0 0.0
        %2729 = vmatpush1.msra.mxu0 0.0
        %2730 = vmatprep.subr.mxu0 0.0
        %2731 = vmatpush1.msra.mxu0 0.0
        %2732 = vmatprep.subr.mxu0 0.0
        %2733 = vmatpush1.msra.mxu0 0.0
        %2734 = vmatprep.subr.mxu0 0.0
        %2735 = vmatpush1.msra.mxu0 0.0
        %2736 = vmatprep.subr.mxu0 0.0
        %2737 = vmatpush1.msra.mxu0 0.0
        %2738 = vmatprep.subr.mxu0 0.0
        %2739 = vmatpush1.msra.mxu0 0.0
        %2740 = vmatprep.subr.mxu0 0.0
        %2741 = vmatpush1.msra.mxu0 0.0
        %2742 = vmatprep.subr.mxu0 0.0
        %2743 = vmatpush1.msra.mxu0 0.0
        %2744 = vmatprep.subr.mxu0 0.0
        %2745 = vmatpush1.msra.mxu0 0.0
        %2746 = vmatprep.subr.mxu0 0.0
        %2747 = vmatpush1.msra.mxu0 0.0
        %2748 = vmatprep.subr.mxu0 0.0
        %2749 = vmatpush1.msra.mxu0 0.0
        %2750 = vmatprep.subr.mxu0 0.0
        %2751 = vmatpush1.msra.mxu0 0.0
        %2752 = vmatprep.subr.mxu0 0.0
        %2753 = vmatpush1.msra.mxu0 0.0
        %2754 = vmatprep.subr.mxu0 0.0
        %2755 = vmatpush1.msra.mxu0 0.0
        %2756 = vmatprep.subr.mxu0 0.0
        %2757 = vmatpush1.msra.mxu0 0.0
        %2758 = vmatprep.subr.mxu0 0.0
        %2759 = vmatpush1.msra.mxu0 0.0
        %2760 = vmatprep.subr.mxu0 0.0
        %2761 = vmatpush1.msra.mxu0 0.0
        %2762 = vmatprep.subr.mxu0 0.0
        %2763 = vmatpush1.msra.mxu0 0.0
        %2764 = vmatprep.subr.mxu0 0.0
        %2765 = vmatpush1.msra.mxu0 0.0
        %2766 = vmatprep.subr.mxu0 0.0
        %2767 = vmatpush1.msra.mxu0 0.0
        %2768 = vmatprep.subr.mxu0 0.0
        %2769 = vmatpush1.msra.mxu0 0.0
        %2770 = vmatprep.subr.mxu0 0.0
        %2771 = vmatpush1.msra.mxu0 0.0
        %2772 = vmatprep.subr.mxu0 0.0
        %2773 = vmatpush1.msra.mxu0 0.0
        %2774 = vmatprep.subr.mxu0 0.0
        %2775 = vmatpush1.msra.mxu0 0.0
        %2776 = vmatprep.mubr.f32.mxu0 0.0
        %v2777 = vand.u32 %v2556, 4294901760
        %v2778 = vsub.f32 %v2556, %v2777
        %2779 = vmatmul.mubr.f32.gmra.mrb[0].mxu0 %v2778
        %v2780 = vpop.f32.mrb[0].mxu0
        %v2781 = vadd.f32 %v2707, %v2780
        %v2782 = vpop.f32.mrb[0].mxu0
        %2783 = vdwg.mxu0
        %2784 = vmatprep.subr.mxu0 0.0
        %v2785 = vand.u32 %v2067, 4294901760
        %2786 = vmatpush1.msra.mxu0 %v2785
        %2787 = vmatprep.subr.mxu0 0.0
        %2788 = vmatpush1.msra.mxu0 0.0
        %2789 = vmatprep.subr.mxu0 0.0
        %2790 = vmatpush1.msra.mxu0 0.0
        %2791 = vmatprep.subr.mxu0 0.0
        %2792 = vmatpush1.msra.mxu0 0.0
        %2793 = vmatprep.subr.mxu0 0.0
        %2794 = vmatpush1.msra.mxu0 0.0
        %2795 = vmatprep.subr.mxu0 0.0
        %2796 = vmatpush1.msra.mxu0 0.0
        %2797 = vmatprep.subr.mxu0 0.0
        %2798 = vmatpush1.msra.mxu0 0.0
        %2799 = vmatprep.subr.mxu0 0.0
        %2800 = vmatpush1.msra.mxu0 0.0
        %2801 = vmatprep.subr.mxu0 0.0
        %2802 = vmatpush1.msra.mxu0 0.0
        %2803 = vmatprep.subr.mxu0 0.0
        %2804 = vmatpush1.msra.mxu0 0.0
        %2805 = vmatprep.subr.mxu0 0.0
        %2806 = vmatpush1.msra.mxu0 0.0
        %2807 = vmatprep.subr.mxu0 0.0
        %2808 = vmatpush1.msra.mxu0 0.0
        %2809 = vmatprep.subr.mxu0 0.0
        %2810 = vmatpush1.msra.mxu0 0.0
        %2811 = vmatprep.subr.mxu0 0.0
        %2812 = vmatpush1.msra.mxu0 0.0
        %2813 = vmatprep.subr.mxu0 0.0
        %2814 = vmatpush1.msra.mxu0 0.0
        %2815 = vmatprep.subr.mxu0 0.0
        %2816 = vmatpush1.msra.mxu0 0.0
        %2817 = vmatprep.subr.mxu0 0.0
        %2818 = vmatpush1.msra.mxu0 0.0
        %2819 = vmatprep.subr.mxu0 0.0
        %2820 = vmatpush1.msra.mxu0 0.0
        %2821 = vmatprep.subr.mxu0 0.0
        %2822 = vmatpush1.msra.mxu0 0.0
        %2823 = vmatprep.subr.mxu0 0.0
        %2824 = vmatpush1.msra.mxu0 0.0
        %2825 = vmatprep.subr.mxu0 0.0
        %2826 = vmatpush1.msra.mxu0 0.0
        %2827 = vmatprep.subr.mxu0 0.0
        %2828 = vmatpush1.msra.mxu0 0.0
        %2829 = vmatprep.subr.mxu0 0.0
        %2830 = vmatpush1.msra.mxu0 0.0
        %2831 = vmatprep.subr.mxu0 0.0
        %2832 = vmatpush1.msra.mxu0 0.0
        %2833 = vmatprep.subr.mxu0 0.0
        %2834 = vmatpush1.msra.mxu0 0.0
        %2835 = vmatprep.subr.mxu0 0.0
        %2836 = vmatpush1.msra.mxu0 0.0
        %2837 = vmatprep.subr.mxu0 0.0
        %2838 = vmatpush1.msra.mxu0 0.0
        %2839 = vmatprep.subr.mxu0 0.0
        %2840 = vmatpush1.msra.mxu0 0.0
        %2841 = vmatprep.subr.mxu0 0.0
        %2842 = vmatpush1.msra.mxu0 0.0
        %2843 = vmatprep.subr.mxu0 0.0
        %2844 = vmatpush1.msra.mxu0 0.0
        %2845 = vmatprep.subr.mxu0 0.0
        %2846 = vmatpush1.msra.mxu0 0.0
        %2847 = vmatprep.subr.mxu0 0.0
        %2848 = vmatpush1.msra.mxu0 0.0
        %2849 = vmatprep.mubr.f32.mxu0 0.0
        %v2850 = vand.u32 %v2556, 4294901760
        %v2851 = vsub.f32 %v2556, %v2850
        %v2852 = vand.u32 %v2851, 4294901760
        %2853 = vmatmul.mubr.f32.gmra.mrb[0].mxu0 %v2852
        %v2854 = vpop.f32.mrb[0].mxu0
        %v2855 = vadd.f32 %v2781, %v2854
        %v2856 = vpop.f32.mrb[0].mxu0
        %2857 = vdwg.mxu0
        %2858 = vmatprep.subr.mxu0 0.0
        %v2859 = vand.u32 %v2067, 4294901760
        %v2860 = vsub.f32 %v2067, %v2859
        %v2861 = vand.u32 %v2860, 4294901760
        %2862 = vmatpush1.msra.mxu0 %v2861
        %2863 = vmatprep.subr.mxu0 0.0
        %2864 = vmatpush1.msra.mxu0 0.0
        %2865 = vmatprep.subr.mxu0 0.0
        %2866 = vmatpush1.msra.mxu0 0.0
        %2867 = vmatprep.subr.mxu0 0.0
        %2868 = vmatpush1.msra.mxu0 0.0
        %2869 = vmatprep.subr.mxu0 0.0
        %2870 = vmatpush1.msra.mxu0 0.0
        %2871 = vmatprep.subr.mxu0 0.0
        %2872 = vmatpush1.msra.mxu0 0.0
        %2873 = vmatprep.subr.mxu0 0.0
        %2874 = vmatpush1.msra.mxu0 0.0
        %2875 = vmatprep.subr.mxu0 0.0
        %2876 = vmatpush1.msra.mxu0 0.0
        %2877 = vmatprep.subr.mxu0 0.0
        %2878 = vmatpush1.msra.mxu0 0.0
        %2879 = vmatprep.subr.mxu0 0.0
        %2880 = vmatpush1.msra.mxu0 0.0
        %2881 = vmatprep.subr.mxu0 0.0
        %2882 = vmatpush1.msra.mxu0 0.0
        %2883 = vmatprep.subr.mxu0 0.0
        %2884 = vmatpush1.msra.mxu0 0.0
        %2885 = vmatprep.subr.mxu0 0.0
        %2886 = vmatpush1.msra.mxu0 0.0
        %2887 = vmatprep.subr.mxu0 0.0
        %2888 = vmatpush1.msra.mxu0 0.0
        %2889 = vmatprep.subr.mxu0 0.0
        %2890 = vmatpush1.msra.mxu0 0.0
        %2891 = vmatprep.subr.mxu0 0.0
        %2892 = vmatpush1.msra.mxu0 0.0
        %2893 = vmatprep.subr.mxu0 0.0
        %2894 = vmatpush1.msra.mxu0 0.0
        %2895 = vmatprep.subr.mxu0 0.0
        %2896 = vmatpush1.msra.mxu0 0.0
        %2897 = vmatprep.subr.mxu0 0.0
        %2898 = vmatpush1.msra.mxu0 0.0
        %2899 = vmatprep.subr.mxu0 0.0
        %2900 = vmatpush1.msra.mxu0 0.0
        %2901 = vmatprep.subr.mxu0 0.0
        %2902 = vmatpush1.msra.mxu0 0.0
        %2903 = vmatprep.subr.mxu0 0.0
        %2904 = vmatpush1.msra.mxu0 0.0
        %2905 = vmatprep.subr.mxu0 0.0
        %2906 = vmatpush1.msra.mxu0 0.0
        %2907 = vmatprep.subr.mxu0 0.0
        %2908 = vmatpush1.msra.mxu0 0.0
        %2909 = vmatprep.subr.mxu0 0.0
        %2910 = vmatpush1.msra.mxu0 0.0
        %2911 = vmatprep.subr.mxu0 0.0
        %2912 = vmatpush1.msra.mxu0 0.0
        %2913 = vmatprep.subr.mxu0 0.0
        %2914 = vmatpush1.msra.mxu0 0.0
        %2915 = vmatprep.subr.mxu0 0.0
        %2916 = vmatpush1.msra.mxu0 0.0
        %2917 = vmatprep.subr.mxu0 0.0
        %2918 = vmatpush1.msra.mxu0 0.0
        %2919 = vmatprep.subr.mxu0 0.0
        %2920 = vmatpush1.msra.mxu0 0.0
        %2921 = vmatprep.subr.mxu0 0.0
        %2922 = vmatpush1.msra.mxu0 0.0
        %2923 = vmatprep.subr.mxu0 0.0
        %2924 = vmatpush1.msra.mxu0 0.0
        %2925 = vmatprep.mubr.f32.mxu0 0.0
        %v2926 = vand.u32 %v2556, 4294901760
        %2927 = vmatmul.mubr.f32.gmra.mrb[0].mxu0 %v2926
        %v2928 = vpop.f32.mrb[0].mxu0
        %v2929 = vadd.f32 %v2855, %v2928
        %v2930 = vpop.f32.mrb[0].mxu0
        %2931 = vdwg.mxu0
        %2932 = vmatprep.subr.mxu0 0.0
        %v2933 = vand.u32 %v2067, 4294901760
        %2934 = vmatpush1.msra.mxu0 %v2933
        %2935 = vmatprep.subr.mxu0 0.0
        %2936 = vmatpush1.msra.mxu0 0.0
        %2937 = vmatprep.subr.mxu0 0.0
        %2938 = vmatpush1.msra.mxu0 0.0
        %2939 = vmatprep.subr.mxu0 0.0
        %2940 = vmatpush1.msra.mxu0 0.0
        %2941 = vmatprep.subr.mxu0 0.0
        %2942 = vmatpush1.msra.mxu0 0.0
        %2943 = vmatprep.subr.mxu0 0.0
        %2944 = vmatpush1.msra.mxu0 0.0
        %2945 = vmatprep.subr.mxu0 0.0
        %2946 = vmatpush1.msra.mxu0 0.0
        %2947 = vmatprep.subr.mxu0 0.0
        %2948 = vmatpush1.msra.mxu0 0.0
        %2949 = vmatprep.subr.mxu0 0.0
        %2950 = vmatpush1.msra.mxu0 0.0
        %2951 = vmatprep.subr.mxu0 0.0
        %2952 = vmatpush1.msra.mxu0 0.0
        %2953 = vmatprep.subr.mxu0 0.0
        %2954 = vmatpush1.msra.mxu0 0.0
        %2955 = vmatprep.subr.mxu0 0.0
        %2956 = vmatpush1.msra.mxu0 0.0
        %2957 = vmatprep.subr.mxu0 0.0
        %2958 = vmatpush1.msra.mxu0 0.0
        %2959 = vmatprep.subr.mxu0 0.0
        %2960 = vmatpush1.msra.mxu0 0.0
        %2961 = vmatprep.subr.mxu0 0.0
        %2962 = vmatpush1.msra.mxu0 0.0
        %2963 = vmatprep.subr.mxu0 0.0
        %2964 = vmatpush1.msra.mxu0 0.0
        %2965 = vmatprep.subr.mxu0 0.0
        %2966 = vmatpush1.msra.mxu0 0.0
        %2967 = vmatprep.subr.mxu0 0.0
        %2968 = vmatpush1.msra.mxu0 0.0
        %2969 = vmatprep.subr.mxu0 0.0
        %2970 = vmatpush1.msra.mxu0 0.0
        %2971 = vmatprep.subr.mxu0 0.0
        %2972 = vmatpush1.msra.mxu0 0.0
        %2973 = vmatprep.subr.mxu0 0.0
        %2974 = vmatpush1.msra.mxu0 0.0
        %2975 = vmatprep.subr.mxu0 0.0
        %2976 = vmatpush1.msra.mxu0 0.0
        %2977 = vmatprep.subr.mxu0 0.0
        %2978 = vmatpush1.msra.mxu0 0.0
        %2979 = vmatprep.subr.mxu0 0.0
        %2980 = vmatpush1.msra.mxu0 0.0
        %2981 = vmatprep.subr.mxu0 0.0
        %2982 = vmatpush1.msra.mxu0 0.0
        %2983 = vmatprep.subr.mxu0 0.0
        %2984 = vmatpush1.msra.mxu0 0.0
        %2985 = vmatprep.subr.mxu0 0.0
        %2986 = vmatpush1.msra.mxu0 0.0
        %2987 = vmatprep.subr.mxu0 0.0
        %2988 = vmatpush1.msra.mxu0 0.0
        %2989 = vmatprep.subr.mxu0 0.0
        %2990 = vmatpush1.msra.mxu0 0.0
        %2991 = vmatprep.subr.mxu0 0.0
        %2992 = vmatpush1.msra.mxu0 0.0
        %2993 = vmatprep.subr.mxu0 0.0
        %2994 = vmatpush1.msra.mxu0 0.0
        %2995 = vmatprep.subr.mxu0 0.0
        %2996 = vmatpush1.msra.mxu0 0.0
        %2997 = vmatprep.mubr.f32.mxu0 0.0
        %v2998 = vand.u32 %v2556, 4294901760
        %2999 = vmatmul.mubr.f32.gmra.mrb[0].mxu0 %v2998
        %v3000 = vpop.f32.mrb[0].mxu0
        %v3001 = vadd.f32 %v2929, %v3000
        %v3002 = vpop.f32.mrb[0].mxu0
        %3003 = vdwg.mxu0
        %v3004 = vadd.f32 %v2554, %v3001
        %3005 = vst.msk [vmem:[#allocation5] sm:$0xff] %vm1082, %v3004
        %3006 = vst.msk [vmem:[#allocation3] sm:$0xff] %vm2546, %v2528
        // Predicated region
        $region97: #{tpu_custom_call.1} parent=63 // pred_check
          %p3007 = pneg %p559
        $region98: #{tpu_custom_call.1} parent=63 // pred_check_branch
          %3009 = sbr.rel (%p3007) target = $region100
        $region99: #{tpu_custom_call.1} parent=63 // pred_region
          %v3010 = vld [vmem:[#allocation5] sm:$0xff]
          %v3011 = vld [vmem:[#allocation4] sm:$0xff]
          %3013 = vset.pattern.permute.xlu0 0
          %3014 = vperm.xlu0 %3013, %v3011
          %v3015 = vpop.permute.xlu0 %3014
          %v3017 = vrcp.pop %v3015
          %v3018 = vmul.f32 %v3010, %v3017
          %v3019 = vld [vmem:[%s9] sm:$0xff]
          %v3020 = vld [vmem:[%s9 + $0x8] sm:$0xff]
          %v3021 = vld [vmem:[%s9 + $0x10] sm:$0xff]
          %v3022 = vld [vmem:[%s9 + $0x18] sm:$0xff]
          %v3023 = vld [vmem:[%s10] sm:$0x1]
          %v3025 = vlaneseq
          %v3026 = vshrl.u32 %v3025, 7
          %v3027 = vsub.s32 0, %v3026
          %v3028 = vrot.slane %v3023, %v3027
          %v3031 = vsel %vm1082, %v3018, 0
          %3033 = vmatprep.subr.mxu0 0.0
          %v3034 = vand.u32 %v3019, 4294901760
          %3035 = vmatpush1.msra.mxu0 %v3034
          %3036 = vmatprep.subr.mxu0 0.0
          %v3037 = vand.u32 %v3020, 4294901760
          %3038 = vmatpush1.msra.mxu0 %v3037
          %3039 = vmatprep.subr.mxu0 0.0
          %v3040 = vand.u32 %v3021, 4294901760
          %3041 = vmatpush1.msra.mxu0 %v3040
          %3042 = vmatprep.subr.mxu0 0.0
          %v3043 = vand.u32 %v3022, 4294901760
          %3044 = vmatpush1.msra.mxu0 %v3043
          %3045 = vmatprep.subr.mxu0 0.0
          %3046 = vmatpush1.msra.mxu0 0.0
          %3047 = vmatprep.subr.mxu0 0.0
          %3048 = vmatpush1.msra.mxu0 0.0
          %3049 = vmatprep.subr.mxu0 0.0
          %3050 = vmatpush1.msra.mxu0 0.0
          %3051 = vmatprep.subr.mxu0 0.0
          %3052 = vmatpush1.msra.mxu0 0.0
          %3053 = vmatprep.subr.mxu0 0.0
          %3054 = vmatpush1.msra.mxu0 0.0
          %3055 = vmatprep.subr.mxu0 0.0
          %3056 = vmatpush1.msra.mxu0 0.0
          %3057 = vmatprep.subr.mxu0 0.0
          %3058 = vmatpush1.msra.mxu0 0.0
          %3059 = vmatprep.subr.mxu0 0.0
          %3060 = vmatpush1.msra.mxu0 0.0
          %3061 = vmatprep.subr.mxu0 0.0
          %3062 = vmatpush1.msra.mxu0 0.0
          %3063 = vmatprep.subr.mxu0 0.0
          %3064 = vmatpush1.msra.mxu0 0.0
          %3065 = vmatprep.subr.mxu0 0.0
          %3066 = vmatpush1.msra.mxu0 0.0
          %3067 = vmatprep.subr.mxu0 0.0
          %3068 = vmatpush1.msra.mxu0 0.0
          %3069 = vmatprep.subr.mxu0 0.0
          %3070 = vmatpush1.msra.mxu0 0.0
          %3071 = vmatprep.subr.mxu0 0.0
          %3072 = vmatpush1.msra.mxu0 0.0
          %3073 = vmatprep.subr.mxu0 0.0
          %3074 = vmatpush1.msra.mxu0 0.0
          %3075 = vmatprep.subr.mxu0 0.0
          %3076 = vmatpush1.msra.mxu0 0.0
          %3077 = vmatprep.subr.mxu0 0.0
          %3078 = vmatpush1.msra.mxu0 0.0
          %3079 = vmatprep.subr.mxu0 0.0
          %3080 = vmatpush1.msra.mxu0 0.0
          %3081 = vmatprep.subr.mxu0 0.0
          %3082 = vmatpush1.msra.mxu0 0.0
          %3083 = vmatprep.subr.mxu0 0.0
          %3084 = vmatpush1.msra.mxu0 0.0
          %3085 = vmatprep.subr.mxu0 0.0
          %3086 = vmatpush1.msra.mxu0 0.0
          %3087 = vmatprep.subr.mxu0 0.0
          %3088 = vmatpush1.msra.mxu0 0.0
          %3089 = vmatprep.subr.mxu0 0.0
          %3090 = vmatpush1.msra.mxu0 0.0
          %3091 = vmatprep.subr.mxu0 0.0
          %3092 = vmatpush1.msra.mxu0 0.0
          %3093 = vmatprep.subr.mxu0 0.0
          %3094 = vmatpush1.msra.mxu0 0.0
          %3095 = vmatprep.subr.mxu0 0.0
          %3096 = vmatpush1.msra.mxu0 0.0
          %3097 = vmatprep.subr.mxu0 0.0
          %3098 = vmatpush1.msra.mxu0 0.0
          %3099 = vmatprep.subr.mxu0 0.0
          %3100 = vmatpush1.msra.mxu0 0.0
          %3101 = vmatprep.mubr.f32.mxu0 0.0
          %v3102 = vand.u32 %v3031, 4294901760
          %v3103 = vsub.f32 %v3031, %v3102
          %v3104 = vand.u32 %v3103, 4294901760
          %v3105 = vsub.f32 %v3103, %v3104
          %v3106 = vand.u32 %v3105, 4294901760
          %3107 = vmatmul.mubr.f32.gmra.mrb[0].mxu0 %v3106
          %v3108 = vpop.f32.mrb[0].mxu0
          %v3109 = vadd.f32 %v3028, %v3108
          %v3110 = vpop.f32.mrb[0].mxu0
          %3111 = vdwg.mxu0
          %3112 = vmatprep.subr.mxu0 0.0
          %v3113 = vand.u32 %v3019, 4294901760
          %v3114 = vsub.f32 %v3019, %v3113
          %v3115 = vand.u32 %v3114, 4294901760
          %v3116 = vsub.f32 %v3114, %v3115
          %v3117 = vand.u32 %v3116, 4294901760
          %3118 = vmatpush1.msra.mxu0 %v3117
          %3119 = vmatprep.subr.mxu0 0.0
          %v3120 = vand.u32 %v3020, 4294901760
          %v3121 = vsub.f32 %v3020, %v3120
          %v3122 = vand.u32 %v3121, 4294901760
          %v3123 = vsub.f32 %v3121, %v3122
          %v3124 = vand.u32 %v3123, 4294901760
          %3125 = vmatpush1.msra.mxu0 %v3124
          %3126 = vmatprep.subr.mxu0 0.0
          %v3127 = vand.u32 %v3021, 4294901760
          %v3128 = vsub.f32 %v3021, %v3127
          %v3129 = vand.u32 %v3128, 4294901760
          %v3130 = vsub.f32 %v3128, %v3129
          %v3131 = vand.u32 %v3130, 4294901760
          %3132 = vmatpush1.msra.mxu0 %v3131
          %3133 = vmatprep.subr.mxu0 0.0
          %v3134 = vand.u32 %v3022, 4294901760
          %v3135 = vsub.f32 %v3022, %v3134
          %v3136 = vand.u32 %v3135, 4294901760
          %v3137 = vsub.f32 %v3135, %v3136
          %v3138 = vand.u32 %v3137, 4294901760
          %3139 = vmatpush1.msra.mxu0 %v3138
          %3140 = vmatprep.subr.mxu0 0.0
          %3141 = vmatpush1.msra.mxu0 0.0
          %3142 = vmatprep.subr.mxu0 0.0
          %3143 = vmatpush1.msra.mxu0 0.0
          %3144 = vmatprep.subr.mxu0 0.0
          %3145 = vmatpush1.msra.mxu0 0.0
          %3146 = vmatprep.subr.mxu0 0.0
          %3147 = vmatpush1.msra.mxu0 0.0
          %3148 = vmatprep.subr.mxu0 0.0
          %3149 = vmatpush1.msra.mxu0 0.0
          %3150 = vmatprep.subr.mxu0 0.0
          %3151 = vmatpush1.msra.mxu0 0.0
          %3152 = vmatprep.subr.mxu0 0.0
          %3153 = vmatpush1.msra.mxu0 0.0
          %3154 = vmatprep.subr.mxu0 0.0
          %3155 = vmatpush1.msra.mxu0 0.0
          %3156 = vmatprep.subr.mxu0 0.0
          %3157 = vmatpush1.msra.mxu0 0.0
          %3158 = vmatprep.subr.mxu0 0.0
          %3159 = vmatpush1.msra.mxu0 0.0
          %3160 = vmatprep.subr.mxu0 0.0
          %3161 = vmatpush1.msra.mxu0 0.0
          %3162 = vmatprep.subr.mxu0 0.0
          %3163 = vmatpush1.msra.mxu0 0.0
          %3164 = vmatprep.subr.mxu0 0.0
          %3165 = vmatpush1.msra.mxu0 0.0
          %3166 = vmatprep.subr.mxu0 0.0
          %3167 = vmatpush1.msra.mxu0 0.0
          %3168 = vmatprep.subr.mxu0 0.0
          %3169 = vmatpush1.msra.mxu0 0.0
          %3170 = vmatprep.subr.mxu0 0.0
          %3171 = vmatpush1.msra.mxu0 0.0
          %3172 = vmatprep.subr.mxu0 0.0
          %3173 = vmatpush1.msra.mxu0 0.0
          %3174 = vmatprep.subr.mxu0 0.0
          %3175 = vmatpush1.msra.mxu0 0.0
          %3176 = vmatprep.subr.mxu0 0.0
          %3177 = vmatpush1.msra.mxu0 0.0
          %3178 = vmatprep.subr.mxu0 0.0
          %3179 = vmatpush1.msra.mxu0 0.0
          %3180 = vmatprep.subr.mxu0 0.0
          %3181 = vmatpush1.msra.mxu0 0.0
          %3182 = vmatprep.subr.mxu0 0.0
          %3183 = vmatpush1.msra.mxu0 0.0
          %3184 = vmatprep.subr.mxu0 0.0
          %3185 = vmatpush1.msra.mxu0 0.0
          %3186 = vmatprep.subr.mxu0 0.0
          %3187 = vmatpush1.msra.mxu0 0.0
          %3188 = vmatprep.subr.mxu0 0.0
          %3189 = vmatpush1.msra.mxu0 0.0
          %3190 = vmatprep.subr.mxu0 0.0
          %3191 = vmatpush1.msra.mxu0 0.0
          %3192 = vmatprep.subr.mxu0 0.0
          %3193 = vmatpush1.msra.mxu0 0.0
          %3194 = vmatprep.subr.mxu0 0.0
          %3195 = vmatpush1.msra.mxu0 0.0
          %3196 = vmatprep.mubr.f32.mxu0 0.0
          %v3197 = vand.u32 %v3031, 4294901760
          %3198 = vmatmul.mubr.f32.gmra.mrb[0].mxu0 %v3197
          %v3199 = vpop.f32.mrb[0].mxu0
          %v3200 = vadd.f32 %v3109, %v3199
          %v3201 = vpop.f32.mrb[0].mxu0
          %3202 = vdwg.mxu0
          %3203 = vmatprep.subr.mxu0 0.0
          %v3204 = vand.u32 %v3019, 4294901760
          %v3205 = vsub.f32 %v3019, %v3204
          %3206 = vmatpush1.msra.mxu0 %v3205
          %3207 = vmatprep.subr.mxu0 0.0
          %v3208 = vand.u32 %v3020, 4294901760
          %v3209 = vsub.f32 %v3020, %v3208
          %3210 = vmatpush1.msra.mxu0 %v3209
          %3211 = vmatprep.subr.mxu0 0.0
          %v3212 = vand.u32 %v3021, 4294901760
          %v3213 = vsub.f32 %v3021, %v3212
          %3214 = vmatpush1.msra.mxu0 %v3213
          %3215 = vmatprep.subr.mxu0 0.0
          %v3216 = vand.u32 %v3022, 4294901760
          %v3217 = vsub.f32 %v3022, %v3216
          %3218 = vmatpush1.msra.mxu0 %v3217
          %3219 = vmatprep.subr.mxu0 0.0
          %3220 = vmatpush1.msra.mxu0 0.0
          %3221 = vmatprep.subr.mxu0 0.0
          %3222 = vmatpush1.msra.mxu0 0.0
          %3223 = vmatprep.subr.mxu0 0.0
          %3224 = vmatpush1.msra.mxu0 0.0
          %3225 = vmatprep.subr.mxu0 0.0
          %3226 = vmatpush1.msra.mxu0 0.0
          %3227 = vmatprep.subr.mxu0 0.0
          %3228 = vmatpush1.msra.mxu0 0.0
          %3229 = vmatprep.subr.mxu0 0.0
          %3230 = vmatpush1.msra.mxu0 0.0
          %3231 = vmatprep.subr.mxu0 0.0
          %3232 = vmatpush1.msra.mxu0 0.0
          %3233 = vmatprep.subr.mxu0 0.0
          %3234 = vmatpush1.msra.mxu0 0.0
          %3235 = vmatprep.subr.mxu0 0.0
          %3236 = vmatpush1.msra.mxu0 0.0
          %3237 = vmatprep.subr.mxu0 0.0
          %3238 = vmatpush1.msra.mxu0 0.0
          %3239 = vmatprep.subr.mxu0 0.0
          %3240 = vmatpush1.msra.mxu0 0.0
          %3241 = vmatprep.subr.mxu0 0.0
          %3242 = vmatpush1.msra.mxu0 0.0
          %3243 = vmatprep.subr.mxu0 0.0
          %3244 = vmatpush1.msra.mxu0 0.0
          %3245 = vmatprep.subr.mxu0 0.0
          %3246 = vmatpush1.msra.mxu0 0.0
          %3247 = vmatprep.subr.mxu0 0.0
          %3248 = vmatpush1.msra.mxu0 0.0
          %3249 = vmatprep.subr.mxu0 0.0
          %3250 = vmatpush1.msra.mxu0 0.0
          %3251 = vmatprep.subr.mxu0 0.0
          %3252 = vmatpush1.msra.mxu0 0.0
          %3253 = vmatprep.subr.mxu0 0.0
          %3254 = vmatpush1.msra.mxu0 0.0
          %3255 = vmatprep.subr.mxu0 0.0
          %3256 = vmatpush1.msra.mxu0 0.0
          %3257 = vmatprep.subr.mxu0 0.0
          %3258 = vmatpush1.msra.mxu0 0.0
          %3259 = vmatprep.subr.mxu0 0.0
          %3260 = vmatpush1.msra.mxu0 0.0
          %3261 = vmatprep.subr.mxu0 0.0
          %3262 = vmatpush1.msra.mxu0 0.0
          %3263 = vmatprep.subr.mxu0 0.0
          %3264 = vmatpush1.msra.mxu0 0.0
          %3265 = vmatprep.subr.mxu0 0.0
          %3266 = vmatpush1.msra.mxu0 0.0
          %3267 = vmatprep.subr.mxu0 0.0
          %3268 = vmatpush1.msra.mxu0 0.0
          %3269 = vmatprep.subr.mxu0 0.0
          %3270 = vmatpush1.msra.mxu0 0.0
          %3271 = vmatprep.subr.mxu0 0.0
          %3272 = vmatpush1.msra.mxu0 0.0
          %3273 = vmatprep.subr.mxu0 0.0
          %3274 = vmatpush1.msra.mxu0 0.0
          %3275 = vmatprep.mubr.f32.mxu0 0.0
          %v3276 = vand.u32 %v3031, 4294901760
          %v3277 = vsub.f32 %v3031, %v3276
          %3278 = vmatmul.mubr.f32.gmra.mrb[0].mxu0 %v3277
          %v3279 = vpop.f32.mrb[0].mxu0
          %v3280 = vadd.f32 %v3200, %v3279
          %v3281 = vpop.f32.mrb[0].mxu0
          %3282 = vdwg.mxu0
          %3283 = vmatprep.subr.mxu0 0.0
          %v3284 = vand.u32 %v3019, 4294901760
          %3285 = vmatpush1.msra.mxu0 %v3284
          %3286 = vmatprep.subr.mxu0 0.0
          %v3287 = vand.u32 %v3020, 4294901760
          %3288 = vmatpush1.msra.mxu0 %v3287
          %3289 = vmatprep.subr.mxu0 0.0
          %v3290 = vand.u32 %v3021, 4294901760
          %3291 = vmatpush1.msra.mxu0 %v3290
          %3292 = vmatprep.subr.mxu0 0.0
          %v3293 = vand.u32 %v3022, 4294901760
          %3294 = vmatpush1.msra.mxu0 %v3293
          %3295 = vmatprep.subr.mxu0 0.0
          %3296 = vmatpush1.msra.mxu0 0.0
          %3297 = vmatprep.subr.mxu0 0.0
          %3298 = vmatpush1.msra.mxu0 0.0
          %3299 = vmatprep.subr.mxu0 0.0
          %3300 = vmatpush1.msra.mxu0 0.0
          %3301 = vmatprep.subr.mxu0 0.0
          %3302 = vmatpush1.msra.mxu0 0.0
          %3303 = vmatprep.subr.mxu0 0.0
          %3304 = vmatpush1.msra.mxu0 0.0
          %3305 = vmatprep.subr.mxu0 0.0
          %3306 = vmatpush1.msra.mxu0 0.0
          %3307 = vmatprep.subr.mxu0 0.0
          %3308 = vmatpush1.msra.mxu0 0.0
          %3309 = vmatprep.subr.mxu0 0.0
          %3310 = vmatpush1.msra.mxu0 0.0
          %3311 = vmatprep.subr.mxu0 0.0
          %3312 = vmatpush1.msra.mxu0 0.0
          %3313 = vmatprep.subr.mxu0 0.0
          %3314 = vmatpush1.msra.mxu0 0.0
          %3315 = vmatprep.subr.mxu0 0.0
          %3316 = vmatpush1.msra.mxu0 0.0
          %3317 = vmatprep.subr.mxu0 0.0
          %3318 = vmatpush1.msra.mxu0 0.0
          %3319 = vmatprep.subr.mxu0 0.0
          %3320 = vmatpush1.msra.mxu0 0.0
          %3321 = vmatprep.subr.mxu0 0.0
          %3322 = vmatpush1.msra.mxu0 0.0
          %3323 = vmatprep.subr.mxu0 0.0
          %3324 = vmatpush1.msra.mxu0 0.0
          %3325 = vmatprep.subr.mxu0 0.0
          %3326 = vmatpush1.msra.mxu0 0.0
          %3327 = vmatprep.subr.mxu0 0.0
          %3328 = vmatpush1.msra.mxu0 0.0
          %3329 = vmatprep.subr.mxu0 0.0
          %3330 = vmatpush1.msra.mxu0 0.0
          %3331 = vmatprep.subr.mxu0 0.0
          %3332 = vmatpush1.msra.mxu0 0.0
          %3333 = vmatprep.subr.mxu0 0.0
          %3334 = vmatpush1.msra.mxu0 0.0
          %3335 = vmatprep.subr.mxu0 0.0
          %3336 = vmatpush1.msra.mxu0 0.0
          %3337 = vmatprep.subr.mxu0 0.0
          %3338 = vmatpush1.msra.mxu0 0.0
          %3339 = vmatprep.subr.mxu0 0.0
          %3340 = vmatpush1.msra.mxu0 0.0
          %3341 = vmatprep.subr.mxu0 0.0
          %3342 = vmatpush1.msra.mxu0 0.0
          %3343 = vmatprep.subr.mxu0 0.0
          %3344 = vmatpush1.msra.mxu0 0.0
          %3345 = vmatprep.subr.mxu0 0.0
          %3346 = vmatpush1.msra.mxu0 0.0
          %3347 = vmatprep.subr.mxu0 0.0
          %3348 = vmatpush1.msra.mxu0 0.0
          %3349 = vmatprep.subr.mxu0 0.0
          %3350 = vmatpush1.msra.mxu0 0.0
          %3351 = vmatprep.mubr.f32.mxu0 0.0
          %v3352 = vand.u32 %v3031, 4294901760
          %v3353 = vsub.f32 %v3031, %v3352
          %v3354 = vand.u32 %v3353, 4294901760
          %3355 = vmatmul.mubr.f32.gmra.mrb[0].mxu0 %v3354
          %v3356 = vpop.f32.mrb[0].mxu0
          %v3357 = vadd.f32 %v3280, %v3356
          %v3358 = vpop.f32.mrb[0].mxu0
          %3359 = vdwg.mxu0
          %3360 = vmatprep.subr.mxu0 0.0
          %v3361 = vand.u32 %v3019, 4294901760
          %v3362 = vsub.f32 %v3019, %v3361
          %v3363 = vand.u32 %v3362, 4294901760
          %3364 = vmatpush1.msra.mxu0 %v3363
          %3365 = vmatprep.subr.mxu0 0.0
          %v3366 = vand.u32 %v3020, 4294901760
          %v3367 = vsub.f32 %v3020, %v3366
          %v3368 = vand.u32 %v3367, 4294901760
          %3369 = vmatpush1.msra.mxu0 %v3368
          %3370 = vmatprep.subr.mxu0 0.0
          %v3371 = vand.u32 %v3021, 4294901760
          %v3372 = vsub.f32 %v3021, %v3371
          %v3373 = vand.u32 %v3372, 4294901760
          %3374 = vmatpush1.msra.mxu0 %v3373
          %3375 = vmatprep.subr.mxu0 0.0
          %v3376 = vand.u32 %v3022, 4294901760
          %v3377 = vsub.f32 %v3022, %v3376
          %v3378 = vand.u32 %v3377, 4294901760
          %3379 = vmatpush1.msra.mxu0 %v3378
          %3380 = vmatprep.subr.mxu0 0.0
          %3381 = vmatpush1.msra.mxu0 0.0
          %3382 = vmatprep.subr.mxu0 0.0
          %3383 = vmatpush1.msra.mxu0 0.0
          %3384 = vmatprep.subr.mxu0 0.0
          %3385 = vmatpush1.msra.mxu0 0.0
          %3386 = vmatprep.subr.mxu0 0.0
          %3387 = vmatpush1.msra.mxu0 0.0
          %3388 = vmatprep.subr.mxu0 0.0
          %3389 = vmatpush1.msra.mxu0 0.0
          %3390 = vmatprep.subr.mxu0 0.0
          %3391 = vmatpush1.msra.mxu0 0.0
          %3392 = vmatprep.subr.mxu0 0.0
          %3393 = vmatpush1.msra.mxu0 0.0
          %3394 = vmatprep.subr.mxu0 0.0
          %3395 = vmatpush1.msra.mxu0 0.0
          %3396 = vmatprep.subr.mxu0 0.0
          %3397 = vmatpush1.msra.mxu0 0.0
          %3398 = vmatprep.subr.mxu0 0.0
          %3399 = vmatpush1.msra.mxu0 0.0
          %3400 = vmatprep.subr.mxu0 0.0
          %3401 = vmatpush1.msra.mxu0 0.0
          %3402 = vmatprep.subr.mxu0 0.0
          %3403 = vmatpush1.msra.mxu0 0.0
          %3404 = vmatprep.subr.mxu0 0.0
          %3405 = vmatpush1.msra.mxu0 0.0
          %3406 = vmatprep.subr.mxu0 0.0
          %3407 = vmatpush1.msra.mxu0 0.0
          %3408 = vmatprep.subr.mxu0 0.0
          %3409 = vmatpush1.msra.mxu0 0.0
          %3410 = vmatprep.subr.mxu0 0.0
          %3411 = vmatpush1.msra.mxu0 0.0
          %3412 = vmatprep.subr.mxu0 0.0
          %3413 = vmatpush1.msra.mxu0 0.0
          %3414 = vmatprep.subr.mxu0 0.0
          %3415 = vmatpush1.msra.mxu0 0.0
          %3416 = vmatprep.subr.mxu0 0.0
          %3417 = vmatpush1.msra.mxu0 0.0
          %3418 = vmatprep.subr.mxu0 0.0
          %3419 = vmatpush1.msra.mxu0 0.0
          %3420 = vmatprep.subr.mxu0 0.0
          %3421 = vmatpush1.msra.mxu0 0.0
          %3422 = vmatprep.subr.mxu0 0.0
          %3423 = vmatpush1.msra.mxu0 0.0
          %3424 = vmatprep.subr.mxu0 0.0
          %3425 = vmatpush1.msra.mxu0 0.0
          %3426 = vmatprep.subr.mxu0 0.0
          %3427 = vmatpush1.msra.mxu0 0.0
          %3428 = vmatprep.subr.mxu0 0.0
          %3429 = vmatpush1.msra.mxu0 0.0
          %3430 = vmatprep.subr.mxu0 0.0
          %3431 = vmatpush1.msra.mxu0 0.0
          %3432 = vmatprep.subr.mxu0 0.0
          %3433 = vmatpush1.msra.mxu0 0.0
          %3434 = vmatprep.subr.mxu0 0.0
          %3435 = vmatpush1.msra.mxu0 0.0
          %3436 = vmatprep.mubr.f32.mxu0 0.0
          %v3437 = vand.u32 %v3031, 4294901760
          %3438 = vmatmul.mubr.f32.gmra.mrb[0].mxu0 %v3437
          %v3439 = vpop.f32.mrb[0].mxu0
          %v3440 = vadd.f32 %v3357, %v3439
          %v3441 = vpop.f32.mrb[0].mxu0
          %3442 = vdwg.mxu0
          %3443 = vmatprep.subr.mxu0 0.0
          %v3444 = vand.u32 %v3019, 4294901760
          %3445 = vmatpush1.msra.mxu0 %v3444
          %3446 = vmatprep.subr.mxu0 0.0
          %v3447 = vand.u32 %v3020, 4294901760
          %3448 = vmatpush1.msra.mxu0 %v3447
          %3449 = vmatprep.subr.mxu0 0.0
          %v3450 = vand.u32 %v3021, 4294901760
          %3451 = vmatpush1.msra.mxu0 %v3450
          %3452 = vmatprep.subr.mxu0 0.0
          %v3453 = vand.u32 %v3022, 4294901760
          %3454 = vmatpush1.msra.mxu0 %v3453
          %3455 = vmatprep.subr.mxu0 0.0
          %3456 = vmatpush1.msra.mxu0 0.0
          %3457 = vmatprep.subr.mxu0 0.0
          %3458 = vmatpush1.msra.mxu0 0.0
          %3459 = vmatprep.subr.mxu0 0.0
          %3460 = vmatpush1.msra.mxu0 0.0
          %3461 = vmatprep.subr.mxu0 0.0
          %3462 = vmatpush1.msra.mxu0 0.0
          %3463 = vmatprep.subr.mxu0 0.0
          %3464 = vmatpush1.msra.mxu0 0.0
          %3465 = vmatprep.subr.mxu0 0.0
          %3466 = vmatpush1.msra.mxu0 0.0
          %3467 = vmatprep.subr.mxu0 0.0
          %3468 = vmatpush1.msra.mxu0 0.0
          %3469 = vmatprep.subr.mxu0 0.0
          %3470 = vmatpush1.msra.mxu0 0.0
          %3471 = vmatprep.subr.mxu0 0.0
          %3472 = vmatpush1.msra.mxu0 0.0
          %3473 = vmatprep.subr.mxu0 0.0
          %3474 = vmatpush1.msra.mxu0 0.0
          %3475 = vmatprep.subr.mxu0 0.0
          %3476 = vmatpush1.msra.mxu0 0.0
          %3477 = vmatprep.subr.mxu0 0.0
          %3478 = vmatpush1.msra.mxu0 0.0
          %3479 = vmatprep.subr.mxu0 0.0
          %3480 = vmatpush1.msra.mxu0 0.0
          %3481 = vmatprep.subr.mxu0 0.0
          %3482 = vmatpush1.msra.mxu0 0.0
          %3483 = vmatprep.subr.mxu0 0.0
          %3484 = vmatpush1.msra.mxu0 0.0
          %3485 = vmatprep.subr.mxu0 0.0
          %3486 = vmatpush1.msra.mxu0 0.0
          %3487 = vmatprep.subr.mxu0 0.0
          %3488 = vmatpush1.msra.mxu0 0.0
          %3489 = vmatprep.subr.mxu0 0.0
          %3490 = vmatpush1.msra.mxu0 0.0
          %3491 = vmatprep.subr.mxu0 0.0
          %3492 = vmatpush1.msra.mxu0 0.0
          %3493 = vmatprep.subr.mxu0 0.0
          %3494 = vmatpush1.msra.mxu0 0.0
          %3495 = vmatprep.subr.mxu0 0.0
          %3496 = vmatpush1.msra.mxu0 0.0
          %3497 = vmatprep.subr.mxu0 0.0
          %3498 = vmatpush1.msra.mxu0 0.0
          %3499 = vmatprep.subr.mxu0 0.0
          %3500 = vmatpush1.msra.mxu0 0.0
          %3501 = vmatprep.subr.mxu0 0.0
          %3502 = vmatpush1.msra.mxu0 0.0
          %3503 = vmatprep.subr.mxu0 0.0
          %3504 = vmatpush1.msra.mxu0 0.0
          %3505 = vmatprep.subr.mxu0 0.0
          %3506 = vmatpush1.msra.mxu0 0.0
          %3507 = vmatprep.subr.mxu0 0.0
          %3508 = vmatpush1.msra.mxu0 0.0
          %3509 = vmatprep.subr.mxu0 0.0
          %3510 = vmatpush1.msra.mxu0 0.0
          %3511 = vmatprep.mubr.f32.mxu0 0.0
          %v3512 = vand.u32 %v3031, 4294901760
          %3513 = vmatmul.mubr.f32.gmra.mrb[0].mxu0 %v3512
          %v3514 = vpop.f32.mrb[0].mxu0
          %v3515 = vadd.f32 %v3440, %v3514
          %v3516 = vpop.f32.mrb[0].mxu0
          %3517 = vdwg.mxu0
          %3518 = vst.msk [vmem:[%s558] sm:$0xff] %vm1082, %v3515
        $region100: #{tpu_custom_call.1} parent=63 // pred_fallthru
          _
        %s3519 = sand.u32 %s314, 1
        %s3520 = scalar_lea.sflag [#allocation8], %s3519
        %s3521 = sand.u32 %s314, 1
        %s3522 = smul.addr %s3521, 8
        %s3523 = scalar_lea.vmem [#allocation18], %s3522
        // Predicated region
        $region101: #{tpu_custom_call.1} parent=63 // pred_check
          %p3524 = pneg %p324
        $region102: #{tpu_custom_call.1} parent=63 // pred_check_branch
          %3526 = sbr.rel (%p3524) target = $region104
        $region103: #{tpu_custom_call.1} parent=63 // pred_region
          %s3528 = ssub.s32 128, 128
          %3529 = vsyncadd %s3520, %s3528
          %s3530 = sadd.s32 %s39, %s38
          %s3531 = smul.addr %s3530, 128
          %s3532 = scalar_lea.hbm %s11, %s3531
          %s3534 = sshll.u32 %s3523, 4
          %s3535 = int_to_ptr.vmem [resolvable:$true] %s3534
          %3537 = dma.vmem_to_hbm [thread:$0]  %s3535, 128, %s3532, %s3520
        $region104: #{tpu_custom_call.1} parent=63 // pred_fallthru
          _
      $region64: #{tpu_custom_call.1} parent=5 // pred_fallthru
        _
      %p3538 = scmp.le.s32.totalorder 2, %s28
      // Predicated region
      $region105: #{tpu_custom_call.1} parent=5 // pred_check
        %p3539 = pneg %p3538
      $region106: #{tpu_custom_call.1} parent=5 // pred_check_branch
        %3541 = sbr.rel (%p3539) target = $region108
      $region107: #{tpu_custom_call.1} parent=5 // pred_region
        %s3542 = ssub.s32 %s28, 2
        // Predicated region
        $region109: #{tpu_custom_call.1} parent=107 // pred_check
          %p3543 = pneg %p330
        $region110: #{tpu_custom_call.1} parent=107 // pred_check_branch
          %3545 = sbr.rel (%p3543) target = $region112
        $region111: #{tpu_custom_call.1} parent=107 // pred_region
          %s3546 = sand.u32 %s315, 1
          %s3547 = scalar_lea.sflag [#allocation8], %s3546
          %s3548 = sand.u32 %s315, 1
          %s3549 = smul.addr %s3548, 8
          %s3550 = scalar_lea.vmem [#allocation18], %s3549
          %3551 = dma.done %s3547, 128
        $region112: #{tpu_custom_call.1} parent=107 // pred_fallthru
          _
      $region108: #{tpu_custom_call.1} parent=5 // pred_fallthru
        _
    $region6: #{tpu_custom_call.1} parent=1 // loop_footer
      %s32 = sadd.s32 1, %s28
    $region7: #{tpu_custom_call.1} parent=1 // loop_footer_branch
      %27 = sbr.rel target = $region3
    $region8: #{tpu_custom_call.1} parent=1 // loop_exit
      _
    %3552 = vsyncpa [#allocation7], 1
    %s3553 = scalar_lea.sflag [#allocation7], 1
    %3554 = vsyncpa %s3553, 1
    %3555 = vsyncpa [#allocation10], 1
    %s3556 = scalar_lea.sflag [#allocation10], 1
    %3557 = vsyncpa %s3556, 1
    %3558 = vsyncpa [#allocation13], 1
    %3559 = vsyncpa [#allocation16], 1
    %3560 = vsyncpa [#allocation8], 1
    %s3561 = scalar_lea.sflag [#allocation8], 1
    %3562 = vsyncpa %s3561, 1

</llo_original>
